<compile_context>
chip_gen: v7x
topology: tpu7x:2x2x1
jax: 0.10.0
libtpu: 0.0.40
codegen_flags: <defaults>
</compile_context>

<pallas_src>
import numpy as np
import jax
import jax.numpy as jnp
from jax import lax
from jax.experimental import pallas as pl
from jax.experimental.pallas import tpu as pltpu

EPS = 1e-5
BF16 = jnp.bfloat16


# --------------------------------------------------------------------------
# Host-side helper: 0/1 gather matrix, block-diagonal over the batch, with
# the K taps concatenated along the columns.
#   S[b*Lin + i, k*(B*Lout) + b*Lout + t] = 1  iff  i == stride*t + k - pad
# (out-of-range offsets -> all-zero column == implicit zero padding)
# --------------------------------------------------------------------------
def _make_sel(B, Lin, Lout, K, stride, pad):
    S = np.zeros((B * Lin, K * B * Lout), np.float32)
    for k in range(K):
        for b in range(B):
            for t in range(Lout):
                i = stride * t + k - pad
                if 0 <= i < Lin:
                    S[b * Lin + i, k * (B * Lout) + b * Lout + t] = 1.0
    return S


# --------------------------------------------------------------------------
# Pallas wrapper + kernel
# --------------------------------------------------------------------------
def cnn_encoder_forward(x, p):
    B, CIN, L0 = map(int, x.shape)
    OUT = int(p['lin2_w'].shape[0])

    # static layer geometry (mirrors the nn.Sequential)
    L1 = (L0 - 5) // 2 + 1           # Conv1d(2, 32, k=5, s=2)
    L2 = (L1 - 5) // 2 + 1           # Conv1d(32, 32, k=5, s=2)
    L3 = (L2 - 3) // 2 + 1           # MaxPool1d(k=3, s=2)
    L4 = (L3 + 2 * 2 - 3) + 1        # Conv1d(32, 64, k=3, pad=2)
    L5 = (L4 - 3) // 2 + 1           # MaxPool1d(k=3, s=2)
    assert 64 * L5 == int(p['lin1_w'].shape[1]), "flatten size mismatch"

    layer_geo = [                    # (Lin, Lout, K, stride, pad)
        (L0, L1, 5, 2, 0),           # conv1
        (L1, L2, 5, 2, 0),           # conv2
        (L2, L3, 3, 2, 0),           # pool1
        (L3, L4, 3, 1, 2),           # conv3
        (L4, L5, 3, 2, 0),           # pool2
    ]

    # ---- host-precomputed selection slab (one bf16 input) ----
    blocks = [_make_sel(B, *g) for g in layer_geo]
    slab_cols = sum(b.shape[1] for b in blocks)
    slab_np = np.zeros((B * L0, slab_cols), np.float32)
    sel_meta = []                    # (rows, col_offset, K, W=B*Lout)
    off = 0
    for g, blk in zip(layer_geo, blocks):
        r, c = blk.shape
        slab_np[:r, off:off + c] = blk
        sel_meta.append((r, off, g[2], B * g[1]))
        off += c

    # ---- packed parameters (bf16 matmul operands, f32 BN affine) ----
    def flat_w(w):                   # (Cout, Cin, K) -> (Cout, K*Cin) bf16
        co, ci, k = w.shape
        return jnp.transpose(w, (0, 2, 1)).reshape(co, k * ci).astype(BF16)

    def pad64(v):
        return jnp.pad(v.astype(jnp.float32), (0, 64 - v.shape[0]))

    args = (
        # activations: (Cin, B*L0), batch-major along lanes
        jnp.transpose(x, (1, 0, 2)).reshape(CIN, B * L0).astype(jnp.float32),
        jnp.asarray(slab_np, dtype=BF16),                         # sel slab
        flat_w(p['conv1_w']),                                     # (32, 10)
        flat_w(p['conv2_w']),                                     # (32, 160)
        flat_w(p['conv3_w']),                                     # (64, 96)
        # lin1 as (256, 2*64): col = l*64 + c  <->  torch feature 2*c + l
        p['lin1_w'].reshape(256, 64, 2).transpose(0, 2, 1)
                   .reshape(256, 128).astype(BF16),
        p['lin2_w'].astype(BF16),                                 # (OUT, 256)
        jnp.stack([pad64(p[k]) for k in
                   ('bn1_g', 'bn1_b', 'bn2_g', 'bn2_b', 'bn3_g', 'bn3_b',
                    'bn4_g', 'bn4_b', 'bn5_g', 'bn5_b')], axis=1),  # (64, 10)
        jnp.stack([p['bnf_g'].astype(jnp.float32),
                   p['bnf_b'].astype(jnp.float32),
                   jnp.pad(p['lin2_b'].astype(jnp.float32), (0, 256 - OUT))],
                  axis=1),                                        # (256, 3)
    )

    def kernel(x_ref, sel_ref, w1_ref, w2_ref, w3_ref, wl1_ref, wl2_ref,
               bnc_ref, bnf_ref, out_ref):

        def wide_gather(h, layer, exact=False):
            rows, coff, K, W = sel_meta[layer]
            sel = sel_ref[0:rows, coff:coff + K * W]              # bf16
            hi = h.astype(BF16)
            acc = jnp.dot(hi, sel, preferred_element_type=jnp.float32)
            if exact:
                # pooled values flow onward -> keep them f32-exact (hi/lo split)
                lo = (h - hi.astype(jnp.float32)).astype(BF16)
                acc = acc + jnp.dot(lo, sel, preferred_element_type=jnp.float32)
            return acc, K, W

        def conv(h, layer, wflat_ref):
            r, K, W = wide_gather(h, layer)
            stacked = jnp.concatenate(
                [r[:, k * W:(k + 1) * W] for k in range(K)],
                axis=0).astype(BF16)                              # (K*Cin, W)
            return jnp.dot(wflat_ref[...], stacked,
                           preferred_element_type=jnp.float32)    # (Cout, W)

        def maxpool(h, layer):
            r, K, W = wide_gather(h, layer, exact=True)
            out = r[:, 0:W]
            for k in range(1, K):
                out = jnp.maximum(out, r[:, k * W:(k + 1) * W])
            return out

        def bn(v, g, b, n, relu=True):
            # training-mode BN (biased var), single-pass sum / sum-of-squares
            inv_n = 1.0 / float(n)
            mean = jnp.sum(v, axis=1, keepdims=True) * inv_n
            var = jnp.sum(v * v, axis=1, keepdims=True) * inv_n - mean * mean
            o = (v - mean) * (g * lax.rsqrt(var + EPS)) + b
            return jnp.maximum(o, 0.0) if relu else o

        def bn_trunk(v, idx, n, relu=True):
            c = v.shape[0]
            return bn(v, bnc_ref[0:c, 2 * idx:2 * idx + 1],
                      bnc_ref[0:c, 2 * idx + 1:2 * idx + 2], n, relu)

        # ------------------ cnnseq ------------------
        h = conv(x_ref[...], 0, w1_ref)            # (32, B*L1)
        h = bn_trunk(h, 0, B * L1)
        h = conv(h, 1, w2_ref)                     # (32, B*L2)
        h = bn_trunk(h, 1, B * L2)
        h = maxpool(h, 2)                          # (32, B*L3)
        h = bn_trunk(h, 2, B * L3)
        h = conv(h, 3, w3_ref)                     # (64, B*L4)
        h = bn_trunk(h, 3, B * L4)
        h = maxpool(h, 4)                          # (64, B*L5)
        h = jnp.maximum(h, 0.0)                    # ReLU before final BN
        h = bn_trunk(h, 4, B * L5, relu=False)

        # ------------------ flatten + reggresor ------------------
        # torch flatten f = c*L5 + l  ->  rows l*64 + c, batch on lanes
        cols = []
        for b in range(B):
            cols.append(jnp.concatenate(
                [h[:, b * L5 + l:b * L5 + l + 1] for l in range(L5)], axis=0))
        code = jnp.concatenate(cols, axis=1).astype(BF16)          # (64*L5, B)
        y = jnp.dot(wl1_ref[...], code,
                    preferred_element_type=jnp.float32)            # (256, B)
        y = bn(y, bnf_ref[0:256, 0:1], bnf_ref[0:256, 1:2], B)     # BNf + ReLU
        out = jnp.dot(wl2_ref[...], y.astype(BF16),
                      preferred_element_type=jnp.float32)          # (OUT, B)
        out_ref[...] = out + bnf_ref[0:OUT, 2:3]

    vmem = pl.BlockSpec(memory_space=pltpu.MemorySpace.VMEM)
    out = pl.pallas_call(
        kernel,
        out_shape=jax.ShapeDtypeStruct((OUT, B), jnp.float32),
        in_specs=[vmem] * len(args),
        out_specs=vmem,
    )(*args)
    return out.T                                                   # (B, OUT)


# --------------------------------------------------------------------------
# Pure-JAX reference.  Matmul operands are truncated to bf16 at the same
# points as the kernel (single-pass MXU semantics); everything else is f32.
# --------------------------------------------------------------------------
def reference_forward(x, p):
    dn = ('NCH', 'OIH', 'NCH')

    def conv(h, w, s, pad):
        return lax.conv_general_dilated(
            h.astype(BF16), w.astype(BF16), (s,), [(pad, pad)],
            dimension_numbers=dn, preferred_element_type=jnp.float32)

    def mpool(h):
        return lax.reduce_window(h, -jnp.inf, lax.max, (1, 1, 3), (1, 1, 2),
                                 'VALID')

    def bn(h, g, b):
        if h.ndim == 3:
            axes = (0, 2)
            gg, bb = g.reshape(1, -1, 1), b.reshape(1, -1, 1)
        else:
            axes = (0,)
            gg, bb = g.reshape(1, -1), b.reshape(1, -1)
        m = jnp.mean(h, axis=axes, keepdims=True)
        v = jnp.mean((h - m) ** 2, axis=axes, keepdims=True)
        return (h - m) / jnp.sqrt(v + EPS) * gg + bb

    h = conv(x, p['conv1_w'], 2, 0)
    h = jax.nn.relu(bn(h, p['bn1_g'], p['bn1_b']))
    h = conv(h, p['conv2_w'], 2, 0)
    h = jax.nn.relu(bn(h, p['bn2_g'], p['bn2_b']))
    h = mpool(h)
    h = jax.nn.relu(bn(h, p['bn3_g'], p['bn3_b']))
    h = conv(h, p['conv3_w'], 1, 2)
    h = jax.nn.relu(bn(h, p['bn4_g'], p['bn4_b']))
    h = mpool(h)
    h = jax.nn.relu(h)
    h = bn(h, p['bn5_g'], p['bn5_b'])
    code = h.reshape(h.shape[0], -1)                               # (B, 128)
    code = jnp.dot(code.astype(BF16), p['lin1_w'].astype(BF16).T,
                   preferred_element_type=jnp.float32)
    code = jax.nn.relu(bn(code, p['bnf_g'], p['bnf_b']))
    code = jnp.dot(code.astype(BF16), p['lin2_w'].astype(BF16).T,
                   preferred_element_type=jnp.float32) + p['lin2_b']
    return code


# --------------------------------------------------------------------------
if __name__ == "__main__":
    # hidden_size=32 is stored by the module but unused in forward.
    B, CH, L, OUT = 2, 2, 48, 8     # L=48 -> flatten 64*2 = 128 (Linear(128, 256))

    key = jax.random.PRNGKey(0)
    ks = jax.random.split(key, 20)

    def normal(k, shape, scale):
        return scale * jax.random.normal(k, shape, jnp.float32)

    x = jax.random.normal(ks[0], (B, CH, L), jnp.float32)

    params = {
        'conv1_w': normal(ks[1], (32, 2, 5), 0.2),
        'bn1_g': 1.0 + normal(ks[2], (32,), 0.1), 'bn1_b': normal(ks[3], (32,), 0.1),
        'conv2_w': normal(ks[4], (32, 32, 5), 0.1),
        'bn2_g': 1.0 + normal(ks[5], (32,), 0.1), 'bn2_b': normal(ks[6], (32,), 0.1),
        'bn3_g': 1.0 + normal(ks[7], (32,), 0.1), 'bn3_b': normal(ks[8], (32,), 0.1),
        'conv3_w': normal(ks[9], (64, 32, 3), 0.1),
        'bn4_g': 1.0 + normal(ks[10], (64,), 0.1), 'bn4_b': normal(ks[11], (64,), 0.1),
        'bn5_g': 1.0 + normal(ks[12], (64,), 0.1), 'bn5_b': normal(ks[13], (64,), 0.1),
        'lin1_w': normal(ks[14], (256, 128), 0.05),
        'bnf_g': 1.0 + normal(ks[15], (256,), 0.1), 'bnf_b': normal(ks[16], (256,), 0.1),
        'lin2_w': normal(ks[17], (OUT, 256), 0.05),
        'lin2_b': normal(ks[18], (OUT,), 0.1),
    }

    out = cnn_encoder_forward(x, params)
    out = jax.block_until_ready(out)
    assert out.shape == (B, OUT), out.shape

    ref = jax.block_until_ready(reference_forward(x, params))
    # Both paths use identical bf16 MXU operand rounding, so the residual
    # difference is only f32 summation-order noise (<< 1e-2).
    np.testing.assert_allclose(np.asarray(out), np.asarray(ref),
                               rtol=1e-2, atol=1e-2)

    print("KERNEL_OK")
</pallas_src>

<mosaic_0001>
module attributes {stable_mosaic.version = 11 : i64} {
  func.func @kernel(%arg0: memref<2x96xf32, #tpu.memory_space<vmem>>, %arg1: memref<96x382xbf16, #tpu.memory_space<vmem>>, %arg2: memref<32x10xbf16, #tpu.memory_space<vmem>>, %arg3: memref<32x160xbf16, #tpu.memory_space<vmem>>, %arg4: memref<64x96xbf16, #tpu.memory_space<vmem>>, %arg5: memref<256x128xbf16, #tpu.memory_space<vmem>>, %arg6: memref<8x256xbf16, #tpu.memory_space<vmem>>, %arg7: memref<64x10xf32, #tpu.memory_space<vmem>>, %arg8: memref<256x3xf32, #tpu.memory_space<vmem>>, %arg9: memref<8x2xf32, #tpu.memory_space<vmem>>) attributes {dimension_semantics = [], scalar_prefetch = 0 : i64, scratch_operands = 0 : i64, tpu.core_type = #tpu.core_type<tc>} {
    %c0 = arith.constant 0 : index
    %c0_0 = arith.constant 0 : index
    %0 = vector.load %arg0[%c0, %c0_0] : memref<2x96xf32, #tpu.memory_space<vmem>>, vector<2x96xf32>
    %c0_1 = arith.constant 0 : index
    %c0_2 = arith.constant 0 : index
    %1 = vector.load %arg1[%c0_1, %c0_2] : memref<96x382xbf16, #tpu.memory_space<vmem>>, vector<96x220xbf16>
    %2 = arith.truncf %0 : vector<2x96xf32> to vector<2x96xbf16>
    %cst = arith.constant dense<0.000000e+00> : vector<2x220xf32>
    %3 = tpu.matmul %2, %1, %cst {dimension_numbers = #tpu.dot_dimension_numbers<[1], [0], [0], [1], [0, 0, 1, 1], [], []>} : vector<2x96xbf16>, vector<96x220xbf16>, vector<2x220xf32> -> vector<2x220xf32>
    %4 = vector.extract_strided_slice %3 {offsets = [0, 0], sizes = [2, 44], strides = [1, 1]} : vector<2x220xf32> to vector<2x44xf32>
    %5 = vector.extract_strided_slice %3 {offsets = [0, 44], sizes = [2, 44], strides = [1, 1]} : vector<2x220xf32> to vector<2x44xf32>
    %6 = vector.extract_strided_slice %3 {offsets = [0, 88], sizes = [2, 44], strides = [1, 1]} : vector<2x220xf32> to vector<2x44xf32>
    %7 = vector.extract_strided_slice %3 {offsets = [0, 132], sizes = [2, 44], strides = [1, 1]} : vector<2x220xf32> to vector<2x44xf32>
    %8 = vector.extract_strided_slice %3 {offsets = [0, 176], sizes = [2, 44], strides = [1, 1]} : vector<2x220xf32> to vector<2x44xf32>
    %9 = tpu.concatenate %4, %5, %6, %7, %8 in 0 : vector<2x44xf32>, vector<2x44xf32>, vector<2x44xf32>, vector<2x44xf32>, vector<2x44xf32> -> vector<10x44xf32>
    %10 = arith.truncf %9 : vector<10x44xf32> to vector<10x44xbf16>
    %c0_3 = arith.constant 0 : index
    %c0_4 = arith.constant 0 : index
    %11 = vector.load %arg2[%c0_3, %c0_4] : memref<32x10xbf16, #tpu.memory_space<vmem>>, vector<32x10xbf16>
    %cst_5 = arith.constant dense<0.000000e+00> : vector<32x44xf32>
    %12 = tpu.matmul %11, %10, %cst_5 {dimension_numbers = #tpu.dot_dimension_numbers<[1], [0], [0], [1], [0, 0, 1, 1], [], []>} : vector<32x10xbf16>, vector<10x44xbf16>, vector<32x44xf32> -> vector<32x44xf32>
    %c0_6 = arith.constant 0 : index
    %c0_7 = arith.constant 0 : index
    %13 = vector.load %arg7[%c0_6, %c0_7] : memref<64x10xf32, #tpu.memory_space<vmem>>, vector<32x1xf32>
    %c0_8 = arith.constant 0 : index
    %c1 = arith.constant 1 : index
    %14 = vector.load %arg7[%c0_8, %c1] : memref<64x10xf32, #tpu.memory_space<vmem>>, vector<32x1xf32>
    %cst_9 = arith.constant dense<0.000000e+00> : vector<32xf32>
    %15 = vector.multi_reduction <add>, %12, %cst_9 [1] : vector<32x44xf32> to vector<32xf32>
    %16 = vector.shape_cast %15 : vector<32xf32> to vector<32x1xf32>
    %cst_10 = arith.constant 0.0227272734 : f32
    %17 = vector.broadcast %cst_10 : f32 to vector<32x1xf32>
    %18 = arith.mulf %16, %17 : vector<32x1xf32>
    %19 = arith.mulf %12, %12 : vector<32x44xf32>
    %cst_11 = arith.constant dense<0.000000e+00> : vector<32xf32>
    %20 = vector.multi_reduction <add>, %19, %cst_11 [1] : vector<32x44xf32> to vector<32xf32>
    %21 = vector.shape_cast %20 : vector<32xf32> to vector<32x1xf32>
    %cst_12 = arith.constant 0.0227272734 : f32
    %22 = vector.broadcast %cst_12 : f32 to vector<32x1xf32>
    %23 = arith.mulf %21, %22 : vector<32x1xf32>
    %24 = arith.mulf %18, %18 : vector<32x1xf32>
    %25 = arith.subf %23, %24 : vector<32x1xf32>
    %26 = vector.broadcast %18 : vector<32x1xf32> to vector<32x44xf32>
    %27 = arith.subf %12, %26 : vector<32x44xf32>
    %cst_13 = arith.constant 9.99999974E-6 : f32
    %28 = vector.broadcast %cst_13 : f32 to vector<32x1xf32>
    %29 = arith.addf %25, %28 : vector<32x1xf32>
    %30 = math.rsqrt %29 : vector<32x1xf32>
    %31 = arith.mulf %13, %30 : vector<32x1xf32>
    %32 = vector.broadcast %31 : vector<32x1xf32> to vector<32x44xf32>
    %33 = arith.mulf %27, %32 : vector<32x44xf32>
    %34 = vector.broadcast %14 : vector<32x1xf32> to vector<32x44xf32>
    %35 = arith.addf %33, %34 : vector<32x44xf32>
    %cst_14 = arith.constant 0.000000e+00 : f32
    %36 = vector.broadcast %cst_14 : f32 to vector<32x44xf32>
    %37 = arith.maximumf %35, %36 : vector<32x44xf32>
    %c0_15 = arith.constant 0 : index
    %c220 = arith.constant 220 : index
    %38 = vector.load %arg1[%c0_15, %c220] : memref<96x382xbf16, #tpu.memory_space<vmem>>, vector<44x90xbf16>
    %39 = arith.truncf %37 : vector<32x44xf32> to vector<32x44xbf16>
    %cst_16 = arith.constant dense<0.000000e+00> : vector<32x90xf32>
    %40 = tpu.matmul %39, %38, %cst_16 {dimension_numbers = #tpu.dot_dimension_numbers<[1], [0], [0], [1], [0, 0, 1, 1], [], []>} : vector<32x44xbf16>, vector<44x90xbf16>, vector<32x90xf32> -> vector<32x90xf32>
    %41 = vector.extract_strided_slice %40 {offsets = [0, 0], sizes = [32, 18], strides = [1, 1]} : vector<32x90xf32> to vector<32x18xf32>
    %42 = vector.extract_strided_slice %40 {offsets = [0, 18], sizes = [32, 18], strides = [1, 1]} : vector<32x90xf32> to vector<32x18xf32>
    %43 = vector.extract_strided_slice %40 {offsets = [0, 36], sizes = [32, 18], strides = [1, 1]} : vector<32x90xf32> to vector<32x18xf32>
    %44 = vector.extract_strided_slice %40 {offsets = [0, 54], sizes = [32, 18], strides = [1, 1]} : vector<32x90xf32> to vector<32x18xf32>
    %45 = vector.extract_strided_slice %40 {offsets = [0, 72], sizes = [32, 18], strides = [1, 1]} : vector<32x90xf32> to vector<32x18xf32>
    %46 = tpu.concatenate %41, %42, %43, %44, %45 in 0 : vector<32x18xf32>, vector<32x18xf32>, vector<32x18xf32>, vector<32x18xf32>, vector<32x18xf32> -> vector<160x18xf32>
    %47 = arith.truncf %46 : vector<160x18xf32> to vector<160x18xbf16>
    %c0_17 = arith.constant 0 : index
    %c0_18 = arith.constant 0 : index
    %48 = vector.load %arg3[%c0_17, %c0_18] : memref<32x160xbf16, #tpu.memory_space<vmem>>, vector<32x160xbf16>
    %cst_19 = arith.constant dense<0.000000e+00> : vector<32x18xf32>
    %49 = tpu.matmul %48, %47, %cst_19 {dimension_numbers = #tpu.dot_dimension_numbers<[1], [0], [0], [1], [0, 0, 1, 1], [], []>} : vector<32x160xbf16>, vector<160x18xbf16>, vector<32x18xf32> -> vector<32x18xf32>
    %c0_20 = arith.constant 0 : index
    %c2 = arith.constant 2 : index
    %50 = vector.load %arg7[%c0_20, %c2] : memref<64x10xf32, #tpu.memory_space<vmem>>, vector<32x1xf32>
    %c0_21 = arith.constant 0 : index
    %c3 = arith.constant 3 : index
    %51 = vector.load %arg7[%c0_21, %c3] : memref<64x10xf32, #tpu.memory_space<vmem>>, vector<32x1xf32>
    %cst_22 = arith.constant dense<0.000000e+00> : vector<32xf32>
    %52 = vector.multi_reduction <add>, %49, %cst_22 [1] : vector<32x18xf32> to vector<32xf32>
    %53 = vector.shape_cast %52 : vector<32xf32> to vector<32x1xf32>
    %cst_23 = arith.constant 0.055555556 : f32
    %54 = vector.broadcast %cst_23 : f32 to vector<32x1xf32>
    %55 = arith.mulf %53, %54 : vector<32x1xf32>
    %56 = arith.mulf %49, %49 : vector<32x18xf32>
    %cst_24 = arith.constant dense<0.000000e+00> : vector<32xf32>
    %57 = vector.multi_reduction <add>, %56, %cst_24 [1] : vector<32x18xf32> to vector<32xf32>
    %58 = vector.shape_cast %57 : vector<32xf32> to vector<32x1xf32>
    %cst_25 = arith.constant 0.055555556 : f32
    %59 = vector.broadcast %cst_25 : f32 to vector<32x1xf32>
    %60 = arith.mulf %58, %59 : vector<32x1xf32>
    %61 = arith.mulf %55, %55 : vector<32x1xf32>
    %62 = arith.subf %60, %61 : vector<32x1xf32>
    %63 = vector.broadcast %55 : vector<32x1xf32> to vector<32x18xf32>
    %64 = arith.subf %49, %63 : vector<32x18xf32>
    %cst_26 = arith.constant 9.99999974E-6 : f32
    %65 = vector.broadcast %cst_26 : f32 to vector<32x1xf32>
    %66 = arith.addf %62, %65 : vector<32x1xf32>
    %67 = math.rsqrt %66 : vector<32x1xf32>
    %68 = arith.mulf %50, %67 : vector<32x1xf32>
    %69 = vector.broadcast %68 : vector<32x1xf32> to vector<32x18xf32>
    %70 = arith.mulf %64, %69 : vector<32x18xf32>
    %71 = vector.broadcast %51 : vector<32x1xf32> to vector<32x18xf32>
    %72 = arith.addf %70, %71 : vector<32x18xf32>
    %cst_27 = arith.constant 0.000000e+00 : f32
    %73 = vector.broadcast %cst_27 : f32 to vector<32x18xf32>
    %74 = arith.maximumf %72, %73 : vector<32x18xf32>
    %c0_28 = arith.constant 0 : index
    %c310 = arith.constant 310 : index
    %75 = vector.load %arg1[%c0_28, %c310] : memref<96x382xbf16, #tpu.memory_space<vmem>>, vector<18x24xbf16>
    %76 = arith.truncf %74 : vector<32x18xf32> to vector<32x18xbf16>
    %cst_29 = arith.constant dense<0.000000e+00> : vector<32x24xf32>
    %77 = tpu.matmul %76, %75, %cst_29 {dimension_numbers = #tpu.dot_dimension_numbers<[1], [0], [0], [1], [0, 0, 1, 1], [], []>} : vector<32x18xbf16>, vector<18x24xbf16>, vector<32x24xf32> -> vector<32x24xf32>
    %78 = arith.extf %76 : vector<32x18xbf16> to vector<32x18xf32>
    %79 = arith.subf %74, %78 : vector<32x18xf32>
    %80 = arith.truncf %79 : vector<32x18xf32> to vector<32x18xbf16>
    %cst_30 = arith.constant dense<0.000000e+00> : vector<32x24xf32>
    %81 = tpu.matmul %80, %75, %cst_30 {dimension_numbers = #tpu.dot_dimension_numbers<[1], [0], [0], [1], [0, 0, 1, 1], [], []>} : vector<32x18xbf16>, vector<18x24xbf16>, vector<32x24xf32> -> vector<32x24xf32>
    %82 = arith.addf %77, %81 : vector<32x24xf32>
    %83 = vector.extract_strided_slice %82 {offsets = [0, 0], sizes = [32, 8], strides = [1, 1]} : vector<32x24xf32> to vector<32x8xf32>
    %84 = vector.extract_strided_slice %82 {offsets = [0, 8], sizes = [32, 8], strides = [1, 1]} : vector<32x24xf32> to vector<32x8xf32>
    %85 = arith.maximumf %83, %84 : vector<32x8xf32>
    %86 = vector.extract_strided_slice %82 {offsets = [0, 16], sizes = [32, 8], strides = [1, 1]} : vector<32x24xf32> to vector<32x8xf32>
    %87 = arith.maximumf %85, %86 : vector<32x8xf32>
    %c0_31 = arith.constant 0 : index
    %c4 = arith.constant 4 : index
    %88 = vector.load %arg7[%c0_31, %c4] : memref<64x10xf32, #tpu.memory_space<vmem>>, vector<32x1xf32>
    %c0_32 = arith.constant 0 : index
    %c5 = arith.constant 5 : index
    %89 = vector.load %arg7[%c0_32, %c5] : memref<64x10xf32, #tpu.memory_space<vmem>>, vector<32x1xf32>
    %cst_33 = arith.constant dense<0.000000e+00> : vector<32xf32>
    %90 = vector.multi_reduction <add>, %87, %cst_33 [1] : vector<32x8xf32> to vector<32xf32>
    %91 = vector.shape_cast %90 : vector<32xf32> to vector<32x1xf32>
    %cst_34 = arith.constant 1.250000e-01 : f32
    %92 = vector.broadcast %cst_34 : f32 to vector<32x1xf32>
    %93 = arith.mulf %91, %92 : vector<32x1xf32>
    %94 = arith.mulf %87, %87 : vector<32x8xf32>
    %cst_35 = arith.constant dense<0.000000e+00> : vector<32xf32>
    %95 = vector.multi_reduction <add>, %94, %cst_35 [1] : vector<32x8xf32> to vector<32xf32>
    %96 = vector.shape_cast %95 : vector<32xf32> to vector<32x1xf32>
    %cst_36 = arith.constant 1.250000e-01 : f32
    %97 = vector.broadcast %cst_36 : f32 to vector<32x1xf32>
    %98 = arith.mulf %96, %97 : vector<32x1xf32>
    %99 = arith.mulf %93, %93 : vector<32x1xf32>
    %100 = arith.subf %98, %99 : vector<32x1xf32>
    %101 = vector.broadcast %93 : vector<32x1xf32> to vector<32x8xf32>
    %102 = arith.subf %87, %101 : vector<32x8xf32>
    %cst_37 = arith.constant 9.99999974E-6 : f32
    %103 = vector.broadcast %cst_37 : f32 to vector<32x1xf32>
    %104 = arith.addf %100, %103 : vector<32x1xf32>
    %105 = math.rsqrt %104 : vector<32x1xf32>
    %106 = arith.mulf %88, %105 : vector<32x1xf32>
    %107 = vector.broadcast %106 : vector<32x1xf32> to vector<32x8xf32>
    %108 = arith.mulf %102, %107 : vector<32x8xf32>
    %109 = vector.broadcast %89 : vector<32x1xf32> to vector<32x8xf32>
    %110 = arith.addf %108, %109 : vector<32x8xf32>
    %cst_38 = arith.constant 0.000000e+00 : f32
    %111 = vector.broadcast %cst_38 : f32 to vector<32x8xf32>
    %112 = arith.maximumf %110, %111 : vector<32x8xf32>
    %c0_39 = arith.constant 0 : index
    %c334 = arith.constant 334 : index
    %113 = vector.load %arg1[%c0_39, %c334] : memref<96x382xbf16, #tpu.memory_space<vmem>>, vector<8x36xbf16>
    %114 = arith.truncf %112 : vector<32x8xf32> to vector<32x8xbf16>
    %cst_40 = arith.constant dense<0.000000e+00> : vector<32x36xf32>
    %115 = tpu.matmul %114, %113, %cst_40 {dimension_numbers = #tpu.dot_dimension_numbers<[1], [0], [0], [1], [0, 0, 1, 1], [], []>} : vector<32x8xbf16>, vector<8x36xbf16>, vector<32x36xf32> -> vector<32x36xf32>
    %116 = vector.extract_strided_slice %115 {offsets = [0, 0], sizes = [32, 12], strides = [1, 1]} : vector<32x36xf32> to vector<32x12xf32>
    %117 = vector.extract_strided_slice %115 {offsets = [0, 12], sizes = [32, 12], strides = [1, 1]} : vector<32x36xf32> to vector<32x12xf32>
    %118 = vector.extract_strided_slice %115 {offsets = [0, 24], sizes = [32, 12], strides = [1, 1]} : vector<32x36xf32> to vector<32x12xf32>
    %119 = tpu.concatenate %116, %117, %118 in 0 : vector<32x12xf32>, vector<32x12xf32>, vector<32x12xf32> -> vector<96x12xf32>
    %120 = arith.truncf %119 : vector<96x12xf32> to vector<96x12xbf16>
    %c0_41 = arith.constant 0 : index
    %c0_42 = arith.constant 0 : index
    %121 = vector.load %arg4[%c0_41, %c0_42] : memref<64x96xbf16, #tpu.memory_space<vmem>>, vector<64x96xbf16>
    %cst_43 = arith.constant dense<0.000000e+00> : vector<64x12xf32>
    %122 = tpu.matmul %121, %120, %cst_43 {dimension_numbers = #tpu.dot_dimension_numbers<[1], [0], [0], [1], [0, 0, 1, 1], [], []>} : vector<64x96xbf16>, vector<96x12xbf16>, vector<64x12xf32> -> vector<64x12xf32>
    %c0_44 = arith.constant 0 : index
    %c6 = arith.constant 6 : index
    %123 = vector.load %arg7[%c0_44, %c6] : memref<64x10xf32, #tpu.memory_space<vmem>>, vector<64x1xf32>
    %c0_45 = arith.constant 0 : index
    %c7 = arith.constant 7 : index
    %124 = vector.load %arg7[%c0_45, %c7] : memref<64x10xf32, #tpu.memory_space<vmem>>, vector<64x1xf32>
    %cst_46 = arith.constant dense<0.000000e+00> : vector<64xf32>
    %125 = vector.multi_reduction <add>, %122, %cst_46 [1] : vector<64x12xf32> to vector<64xf32>
    %126 = vector.shape_cast %125 : vector<64xf32> to vector<64x1xf32>
    %cst_47 = arith.constant 0.0833333358 : f32
    %127 = vector.broadcast %cst_47 : f32 to vector<64x1xf32>
    %128 = arith.mulf %126, %127 : vector<64x1xf32>
    %129 = arith.mulf %122, %122 : vector<64x12xf32>
    %cst_48 = arith.constant dense<0.000000e+00> : vector<64xf32>
    %130 = vector.multi_reduction <add>, %129, %cst_48 [1] : vector<64x12xf32> to vector<64xf32>
    %131 = vector.shape_cast %130 : vector<64xf32> to vector<64x1xf32>
    %cst_49 = arith.constant 0.0833333358 : f32
    %132 = vector.broadcast %cst_49 : f32 to vector<64x1xf32>
    %133 = arith.mulf %131, %132 : vector<64x1xf32>
    %134 = arith.mulf %128, %128 : vector<64x1xf32>
    %135 = arith.subf %133, %134 : vector<64x1xf32>
    %136 = vector.broadcast %128 : vector<64x1xf32> to vector<64x12xf32>
    %137 = arith.subf %122, %136 : vector<64x12xf32>
    %cst_50 = arith.constant 9.99999974E-6 : f32
    %138 = vector.broadcast %cst_50 : f32 to vector<64x1xf32>
    %139 = arith.addf %135, %138 : vector<64x1xf32>
    %140 = math.rsqrt %139 : vector<64x1xf32>
    %141 = arith.mulf %123, %140 : vector<64x1xf32>
    %142 = vector.broadcast %141 : vector<64x1xf32> to vector<64x12xf32>
    %143 = arith.mulf %137, %142 : vector<64x12xf32>
    %144 = vector.broadcast %124 : vector<64x1xf32> to vector<64x12xf32>
    %145 = arith.addf %143, %144 : vector<64x12xf32>
    %cst_51 = arith.constant 0.000000e+00 : f32
    %146 = vector.broadcast %cst_51 : f32 to vector<64x12xf32>
    %147 = arith.maximumf %145, %146 : vector<64x12xf32>
    %c0_52 = arith.constant 0 : index
    %c370 = arith.constant 370 : index
    %148 = vector.load %arg1[%c0_52, %c370] : memref<96x382xbf16, #tpu.memory_space<vmem>>, vector<12x12xbf16>
    %149 = arith.truncf %147 : vector<64x12xf32> to vector<64x12xbf16>
    %cst_53 = arith.constant dense<0.000000e+00> : vector<64x12xf32>
    %150 = tpu.matmul %149, %148, %cst_53 {dimension_numbers = #tpu.dot_dimension_numbers<[1], [0], [0], [1], [0, 0, 1, 1], [], []>} : vector<64x12xbf16>, vector<12x12xbf16>, vector<64x12xf32> -> vector<64x12xf32>
    %151 = arith.extf %149 : vector<64x12xbf16> to vector<64x12xf32>
    %152 = arith.subf %147, %151 : vector<64x12xf32>
    %153 = arith.truncf %152 : vector<64x12xf32> to vector<64x12xbf16>
    %cst_54 = arith.constant dense<0.000000e+00> : vector<64x12xf32>
    %154 = tpu.matmul %153, %148, %cst_54 {dimension_numbers = #tpu.dot_dimension_numbers<[1], [0], [0], [1], [0, 0, 1, 1], [], []>} : vector<64x12xbf16>, vector<12x12xbf16>, vector<64x12xf32> -> vector<64x12xf32>
    %155 = arith.addf %150, %154 : vector<64x12xf32>
    %156 = vector.extract_strided_slice %155 {offsets = [0, 0], sizes = [64, 4], strides = [1, 1]} : vector<64x12xf32> to vector<64x4xf32>
    %157 = vector.extract_strided_slice %155 {offsets = [0, 4], sizes = [64, 4], strides = [1, 1]} : vector<64x12xf32> to vector<64x4xf32>
    %158 = arith.maximumf %156, %157 : vector<64x4xf32>
    %159 = vector.extract_strided_slice %155 {offsets = [0, 8], sizes = [64, 4], strides = [1, 1]} : vector<64x12xf32> to vector<64x4xf32>
    %160 = arith.maximumf %158, %159 : vector<64x4xf32>
    %cst_55 = arith.constant 0.000000e+00 : f32
    %161 = vector.broadcast %cst_55 : f32 to vector<64x4xf32>
    %162 = arith.maximumf %160, %161 : vector<64x4xf32>
    %c0_56 = arith.constant 0 : index
    %c8 = arith.constant 8 : index
    %163 = vector.load %arg7[%c0_56, %c8] : memref<64x10xf32, #tpu.memory_space<vmem>>, vector<64x1xf32>
    %c0_57 = arith.constant 0 : index
    %c9 = arith.constant 9 : index
    %164 = vector.load %arg7[%c0_57, %c9] : memref<64x10xf32, #tpu.memory_space<vmem>>, vector<64x1xf32>
    %cst_58 = arith.constant dense<0.000000e+00> : vector<64xf32>
    %165 = vector.multi_reduction <add>, %162, %cst_58 [1] : vector<64x4xf32> to vector<64xf32>
    %166 = vector.shape_cast %165 : vector<64xf32> to vector<64x1xf32>
    %cst_59 = arith.constant 2.500000e-01 : f32
    %167 = vector.broadcast %cst_59 : f32 to vector<64x1xf32>
    %168 = arith.mulf %166, %167 : vector<64x1xf32>
    %169 = arith.mulf %162, %162 : vector<64x4xf32>
    %cst_60 = arith.constant dense<0.000000e+00> : vector<64xf32>
    %170 = vector.multi_reduction <add>, %169, %cst_60 [1] : vector<64x4xf32> to vector<64xf32>
    %171 = vector.shape_cast %170 : vector<64xf32> to vector<64x1xf32>
    %cst_61 = arith.constant 2.500000e-01 : f32
    %172 = vector.broadcast %cst_61 : f32 to vector<64x1xf32>
    %173 = arith.mulf %171, %172 : vector<64x1xf32>
    %174 = arith.mulf %168, %168 : vector<64x1xf32>
    %175 = arith.subf %173, %174 : vector<64x1xf32>
    %176 = vector.broadcast %168 : vector<64x1xf32> to vector<64x4xf32>
    %177 = arith.subf %162, %176 : vector<64x4xf32>
    %cst_62 = arith.constant 9.99999974E-6 : f32
    %178 = vector.broadcast %cst_62 : f32 to vector<64x1xf32>
    %179 = arith.addf %175, %178 : vector<64x1xf32>
    %180 = math.rsqrt %179 : vector<64x1xf32>
    %181 = arith.mulf %163, %180 : vector<64x1xf32>
    %182 = vector.broadcast %181 : vector<64x1xf32> to vector<64x4xf32>
    %183 = arith.mulf %177, %182 : vector<64x4xf32>
    %184 = vector.broadcast %164 : vector<64x1xf32> to vector<64x4xf32>
    %185 = arith.addf %183, %184 : vector<64x4xf32>
    %186 = vector.extract_strided_slice %185 {offsets = [0, 0], sizes = [64, 1], strides = [1, 1]} : vector<64x4xf32> to vector<64x1xf32>
    %187 = vector.extract_strided_slice %185 {offsets = [0, 1], sizes = [64, 1], strides = [1, 1]} : vector<64x4xf32> to vector<64x1xf32>
    %188 = tpu.concatenate %186, %187 in 0 : vector<64x1xf32>, vector<64x1xf32> -> vector<128x1xf32>
    %189 = vector.extract_strided_slice %185 {offsets = [0, 2], sizes = [64, 1], strides = [1, 1]} : vector<64x4xf32> to vector<64x1xf32>
    %190 = vector.extract_strided_slice %185 {offsets = [0, 3], sizes = [64, 1], strides = [1, 1]} : vector<64x4xf32> to vector<64x1xf32>
    %191 = tpu.concatenate %189, %190 in 0 : vector<64x1xf32>, vector<64x1xf32> -> vector<128x1xf32>
    %192 = tpu.concatenate %188, %191 in 1 : vector<128x1xf32>, vector<128x1xf32> -> vector<128x2xf32>
    %193 = arith.truncf %192 : vector<128x2xf32> to vector<128x2xbf16>
    %c0_63 = arith.constant 0 : index
    %c0_64 = arith.constant 0 : index
    %194 = vector.load %arg5[%c0_63, %c0_64] : memref<256x128xbf16, #tpu.memory_space<vmem>>, vector<256x128xbf16>
    %cst_65 = arith.constant dense<0.000000e+00> : vector<256x2xf32>
    %195 = tpu.matmul %194, %193, %cst_65 {dimension_numbers = #tpu.dot_dimension_numbers<[1], [0], [0], [1], [0, 0, 1, 1], [], []>} : vector<256x128xbf16>, vector<128x2xbf16>, vector<256x2xf32> -> vector<256x2xf32>
    %c0_66 = arith.constant 0 : index
    %c0_67 = arith.constant 0 : index
    %196 = vector.load %arg8[%c0_66, %c0_67] : memref<256x3xf32, #tpu.memory_space<vmem>>, vector<256x1xf32>
    %c0_68 = arith.constant 0 : index
    %c1_69 = arith.constant 1 : index
    %197 = vector.load %arg8[%c0_68, %c1_69] : memref<256x3xf32, #tpu.memory_space<vmem>>, vector<256x1xf32>
    %cst_70 = arith.constant dense<0.000000e+00> : vector<256xf32>
    %198 = vector.multi_reduction <add>, %195, %cst_70 [1] : vector<256x2xf32> to vector<256xf32>
    %199 = vector.shape_cast %198 : vector<256xf32> to vector<256x1xf32>
    %cst_71 = arith.constant 5.000000e-01 : f32
    %200 = vector.broadcast %cst_71 : f32 to vector<256x1xf32>
    %201 = arith.mulf %199, %200 : vector<256x1xf32>
    %202 = arith.mulf %195, %195 : vector<256x2xf32>
    %cst_72 = arith.constant dense<0.000000e+00> : vector<256xf32>
    %203 = vector.multi_reduction <add>, %202, %cst_72 [1] : vector<256x2xf32> to vector<256xf32>
    %204 = vector.shape_cast %203 : vector<256xf32> to vector<256x1xf32>
    %cst_73 = arith.constant 5.000000e-01 : f32
    %205 = vector.broadcast %cst_73 : f32 to vector<256x1xf32>
    %206 = arith.mulf %204, %205 : vector<256x1xf32>
    %207 = arith.mulf %201, %201 : vector<256x1xf32>
    %208 = arith.subf %206, %207 : vector<256x1xf32>
    %209 = vector.broadcast %201 : vector<256x1xf32> to vector<256x2xf32>
    %210 = arith.subf %195, %209 : vector<256x2xf32>
    %cst_74 = arith.constant 9.99999974E-6 : f32
    %211 = vector.broadcast %cst_74 : f32 to vector<256x1xf32>
    %212 = arith.addf %208, %211 : vector<256x1xf32>
    %213 = math.rsqrt %212 : vector<256x1xf32>
    %214 = arith.mulf %196, %213 : vector<256x1xf32>
    %215 = vector.broadcast %214 : vector<256x1xf32> to vector<256x2xf32>
    %216 = arith.mulf %210, %215 : vector<256x2xf32>
    %217 = vector.broadcast %197 : vector<256x1xf32> to vector<256x2xf32>
    %218 = arith.addf %216, %217 : vector<256x2xf32>
    %cst_75 = arith.constant 0.000000e+00 : f32
    %219 = vector.broadcast %cst_75 : f32 to vector<256x2xf32>
    %220 = arith.maximumf %218, %219 : vector<256x2xf32>
    %c0_76 = arith.constant 0 : index
    %c0_77 = arith.constant 0 : index
    %221 = vector.load %arg6[%c0_76, %c0_77] : memref<8x256xbf16, #tpu.memory_space<vmem>>, vector<8x256xbf16>
    %222 = arith.truncf %220 : vector<256x2xf32> to vector<256x2xbf16>
    %cst_78 = arith.constant dense<0.000000e+00> : vector<8x2xf32>
    %223 = tpu.matmul %221, %222, %cst_78 {dimension_numbers = #tpu.dot_dimension_numbers<[1], [0], [0], [1], [0, 0, 1, 1], [], []>} : vector<8x256xbf16>, vector<256x2xbf16>, vector<8x2xf32> -> vector<8x2xf32>
    %c0_79 = arith.constant 0 : index
    %c2_80 = arith.constant 2 : index
    %224 = vector.load %arg8[%c0_79, %c2_80] : memref<256x3xf32, #tpu.memory_space<vmem>>, vector<8x1xf32>
    %225 = vector.broadcast %224 : vector<8x1xf32> to vector<8x2xf32>
    %226 = arith.addf %223, %225 : vector<8x2xf32>
    %c0_81 = arith.constant 0 : index
    %c0_82 = arith.constant 0 : index
    %227 = vector.load %arg9[%c0_81, %c0_82] : memref<8x2xf32, #tpu.memory_space<vmem>>, vector<8x2xf32>
    tpu.vector_store %arg9[%c0_81, %c0_82], %226 {strides = array<i32>} : memref<8x2xf32, #tpu.memory_space<vmem>>, vector<8x2xf32>,
    return
  }
}

</mosaic_0001>

<llo_original>
// kernel: tpu_custom_call.1
$region0: #{tpu_custom_call.1}
  #allocation0 [shape = 'u32[]', space=smem, size = 0x4, offset = 0x4, fixed_abs, tag = 'smem constant byte address 0x4 - core index']
  #allocation1 [shape = 'u32[144,128]{1,0:T(1,128)}', space=vmem, size = 0x12000, scoped, tag = 'internal scratch']
  %s0 = inlined_call_operand.vmem [shape: f32[2,96], index: 0, kind: input, shape index: {}]
  %s1 = inlined_call_operand.vmem [shape: bf16[96,382], index: 1, kind: input, shape index: {}]
  %s2 = inlined_call_operand.vmem [shape: bf16[32,10], index: 2, kind: input, shape index: {}]
  %s3 = inlined_call_operand.vmem [shape: bf16[32,160], index: 3, kind: input, shape index: {}]
  %s4 = inlined_call_operand.vmem [shape: bf16[64,96], index: 4, kind: input, shape index: {}]
  %s5 = inlined_call_operand.vmem [shape: bf16[256,128], index: 5, kind: input, shape index: {}]
  %s6 = inlined_call_operand.vmem [shape: bf16[8,256], index: 6, kind: input, shape index: {}]
  %s7 = inlined_call_operand.vmem [shape: f32[64,10], index: 7, kind: input, shape index: {}]
  %s8 = inlined_call_operand.vmem [shape: f32[256,3], index: 8, kind: input, shape index: {}]
  %s9 = inlined_call_operand.vmem [shape: f32[8,2], index: 9, kind: output, shape index: {}]
  %s10 = sld [smem:[#allocation0]]
  $region46: #{tpu_custom_call.1} parent=0
    _
  %s12 = ssub.s32 1, %s10
  %s13 = scalar_select 0, %s12, %s10
  // Predicated region
  $region2: #{tpu_custom_call.1} parent=0 // pred_check
    _
  $region3: #{tpu_custom_call.1} parent=0 // pred_check_branch
    %15 = sbr.rel (0) target = $region5
  $region4: #{tpu_custom_call.1} parent=0 // pred_region
    _
  $region5: #{tpu_custom_call.1} parent=0 // pred_fallthru
    _
  // Predicated region
  $region6: #{tpu_custom_call.1} parent=0 // pred_check
    _
  $region7: #{tpu_custom_call.1} parent=0 // pred_check_branch
    %17 = sbr.rel (0) target = $region9
  $region8: #{tpu_custom_call.1} parent=0 // pred_region
    _
  $region9: #{tpu_custom_call.1} parent=0 // pred_fallthru
    _
  // Predicated region
  $region10: #{tpu_custom_call.1} parent=0 // pred_check
    _
  $region11: #{tpu_custom_call.1} parent=0 // pred_check_branch
    %19 = sbr.rel (0) target = $region13
  $region12: #{tpu_custom_call.1} parent=0 // pred_region
    _
  $region13: #{tpu_custom_call.1} parent=0 // pred_fallthru
    _
  // Predicated region
  $region14: #{tpu_custom_call.1} parent=0 // pred_check
    _
  $region15: #{tpu_custom_call.1} parent=0 // pred_check_branch
    %21 = sbr.rel (0) target = $region17
  $region16: #{tpu_custom_call.1} parent=0 // pred_region
    _
  $region17: #{tpu_custom_call.1} parent=0 // pred_fallthru
    _
  // Predicated region
  $region18: #{tpu_custom_call.1} parent=0 // pred_check
    _
  $region19: #{tpu_custom_call.1} parent=0 // pred_check_branch
    %23 = sbr.rel (0) target = $region21
  $region20: #{tpu_custom_call.1} parent=0 // pred_region
    _
  $region21: #{tpu_custom_call.1} parent=0 // pred_fallthru
    _
  // Predicated region
  $region22: #{tpu_custom_call.1} parent=0 // pred_check
    _
  $region23: #{tpu_custom_call.1} parent=0 // pred_check_branch
    %25 = sbr.rel (0) target = $region25
  $region24: #{tpu_custom_call.1} parent=0 // pred_region
    _
  $region25: #{tpu_custom_call.1} parent=0 // pred_fallthru
    _
  // Predicated region
  $region26: #{tpu_custom_call.1} parent=0 // pred_check
    _
  $region27: #{tpu_custom_call.1} parent=0 // pred_check_branch
    %27 = sbr.rel (0) target = $region29
  $region28: #{tpu_custom_call.1} parent=0 // pred_region
    _
  $region29: #{tpu_custom_call.1} parent=0 // pred_fallthru
    _
  // Predicated region
  $region30: #{tpu_custom_call.1} parent=0 // pred_check
    _
  $region31: #{tpu_custom_call.1} parent=0 // pred_check_branch
    %29 = sbr.rel (0) target = $region33
  $region32: #{tpu_custom_call.1} parent=0 // pred_region
    _
  $region33: #{tpu_custom_call.1} parent=0 // pred_fallthru
    _
  // Predicated region
  $region34: #{tpu_custom_call.1} parent=0 // pred_check
    _
  $region35: #{tpu_custom_call.1} parent=0 // pred_check_branch
    %31 = sbr.rel (0) target = $region37
  $region36: #{tpu_custom_call.1} parent=0 // pred_region
    _
  $region37: #{tpu_custom_call.1} parent=0 // pred_fallthru
    _
  %v33 = vld [vmem:[%s0] sm:$0x3]
  %v34 = vld [vmem:[%s1] sm:$0xff]
  %v35 = vld [vmem:[%s1 + $0xc] sm:$0xff]
  %v36 = vld [vmem:[%s1 + $0x18] sm:$0xff]
  %v37 = vld [vmem:[%s1 + $0x24] sm:$0xff]
  %v38 = vld [vmem:[%s1 + $0x30] sm:$0xff]
  %v39 = vld [vmem:[%s1 + $0x3c] sm:$0xff]
  %v40 = vld [vmem:[%s1 + $0x48] sm:$0xff]
  %v41 = vld [vmem:[%s1 + $0x54] sm:$0xff]
  %v42 = vld [vmem:[%s1 + $0x60] sm:$0xff]
  %v43 = vld [vmem:[%s1 + $0x6c] sm:$0xff]
  %v44 = vld [vmem:[%s1 + $0x78] sm:$0xff]
  %v45 = vld [vmem:[%s1 + $0x84] sm:$0xff]
  %v46 = vpack.c.bf16 %v33, %v33
  %v59 = vunpack.c.l.b16 %v34
  %v60 = vunpack.c.h.b16 %v34
  %v61 = vunpack.c.l.b16 %v35
  %v62 = vunpack.c.h.b16 %v35
  %v63 = vunpack.c.l.b16 %v36
  %v64 = vunpack.c.h.b16 %v36
  %v65 = vunpack.c.l.b16 %v37
  %v66 = vunpack.c.h.b16 %v37
  %v67 = vunpack.c.l.b16 %v38
  %v68 = vunpack.c.h.b16 %v38
  %v69 = vunpack.c.l.b16 %v39
  %v70 = vunpack.c.h.b16 %v39
  %v71 = vunpack.c.l.b16 %v40
  %v72 = vunpack.c.h.b16 %v40
  %v73 = vunpack.c.l.b16 %v41
  %v74 = vunpack.c.h.b16 %v41
  %v75 = vunpack.c.l.b16 %v42
  %v76 = vunpack.c.h.b16 %v42
  %v77 = vunpack.c.l.b16 %v43
  %v78 = vunpack.c.h.b16 %v43
  %v79 = vunpack.c.l.b16 %v44
  %v80 = vunpack.c.h.b16 %v44
  %v81 = vunpack.c.l.b16 %v45
  %v82 = vunpack.c.h.b16 %v45
  %v83 = vpack.c.b16 %v61, %v59
  %v84 = vpack.c.b16 %v62, %v60
  %v85 = vpack.c.b16 %v65, %v63
  %v86 = vpack.c.b16 %v66, %v64
  %v87 = vpack.c.b16 %v69, %v67
  %v88 = vpack.c.b16 %v70, %v68
  %v89 = vpack.c.b16 %v73, %v71
  %v90 = vpack.c.b16 %v74, %v72
  %v91 = vpack.c.b16 %v77, %v75
  %v92 = vpack.c.b16 %v78, %v76
  %v93 = vpack.c.b16 %v81, %v79
  %v94 = vpack.c.b16 %v82, %v80
  %vm107 = vcmask 785408
  %v109 = vsel %vm107, %v46, 0
  %111 = vmatprep.subr.bf16.mxu0 %v84
  %112 = vmatpush1.bf16.msra.mxu0 %v83
  %113 = vmatprep.subr.bf16.mxu0 %v86
  %114 = vmatpush1.bf16.msra.mxu0 %v85
  %115 = vmatprep.subr.bf16.mxu0 %v88
  %116 = vmatpush1.bf16.msra.mxu0 %v87
  %117 = vmatprep.subr.bf16.mxu0 %v90
  %118 = vmatpush1.bf16.msra.mxu0 %v89
  %119 = vmatprep.subr.bf16.mxu0 %v92
  %120 = vmatpush1.bf16.msra.mxu0 %v91
  %121 = vmatprep.subr.bf16.mxu0 %v94
  %122 = vmatpush1.bf16.msra.mxu0 %v93
  %123 = vmatprep.subr.bf16.mxu0 0
  %124 = vmatpush1.bf16.msra.mxu0 0
  %125 = vmatprep.subr.bf16.mxu0 0
  %126 = vmatpush1.bf16.msra.mxu0 0
  %127 = vmatprep.subr.bf16.mxu0 0
  %128 = vmatpush1.bf16.msra.mxu0 0
  %129 = vmatprep.subr.bf16.mxu0 0
  %130 = vmatpush1.bf16.msra.mxu0 0
  %131 = vmatprep.subr.bf16.mxu0 0
  %132 = vmatpush1.bf16.msra.mxu0 0
  %133 = vmatprep.subr.bf16.mxu0 0
  %134 = vmatpush1.bf16.msra.mxu0 0
  %135 = vmatprep.subr.bf16.mxu0 0
  %136 = vmatpush1.bf16.msra.mxu0 0
  %137 = vmatprep.subr.bf16.mxu0 0
  %138 = vmatpush1.bf16.msra.mxu0 0
  %139 = vmatprep.subr.bf16.mxu0 0
  %140 = vmatpush1.bf16.msra.mxu0 0
  %141 = vmatprep.subr.bf16.mxu0 0
  %142 = vmatpush1.bf16.msra.mxu0 0
  %143 = vmatprep.mubr.bf16.mxu0 0
  %144 = vmatmul.mubr.bf16.gmra.mrb[0].mxu0 %v109
  %v145 = vpop.f32.mrb[0].mxu0
  %v146 = vadd.f32 0.0, %v145
  %v147 = vpop.f32.mrb[0].mxu0
  %v148 = vadd.f32 0.0, %v147
  %v149 = vpop.f32.mrb[0].mxu0
  %v150 = vpop.f32.mrb[0].mxu0
  %151 = vdwg.mxu0
  %v153 = vrot.slane %v146, 6
  %154 = vrot.lane.b32.xlu0 %v153, 84
  %v155 = vpop.permute.xlu0 %154
  %v158 = vrot.slane %v146, 4
  %v159 = vrot.slane %v148, 4
  %160 = vrot.lane.b32.xlu0 %v158, 40
  %v161 = vpop.permute.xlu0 %160
  %162 = vrot.lane.b32.xlu0 %v159, 40
  %v163 = vpop.permute.xlu0 %162
  %vm164 = vcmask 326656
  %v165 = vsel %vm164, %v161, %v163
  %v167 = vrot.slane %v148, 2
  %168 = vrot.lane.b32.xlu0 %v167, 124
  %v169 = vpop.permute.xlu0 %168
  %171 = vrot.lane.b32.xlu0 %v148, 80
  %v172 = vpop.permute.xlu0 %171
  %vm174 = vcmask 1041408
  %v175 = vsel %vm174, %v146, %v155
  %vm176 = vcmask 1043456
  %v177 = vsel %vm176, %v175, %v165
  %vm178 = vcmask 1045504
  %v179 = vsel %vm178, %v177, %v169
  %v180 = vpack.c.bf16 %v172, %v179
  %v181 = vld [vmem:[%s2] sm:$0xf]
  %v182 = vld [vmem:[%s2 + $0x4] sm:$0xf]
  %v183 = vld [vmem:[%s2 + $0x8] sm:$0xf]
  %v184 = vld [vmem:[%s2 + $0xc] sm:$0xf]
  %v189 = vunpack.c.l.b16 %v181
  %v190 = vunpack.c.l.b16 %v182
  %v191 = vunpack.c.l.b16 %v183
  %v192 = vunpack.c.l.b16 %v184
  %v193 = vpack.c.b16 %v190, %v189
  %v194 = vpack.c.b16 %v192, %v191
  %vm195 = vcmask 80896
  %v197 = vsel %vm195, %v193, 0
  %v200 = vsel %vm195, %v194, 0
  %vm202 = vcmask 1044480
  %v204 = vsel %vm202, %v180, 0
  %206 = vmatprep.subr.bf16.mxu0 0
  %207 = vmatpush1.bf16.msra.mxu0 %v204
  %208 = vmatprep.subr.bf16.mxu0 0
  %209 = vmatpush1.bf16.msra.mxu0 0
  %210 = vmatprep.subr.bf16.mxu0 0
  %211 = vmatpush1.bf16.msra.mxu0 0
  %212 = vmatprep.subr.bf16.mxu0 0
  %213 = vmatpush1.bf16.msra.mxu0 0
  %214 = vmatprep.subr.bf16.mxu0 0
  %215 = vmatpush1.bf16.msra.mxu0 0
  %216 = vmatprep.subr.bf16.mxu0 0
  %217 = vmatpush1.bf16.msra.mxu0 0
  %218 = vmatprep.subr.bf16.mxu0 0
  %219 = vmatpush1.bf16.msra.mxu0 0
  %220 = vmatprep.subr.bf16.mxu0 0
  %221 = vmatpush1.bf16.msra.mxu0 0
  %222 = vmatprep.subr.bf16.mxu0 0
  %223 = vmatpush1.bf16.msra.mxu0 0
  %224 = vmatprep.subr.bf16.mxu0 0
  %225 = vmatpush1.bf16.msra.mxu0 0
  %226 = vmatprep.subr.bf16.mxu0 0
  %227 = vmatpush1.bf16.msra.mxu0 0
  %228 = vmatprep.subr.bf16.mxu0 0
  %229 = vmatpush1.bf16.msra.mxu0 0
  %230 = vmatprep.subr.bf16.mxu0 0
  %231 = vmatpush1.bf16.msra.mxu0 0
  %232 = vmatprep.subr.bf16.mxu0 0
  %233 = vmatpush1.bf16.msra.mxu0 0
  %234 = vmatprep.subr.bf16.mxu0 0
  %235 = vmatpush1.bf16.msra.mxu0 0
  %236 = vmatprep.subr.bf16.mxu0 0
  %237 = vmatpush1.bf16.msra.mxu0 0
  %238 = vmatprep.mubr.bf16.mxu0 0
  %239 = vmatmul.mubr.bf16.gmra.mrb[0].mxu0 %v197
  %v240 = vpop.f32.mrb[0].mxu0
  %v241 = vadd.f32 0.0, %v240
  %v242 = vpop.f32.mrb[0].mxu0
  %v243 = vpop.f32.mrb[0].mxu0
  %v244 = vadd.f32 0.0, %v243
  %v245 = vpop.f32.mrb[0].mxu0
  %246 = vmatprep.mubr.bf16.mxu0 0
  %247 = vmatmul.mubr.bf16.gmra.mrb[0].mxu0 %v200
  %v248 = vpop.f32.mrb[0].mxu0
  %v249 = vadd.f32 0.0, %v248
  %v250 = vpop.f32.mrb[0].mxu0
  %v251 = vpop.f32.mrb[0].mxu0
  %v252 = vadd.f32 0.0, %v251
  %v253 = vpop.f32.mrb[0].mxu0
  %254 = vdwg.mxu0
  %v255 = vld [vmem:[%s7] sm:$0xff]
  %v256 = vld [vmem:[%s7 + $0x8] sm:$0xff]
  %v257 = vld [vmem:[%s7 + $0x10] sm:$0xff]
  %v258 = vld [vmem:[%s7 + $0x18] sm:$0xff]
  %vm259 = vcmask 359424
  %v260 = vsel %vm259, %v241, 0.0
  %261 = vadd.xlane.f32.xlu0 %v260
  %v262 = vpop.xlane.xlu0 %261
  %v263 = vsel %vm259, %v244, 0.0
  %264 = vadd.xlane.f32.xlu0 %v263
  %v265 = vpop.xlane.xlu0 %264
  %v266 = vsel %vm259, %v249, 0.0
  %267 = vadd.xlane.f32.xlu0 %v266
  %v268 = vpop.xlane.xlu0 %267
  %v269 = vsel %vm259, %v252, 0.0
  %270 = vadd.xlane.f32.xlu0 %v269
  %v271 = vpop.xlane.xlu0 %270
  %v272 = vmul.f32 %v262, 0.022727273
  %v273 = vmul.f32 %v265, 0.022727273
  %v274 = vmul.f32 %v268, 0.022727273
  %v275 = vmul.f32 %v271, 0.022727273
  %v276 = vmul.f32 %v241, %v241
  %v277 = vmul.f32 %v244, %v244
  %v278 = vmul.f32 %v249, %v249
  %v279 = vmul.f32 %v252, %v252
  %v280 = vsel %vm259, %v276, 0.0
  %281 = vadd.xlane.f32.xlu0 %v280
  %v282 = vpop.xlane.xlu0 %281
  %v283 = vsel %vm259, %v277, 0.0
  %284 = vadd.xlane.f32.xlu0 %v283
  %v285 = vpop.xlane.xlu0 %284
  %v286 = vsel %vm259, %v278, 0.0
  %287 = vadd.xlane.f32.xlu0 %v286
  %v288 = vpop.xlane.xlu0 %287
  %v289 = vsel %vm259, %v279, 0.0
  %290 = vadd.xlane.f32.xlu0 %v289
  %v291 = vpop.xlane.xlu0 %290
  %v292 = vmul.f32 %v282, 0.022727273
  %v293 = vmul.f32 %v285, 0.022727273
  %v294 = vmul.f32 %v288, 0.022727273
  %v295 = vmul.f32 %v291, 0.022727273
  %v296 = vmul.f32 %v272, %v272
  %v297 = vmul.f32 %v273, %v273
  %v298 = vmul.f32 %v274, %v274
  %v299 = vmul.f32 %v275, %v275
  %v300 = vsub.f32 %v292, %v296
  %v301 = vsub.f32 %v293, %v297
  %v302 = vsub.f32 %v294, %v298
  %v303 = vsub.f32 %v295, %v299
  %v304 = vsub.f32 %v241, %v272
  %v305 = vsub.f32 %v244, %v273
  %v306 = vsub.f32 %v249, %v274
  %v307 = vsub.f32 %v252, %v275
  %v308 = vadd.f32 %v300, 1e-05
  %v309 = vadd.f32 %v301, 1e-05
  %v310 = vadd.f32 %v302, 1e-05
  %v311 = vadd.f32 %v303, 1e-05
  %v312 = vrsqrt.pop %v308
  %v313 = vrsqrt.pop %v309
  %v314 = vrsqrt.pop %v310
  %v315 = vrsqrt.pop %v311
  %v316 = vmul.f32 %v255, %v312
  %v317 = vmul.f32 %v256, %v313
  %v318 = vmul.f32 %v257, %v314
  %v319 = vmul.f32 %v258, %v315
  %321 = vset.pattern.permute.xlu0 0
  %322 = vperm.xlu0 %321, %v316
  %v323 = vpop.permute.xlu0 %322
  %326 = vset.pattern.permute.xlu0 0
  %327 = vperm.xlu0 %326, %v317
  %v328 = vpop.permute.xlu0 %327
  %331 = vset.pattern.permute.xlu0 0
  %332 = vperm.xlu0 %331, %v318
  %v333 = vpop.permute.xlu0 %332
  %336 = vset.pattern.permute.xlu0 0
  %337 = vperm.xlu0 %336, %v319
  %v338 = vpop.permute.xlu0 %337
  %v340 = vmul.f32 %v304, %v323
  %v341 = vmul.f32 %v305, %v328
  %v342 = vmul.f32 %v306, %v333
  %v343 = vmul.f32 %v307, %v338
  %345 = vset.pattern.permute.xlu0 1
  %346 = vperm.xlu0 %345, %v255
  %v347 = vpop.permute.xlu0 %346
  %350 = vset.pattern.permute.xlu0 1
  %351 = vperm.xlu0 %350, %v256
  %v352 = vpop.permute.xlu0 %351
  %355 = vset.pattern.permute.xlu0 1
  %356 = vperm.xlu0 %355, %v257
  %v357 = vpop.permute.xlu0 %356
  %360 = vset.pattern.permute.xlu0 1
  %361 = vperm.xlu0 %360, %v258
  %v362 = vpop.permute.xlu0 %361
  %v364 = vadd.f32 %v340, %v347
  %v365 = vadd.f32 %v341, %v352
  %v366 = vadd.f32 %v342, %v357
  %v367 = vadd.f32 %v343, %v362
  %v368 = vmax.f32 %v364, 0.0
  %v369 = vmax.f32 %v365, 0.0
  %v370 = vmax.f32 %v366, 0.0
  %v371 = vmax.f32 %v367, 0.0
  %v372 = vld [vmem:[%s1 + $0x4] sm:$0xff]
  %v373 = vld [vmem:[%s1 + $0x10] sm:$0xff]
  %v374 = vld [vmem:[%s1 + $0x1c] sm:$0xff]
  %v375 = vld [vmem:[%s1 + $0x28] sm:$0xff]
  %v376 = vld [vmem:[%s1 + $0x34] sm:$0xff]
  %v377 = vld [vmem:[%s1 + $0x40] sm:$0x33]
  %v378 = vpack.c.bf16 %v369, %v368
  %v379 = vpack.c.bf16 %v371, %v370
  %v386 = vunpack.c.l.b16 %v372
  %v387 = vunpack.c.h.b16 %v372
  %v388 = vunpack.c.l.b16 %v373
  %v389 = vunpack.c.h.b16 %v373
  %v390 = vunpack.c.l.b16 %v374
  %v391 = vunpack.c.h.b16 %v374
  %v392 = vunpack.c.l.b16 %v375
  %v393 = vunpack.c.h.b16 %v375
  %v394 = vunpack.c.l.b16 %v376
  %v395 = vunpack.c.h.b16 %v376
  %v396 = vunpack.c.l.b16 %v377
  %v397 = vunpack.c.h.b16 %v377
  %v398 = vpack.c.b16 %v388, %v386
  %v399 = vpack.c.b16 %v389, %v387
  %v400 = vpack.c.b16 %v392, %v390
  %v401 = vpack.c.b16 %v393, %v391
  %v402 = vpack.c.b16 %v396, %v394
  %v403 = vpack.c.b16 %v397, %v395
  %404 = vrot.lane.b32.xlu0 %v398, 36
  %v405 = vpop.permute.xlu0 %404
  %406 = vrot.lane.b32.xlu0 %v399, 36
  %v407 = vpop.permute.xlu0 %406
  %408 = vrot.lane.b32.xlu0 %v400, 36
  %v409 = vpop.permute.xlu0 %408
  %410 = vrot.lane.b32.xlu0 %v401, 36
  %v411 = vpop.permute.xlu0 %410
  %412 = vrot.lane.b32.xlu0 %v402, 36
  %v413 = vpop.permute.xlu0 %412
  %414 = vrot.lane.b32.xlu0 %v403, 36
  %v415 = vpop.permute.xlu0 %414
  %vm416 = vcmask 293888
  %v417 = vsel %vm416, %v405, %v407
  %v418 = vsel %vm416, %v409, %v411
  %v419 = vsel %vm416, %v413, %v415
  %v423 = vsel %vm259, %v378, 0
  %v426 = vsel %vm259, %v379, 0
  %v429 = vsel %vm178, %v419, 0
  %431 = vmatprep.subr.bf16.mxu0 0
  %432 = vmatpush1.bf16.msra.mxu0 %v417
  %433 = vmatprep.subr.bf16.mxu0 0
  %434 = vmatpush1.bf16.msra.mxu0 %v418
  %435 = vmatprep.subr.bf16.mxu0 0
  %436 = vmatpush1.bf16.msra.mxu0 %v429
  %437 = vmatprep.subr.bf16.mxu0 0
  %438 = vmatpush1.bf16.msra.mxu0 0
  %439 = vmatprep.subr.bf16.mxu0 0
  %440 = vmatpush1.bf16.msra.mxu0 0
  %441 = vmatprep.subr.bf16.mxu0 0
  %442 = vmatpush1.bf16.msra.mxu0 0
  %443 = vmatprep.subr.bf16.mxu0 0
  %444 = vmatpush1.bf16.msra.mxu0 0
  %445 = vmatprep.subr.bf16.mxu0 0
  %446 = vmatpush1.bf16.msra.mxu0 0
  %447 = vmatprep.subr.bf16.mxu0 0
  %448 = vmatpush1.bf16.msra.mxu0 0
  %449 = vmatprep.subr.bf16.mxu0 0
  %450 = vmatpush1.bf16.msra.mxu0 0
  %451 = vmatprep.subr.bf16.mxu0 0
  %452 = vmatpush1.bf16.msra.mxu0 0
  %453 = vmatprep.subr.bf16.mxu0 0
  %454 = vmatpush1.bf16.msra.mxu0 0
  %455 = vmatprep.subr.bf16.mxu0 0
  %456 = vmatpush1.bf16.msra.mxu0 0
  %457 = vmatprep.subr.bf16.mxu0 0
  %458 = vmatpush1.bf16.msra.mxu0 0
  %459 = vmatprep.subr.bf16.mxu0 0
  %460 = vmatpush1.bf16.msra.mxu0 0
  %461 = vmatprep.subr.bf16.mxu0 0
  %462 = vmatpush1.bf16.msra.mxu0 0
  %463 = vmatprep.mubr.bf16.mxu0 0
  %464 = vmatmul.mubr.bf16.gmra.mrb[0].mxu0 %v423
  %v465 = vpop.f32.mrb[0].mxu0
  %v466 = vadd.f32 0.0, %v465
  %v467 = vpop.f32.mrb[0].mxu0
  %v468 = vpop.f32.mrb[0].mxu0
  %v469 = vadd.f32 0.0, %v468
  %v470 = vpop.f32.mrb[0].mxu0
  %471 = vmatprep.mubr.bf16.mxu0 0
  %472 = vmatmul.mubr.bf16.gmra.mrb[0].mxu0 %v426
  %v473 = vpop.f32.mrb[0].mxu0
  %v474 = vadd.f32 0.0, %v473
  %v475 = vpop.f32.mrb[0].mxu0
  %v476 = vpop.f32.mrb[0].mxu0
  %v477 = vadd.f32 0.0, %v476
  %v478 = vpop.f32.mrb[0].mxu0
  %479 = vdwg.mxu0
  %484 = vrot.lane.b32.xlu0 %v466, 110
  %v485 = vpop.permute.xlu0 %484
  %486 = vrot.lane.b32.xlu0 %v469, 110
  %v487 = vpop.permute.xlu0 %486
  %488 = vrot.lane.b32.xlu0 %v474, 110
  %v489 = vpop.permute.xlu0 %488
  %490 = vrot.lane.b32.xlu0 %v477, 110
  %v491 = vpop.permute.xlu0 %490
  %496 = vrot.lane.b32.xlu0 %v466, 92
  %v497 = vpop.permute.xlu0 %496
  %498 = vrot.lane.b32.xlu0 %v469, 92
  %v499 = vpop.permute.xlu0 %498
  %500 = vrot.lane.b32.xlu0 %v474, 92
  %v501 = vpop.permute.xlu0 %500
  %502 = vrot.lane.b32.xlu0 %v477, 92
  %v503 = vpop.permute.xlu0 %502
  %508 = vrot.lane.b32.xlu0 %v466, 74
  %v509 = vpop.permute.xlu0 %508
  %510 = vrot.lane.b32.xlu0 %v469, 74
  %v511 = vpop.permute.xlu0 %510
  %512 = vrot.lane.b32.xlu0 %v474, 74
  %v513 = vpop.permute.xlu0 %512
  %514 = vrot.lane.b32.xlu0 %v477, 74
  %v515 = vpop.permute.xlu0 %514
  %520 = vrot.lane.b32.xlu0 %v466, 56
  %v521 = vpop.permute.xlu0 %520
  %522 = vrot.lane.b32.xlu0 %v469, 56
  %v523 = vpop.permute.xlu0 %522
  %524 = vrot.lane.b32.xlu0 %v474, 56
  %v525 = vpop.permute.xlu0 %524
  %526 = vrot.lane.b32.xlu0 %v477, 56
  %v527 = vpop.permute.xlu0 %526
  %v532 = vpack.c.bf16 %v469, %v466
  %v533 = vpack.c.bf16 %v477, %v474
  %v534 = vpack.c.bf16 %v487, %v485
  %v535 = vpack.c.bf16 %v491, %v489
  %v536 = vpack.c.bf16 %v499, %v497
  %v537 = vpack.c.bf16 %v503, %v501
  %v538 = vpack.c.bf16 %v511, %v509
  %v539 = vpack.c.bf16 %v515, %v513
  %v540 = vpack.c.bf16 %v523, %v521
  %v541 = vpack.c.bf16 %v527, %v525
  %v542 = vld [vmem:[%s3] sm:$0xff]
  %v543 = vld [vmem:[%s3 + $0x8] sm:$0xff]
  %v544 = vld [vmem:[%s3 + $0x10] sm:$0xff]
  %v545 = vld [vmem:[%s3 + $0x18] sm:$0xff]
  %v550 = vunpack.c.l.b16 %v542
  %v551 = vunpack.c.h.b16 %v542
  %v552 = vunpack.c.l.b16 %v543
  %v553 = vunpack.c.h.b16 %v543
  %v554 = vunpack.c.l.b16 %v544
  %v555 = vunpack.c.h.b16 %v544
  %v556 = vunpack.c.l.b16 %v545
  %v557 = vunpack.c.h.b16 %v545
  %v558 = vpack.c.b16 %v552, %v550
  %v559 = vpack.c.b16 %v553, %v551
  %v560 = vpack.c.b16 %v556, %v554
  %v561 = vpack.c.b16 %v557, %v555
  %vm564 = vcmask 261120
  %v566 = vsel %vm564, %v559, 0
  %v569 = vsel %vm564, %v561, 0
  %571 = vmatprep.subr.bf16.mxu0 0
  %572 = vmatpush1.bf16.msra.mxu0 %v532
  %573 = vmatprep.subr.bf16.mxu0 0
  %574 = vmatpush1.bf16.msra.mxu0 %v533
  %575 = vmatprep.subr.bf16.mxu0 0
  %576 = vmatpush1.bf16.msra.mxu0 %v534
  %577 = vmatprep.subr.bf16.mxu0 0
  %578 = vmatpush1.bf16.msra.mxu0 %v535
  %579 = vmatprep.subr.bf16.mxu0 0
  %580 = vmatpush1.bf16.msra.mxu0 %v536
  %581 = vmatprep.subr.bf16.mxu0 0
  %582 = vmatpush1.bf16.msra.mxu0 %v537
  %583 = vmatprep.subr.bf16.mxu0 0
  %584 = vmatpush1.bf16.msra.mxu0 %v538
  %585 = vmatprep.subr.bf16.mxu0 0
  %586 = vmatpush1.bf16.msra.mxu0 %v539
  %587 = vmatprep.subr.bf16.mxu0 0
  %588 = vmatpush1.bf16.msra.mxu0 %v540
  %589 = vmatprep.subr.bf16.mxu0 0
  %590 = vmatpush1.bf16.msra.mxu0 %v541
  %591 = vmatprep.subr.bf16.mxu0 0
  %592 = vmatpush1.bf16.msra.mxu0 0
  %593 = vmatprep.subr.bf16.mxu0 0
  %594 = vmatpush1.bf16.msra.mxu0 0
  %595 = vmatprep.subr.bf16.mxu0 0
  %596 = vmatpush1.bf16.msra.mxu0 0
  %597 = vmatprep.subr.bf16.mxu0 0
  %598 = vmatpush1.bf16.msra.mxu0 0
  %599 = vmatprep.subr.bf16.mxu0 0
  %600 = vmatpush1.bf16.msra.mxu0 0
  %601 = vmatprep.subr.bf16.mxu0 0
  %602 = vmatpush1.bf16.msra.mxu0 0
  %603 = vmatprep.mubr.bf16.mxu0 %v566
  %604 = vmatmul.mubr.bf16.gmra.mrb[0].mxu0 %v558
  %v605 = vpop.f32.mrb[0].mxu0
  %v606 = vadd.f32 0.0, %v605
  %v607 = vpop.f32.mrb[0].mxu0
  %v608 = vpop.f32.mrb[0].mxu0
  %v609 = vadd.f32 0.0, %v608
  %v610 = vpop.f32.mrb[0].mxu0
  %611 = vmatprep.mubr.bf16.mxu0 %v569
  %612 = vmatmul.mubr.bf16.gmra.mrb[0].mxu0 %v560
  %v613 = vpop.f32.mrb[0].mxu0
  %v614 = vadd.f32 0.0, %v613
  %v615 = vpop.f32.mrb[0].mxu0
  %v616 = vpop.f32.mrb[0].mxu0
  %v617 = vadd.f32 0.0, %v616
  %v618 = vpop.f32.mrb[0].mxu0
  %619 = vdwg.mxu0
  %vm620 = vcmask 146432
  %v621 = vsel %vm620, %v606, 0.0
  %622 = vadd.xlane.f32.xlu0 %v621
  %v623 = vpop.xlane.xlu0 %622
  %v624 = vsel %vm620, %v609, 0.0
  %625 = vadd.xlane.f32.xlu0 %v624
  %v626 = vpop.xlane.xlu0 %625
  %v627 = vsel %vm620, %v614, 0.0
  %628 = vadd.xlane.f32.xlu0 %v627
  %v629 = vpop.xlane.xlu0 %628
  %v630 = vsel %vm620, %v617, 0.0
  %631 = vadd.xlane.f32.xlu0 %v630
  %v632 = vpop.xlane.xlu0 %631
  %v633 = vmul.f32 %v623, 0.055555556
  %v634 = vmul.f32 %v626, 0.055555556
  %v635 = vmul.f32 %v629, 0.055555556
  %v636 = vmul.f32 %v632, 0.055555556
  %v637 = vmul.f32 %v606, %v606
  %v638 = vmul.f32 %v609, %v609
  %v639 = vmul.f32 %v614, %v614
  %v640 = vmul.f32 %v617, %v617
  %v641 = vsel %vm620, %v637, 0.0
  %642 = vadd.xlane.f32.xlu0 %v641
  %v643 = vpop.xlane.xlu0 %642
  %v644 = vsel %vm620, %v638, 0.0
  %645 = vadd.xlane.f32.xlu0 %v644
  %v646 = vpop.xlane.xlu0 %645
  %v647 = vsel %vm620, %v639, 0.0
  %648 = vadd.xlane.f32.xlu0 %v647
  %v649 = vpop.xlane.xlu0 %648
  %v650 = vsel %vm620, %v640, 0.0
  %651 = vadd.xlane.f32.xlu0 %v650
  %v652 = vpop.xlane.xlu0 %651
  %v653 = vmul.f32 %v643, 0.055555556
  %v654 = vmul.f32 %v646, 0.055555556
  %v655 = vmul.f32 %v649, 0.055555556
  %v656 = vmul.f32 %v652, 0.055555556
  %v657 = vmul.f32 %v633, %v633
  %v658 = vmul.f32 %v634, %v634
  %v659 = vmul.f32 %v635, %v635
  %v660 = vmul.f32 %v636, %v636
  %v661 = vsub.f32 %v653, %v657
  %v662 = vsub.f32 %v654, %v658
  %v663 = vsub.f32 %v655, %v659
  %v664 = vsub.f32 %v656, %v660
  %v665 = vsub.f32 %v606, %v633
  %v666 = vsub.f32 %v609, %v634
  %v667 = vsub.f32 %v614, %v635
  %v668 = vsub.f32 %v617, %v636
  %v669 = vadd.f32 %v661, 1e-05
  %v670 = vadd.f32 %v662, 1e-05
  %v671 = vadd.f32 %v663, 1e-05
  %v672 = vadd.f32 %v664, 1e-05
  %v673 = vrsqrt.pop %v669
  %v674 = vrsqrt.pop %v670
  %v675 = vrsqrt.pop %v671
  %v676 = vrsqrt.pop %v672
  %v677 = vmul.f32 %v255, %v673
  %v678 = vmul.f32 %v256, %v674
  %v679 = vmul.f32 %v257, %v675
  %v680 = vmul.f32 %v258, %v676
  %682 = vset.pattern.permute.xlu0 2
  %683 = vperm.xlu0 %682, %v677
  %v684 = vpop.permute.xlu0 %683
  %687 = vset.pattern.permute.xlu0 2
  %688 = vperm.xlu0 %687, %v678
  %v689 = vpop.permute.xlu0 %688
  %692 = vset.pattern.permute.xlu0 2
  %693 = vperm.xlu0 %692, %v679
  %v694 = vpop.permute.xlu0 %693
  %697 = vset.pattern.permute.xlu0 2
  %698 = vperm.xlu0 %697, %v680
  %v699 = vpop.permute.xlu0 %698
  %v701 = vmul.f32 %v665, %v684
  %v702 = vmul.f32 %v666, %v689
  %v703 = vmul.f32 %v667, %v694
  %v704 = vmul.f32 %v668, %v699
  %705 = vset.pattern.permute.xlu0 3
  %706 = vperm.xlu0 %705, %v255
  %v707 = vpop.permute.xlu0 %706
  %709 = vset.pattern.permute.xlu0 3
  %710 = vperm.xlu0 %709, %v256
  %v711 = vpop.permute.xlu0 %710
  %713 = vset.pattern.permute.xlu0 3
  %714 = vperm.xlu0 %713, %v257
  %v715 = vpop.permute.xlu0 %714
  %717 = vset.pattern.permute.xlu0 3
  %718 = vperm.xlu0 %717, %v258
  %v719 = vpop.permute.xlu0 %718
  %v721 = vadd.f32 %v701, %v707
  %v722 = vadd.f32 %v702, %v711
  %v723 = vadd.f32 %v703, %v715
  %v724 = vadd.f32 %v704, %v719
  %v725 = vmax.f32 %v721, 0.0
  %v726 = vmax.f32 %v722, 0.0
  %v727 = vmax.f32 %v723, 0.0
  %v728 = vmax.f32 %v724, 0.0
  %v729 = vld [vmem:[%s1 + $0x8] sm:$0xf]
  %v730 = vld [vmem:[%s1 + $0x14] sm:$0xf]
  %v731 = vld [vmem:[%s1 + $0x20] sm:$0x1]
  %v732 = vpack.c.bf16 %v726, %v725
  %v733 = vpack.c.bf16 %v728, %v727
  %v734 = vunpack.c.l.bf16 %v732
  %v735 = vunpack.c.h.bf16 %v732
  %v736 = vunpack.c.l.bf16 %v733
  %v737 = vunpack.c.h.bf16 %v733
  %v738 = vsub.f32 %v725, %v734
  %v739 = vsub.f32 %v726, %v735
  %v740 = vsub.f32 %v727, %v736
  %v741 = vsub.f32 %v728, %v737
  %v742 = vpack.c.bf16 %v739, %v738
  %v743 = vpack.c.bf16 %v741, %v740
  %v747 = vunpack.c.l.b16 %v729
  %v748 = vunpack.c.l.b16 %v730
  %v749 = vunpack.c.l.b16 %v731
  %v750 = vpack.c.b16 %v748, %v747
  %v751 = vpack.c.b16 %v749, %v749
  %752 = vrot.lane.b32.xlu0 %v750, 74
  %v753 = vpop.permute.xlu0 %752
  %754 = vrot.lane.b32.xlu0 %v751, 74
  %v755 = vpop.permute.xlu0 %754
  %v758 = vsel %vm620, %v742, 0
  %v761 = vsel %vm620, %v743, 0
  %vm763 = vcmask 1040384
  %v765 = vsel %vm763, %v755, 0
  %767 = vmatprep.subr.bf16.mxu0 0
  %768 = vmatpush1.bf16.msra.mxu0 %v753
  %769 = vmatprep.subr.bf16.mxu0 0
  %770 = vmatpush1.bf16.msra.mxu0 %v765
  %771 = vmatprep.subr.bf16.mxu0 0
  %772 = vmatpush1.bf16.msra.mxu0 0
  %773 = vmatprep.subr.bf16.mxu0 0
  %774 = vmatpush1.bf16.msra.mxu0 0
  %775 = vmatprep.subr.bf16.mxu0 0
  %776 = vmatpush1.bf16.msra.mxu0 0
  %777 = vmatprep.subr.bf16.mxu0 0
  %778 = vmatpush1.bf16.msra.mxu0 0
  %779 = vmatprep.subr.bf16.mxu0 0
  %780 = vmatpush1.bf16.msra.mxu0 0
  %781 = vmatprep.subr.bf16.mxu0 0
  %782 = vmatpush1.bf16.msra.mxu0 0
  %783 = vmatprep.subr.bf16.mxu0 0
  %784 = vmatpush1.bf16.msra.mxu0 0
  %785 = vmatprep.subr.bf16.mxu0 0
  %786 = vmatpush1.bf16.msra.mxu0 0
  %787 = vmatprep.subr.bf16.mxu0 0
  %788 = vmatpush1.bf16.msra.mxu0 0
  %789 = vmatprep.subr.bf16.mxu0 0
  %790 = vmatpush1.bf16.msra.mxu0 0
  %791 = vmatprep.subr.bf16.mxu0 0
  %792 = vmatpush1.bf16.msra.mxu0 0
  %793 = vmatprep.subr.bf16.mxu0 0
  %794 = vmatpush1.bf16.msra.mxu0 0
  %795 = vmatprep.subr.bf16.mxu0 0
  %796 = vmatpush1.bf16.msra.mxu0 0
  %797 = vmatprep.subr.bf16.mxu0 0
  %798 = vmatpush1.bf16.msra.mxu0 0
  %799 = vmatprep.mubr.bf16.mxu0 0
  %800 = vmatmul.mubr.bf16.gmra.mrb[0].mxu0 %v758
  %v801 = vpop.f32.mrb[0].mxu0
  %v802 = vadd.f32 0.0, %v801
  %v803 = vpop.f32.mrb[0].mxu0
  %v804 = vpop.f32.mrb[0].mxu0
  %v805 = vadd.f32 0.0, %v804
  %v806 = vpop.f32.mrb[0].mxu0
  %807 = vmatprep.mubr.bf16.mxu0 0
  %808 = vmatmul.mubr.bf16.gmra.mrb[0].mxu0 %v761
  %v809 = vpop.f32.mrb[0].mxu0
  %v810 = vadd.f32 0.0, %v809
  %v811 = vpop.f32.mrb[0].mxu0
  %v812 = vpop.f32.mrb[0].mxu0
  %v813 = vadd.f32 0.0, %v812
  %v814 = vpop.f32.mrb[0].mxu0
  %815 = vdwg.mxu0
  %v817 = vsel %vm620, %v732, 0
  %v820 = vsel %vm620, %v733, 0
  %822 = vmatprep.subr.bf16.mxu0 0
  %823 = vmatpush1.bf16.msra.mxu0 %v753
  %824 = vmatprep.subr.bf16.mxu0 0
  %825 = vmatpush1.bf16.msra.mxu0 %v765
  %826 = vmatprep.subr.bf16.mxu0 0
  %827 = vmatpush1.bf16.msra.mxu0 0
  %828 = vmatprep.subr.bf16.mxu0 0
  %829 = vmatpush1.bf16.msra.mxu0 0
  %830 = vmatprep.subr.bf16.mxu0 0
  %831 = vmatpush1.bf16.msra.mxu0 0
  %832 = vmatprep.subr.bf16.mxu0 0
  %833 = vmatpush1.bf16.msra.mxu0 0
  %834 = vmatprep.subr.bf16.mxu0 0
  %835 = vmatpush1.bf16.msra.mxu0 0
  %836 = vmatprep.subr.bf16.mxu0 0
  %837 = vmatpush1.bf16.msra.mxu0 0
  %838 = vmatprep.subr.bf16.mxu0 0
  %839 = vmatpush1.bf16.msra.mxu0 0
  %840 = vmatprep.subr.bf16.mxu0 0
  %841 = vmatpush1.bf16.msra.mxu0 0
  %842 = vmatprep.subr.bf16.mxu0 0
  %843 = vmatpush1.bf16.msra.mxu0 0
  %844 = vmatprep.subr.bf16.mxu0 0
  %845 = vmatpush1.bf16.msra.mxu0 0
  %846 = vmatprep.subr.bf16.mxu0 0
  %847 = vmatpush1.bf16.msra.mxu0 0
  %848 = vmatprep.subr.bf16.mxu0 0
  %849 = vmatpush1.bf16.msra.mxu0 0
  %850 = vmatprep.subr.bf16.mxu0 0
  %851 = vmatpush1.bf16.msra.mxu0 0
  %852 = vmatprep.subr.bf16.mxu0 0
  %853 = vmatpush1.bf16.msra.mxu0 0
  %854 = vmatprep.mubr.bf16.mxu0 0
  %855 = vmatmul.mubr.bf16.gmra.mrb[0].mxu0 %v817
  %v856 = vpop.f32.mrb[0].mxu0
  %v857 = vadd.f32 %v802, %v856
  %v858 = vpop.f32.mrb[0].mxu0
  %v859 = vpop.f32.mrb[0].mxu0
  %v860 = vadd.f32 %v805, %v859
  %v861 = vpop.f32.mrb[0].mxu0
  %862 = vmatprep.mubr.bf16.mxu0 0
  %863 = vmatmul.mubr.bf16.gmra.mrb[0].mxu0 %v820
  %v864 = vpop.f32.mrb[0].mxu0
  %v865 = vadd.f32 %v810, %v864
  %v866 = vpop.f32.mrb[0].mxu0
  %v867 = vpop.f32.mrb[0].mxu0
  %v868 = vadd.f32 %v813, %v867
  %v869 = vpop.f32.mrb[0].mxu0
  %870 = vdwg.mxu0
  %875 = vrot.lane.b32.xlu0 %v857, 120
  %v876 = vpop.permute.xlu0 %875
  %877 = vrot.lane.b32.xlu0 %v860, 120
  %v878 = vpop.permute.xlu0 %877
  %879 = vrot.lane.b32.xlu0 %v865, 120
  %v880 = vpop.permute.xlu0 %879
  %881 = vrot.lane.b32.xlu0 %v868, 120
  %v882 = vpop.permute.xlu0 %881
  %v887 = vmax.f32 %v857, %v876
  %v888 = vmax.f32 %v860, %v878
  %v889 = vmax.f32 %v865, %v880
  %v890 = vmax.f32 %v868, %v882
  %891 = vrot.lane.b32.xlu0 %v857, 112
  %v892 = vpop.permute.xlu0 %891
  %893 = vrot.lane.b32.xlu0 %v860, 112
  %v894 = vpop.permute.xlu0 %893
  %895 = vrot.lane.b32.xlu0 %v865, 112
  %v896 = vpop.permute.xlu0 %895
  %897 = vrot.lane.b32.xlu0 %v868, 112
  %v898 = vpop.permute.xlu0 %897
  %v903 = vmax.f32 %v887, %v892
  %v904 = vmax.f32 %v888, %v894
  %v905 = vmax.f32 %v889, %v896
  %v906 = vmax.f32 %v890, %v898
  %vm907 = vcmask 64512
  %v908 = vsel %vm907, %v903, 0.0
  %909 = vadd.xlane.f32.xlu0 %v908
  %v910 = vpop.xlane.xlu0 %909
  %v911 = vsel %vm907, %v904, 0.0
  %912 = vadd.xlane.f32.xlu0 %v911
  %v913 = vpop.xlane.xlu0 %912
  %v914 = vsel %vm907, %v905, 0.0
  %915 = vadd.xlane.f32.xlu0 %v914
  %v916 = vpop.xlane.xlu0 %915
  %v917 = vsel %vm907, %v906, 0.0
  %918 = vadd.xlane.f32.xlu0 %v917
  %v919 = vpop.xlane.xlu0 %918
  %v920 = vmul.f32 %v910, 0.125
  %v921 = vmul.f32 %v913, 0.125
  %v922 = vmul.f32 %v916, 0.125
  %v923 = vmul.f32 %v919, 0.125
  %v924 = vmul.f32 %v903, %v903
  %v925 = vmul.f32 %v904, %v904
  %v926 = vmul.f32 %v905, %v905
  %v927 = vmul.f32 %v906, %v906
  %v928 = vsel %vm907, %v924, 0.0
  %929 = vadd.xlane.f32.xlu0 %v928
  %v930 = vpop.xlane.xlu0 %929
  %v931 = vsel %vm907, %v925, 0.0
  %932 = vadd.xlane.f32.xlu0 %v931
  %v933 = vpop.xlane.xlu0 %932
  %v934 = vsel %vm907, %v926, 0.0
  %935 = vadd.xlane.f32.xlu0 %v934
  %v936 = vpop.xlane.xlu0 %935
  %v937 = vsel %vm907, %v927, 0.0
  %938 = vadd.xlane.f32.xlu0 %v937
  %v939 = vpop.xlane.xlu0 %938
  %v940 = vmul.f32 %v930, 0.125
  %v941 = vmul.f32 %v933, 0.125
  %v942 = vmul.f32 %v936, 0.125
  %v943 = vmul.f32 %v939, 0.125
  %v944 = vmul.f32 %v920, %v920
  %v945 = vmul.f32 %v921, %v921
  %v946 = vmul.f32 %v922, %v922
  %v947 = vmul.f32 %v923, %v923
  %v948 = vsub.f32 %v940, %v944
  %v949 = vsub.f32 %v941, %v945
  %v950 = vsub.f32 %v942, %v946
  %v951 = vsub.f32 %v943, %v947
  %v952 = vsub.f32 %v903, %v920
  %v953 = vsub.f32 %v904, %v921
  %v954 = vsub.f32 %v905, %v922
  %v955 = vsub.f32 %v906, %v923
  %v956 = vadd.f32 %v948, 1e-05
  %v957 = vadd.f32 %v949, 1e-05
  %v958 = vadd.f32 %v950, 1e-05
  %v959 = vadd.f32 %v951, 1e-05
  %v960 = vrsqrt.pop %v956
  %v961 = vrsqrt.pop %v957
  %v962 = vrsqrt.pop %v958
  %v963 = vrsqrt.pop %v959
  %v964 = vmul.f32 %v255, %v960
  %v965 = vmul.f32 %v256, %v961
  %v966 = vmul.f32 %v257, %v962
  %v967 = vmul.f32 %v258, %v963
  %969 = vset.pattern.permute.xlu0 4
  %970 = vperm.xlu0 %969, %v964
  %v971 = vpop.permute.xlu0 %970
  %974 = vset.pattern.permute.xlu0 4
  %975 = vperm.xlu0 %974, %v965
  %v976 = vpop.permute.xlu0 %975
  %979 = vset.pattern.permute.xlu0 4
  %980 = vperm.xlu0 %979, %v966
  %v981 = vpop.permute.xlu0 %980
  %984 = vset.pattern.permute.xlu0 4
  %985 = vperm.xlu0 %984, %v967
  %v986 = vpop.permute.xlu0 %985
  %v988 = vmul.f32 %v952, %v971
  %v989 = vmul.f32 %v953, %v976
  %v990 = vmul.f32 %v954, %v981
  %v991 = vmul.f32 %v955, %v986
  %992 = vset.pattern.permute.xlu0 5
  %993 = vperm.xlu0 %992, %v255
  %v994 = vpop.permute.xlu0 %993
  %996 = vset.pattern.permute.xlu0 5
  %997 = vperm.xlu0 %996, %v256
  %v998 = vpop.permute.xlu0 %997
  %1000 = vset.pattern.permute.xlu0 5
  %1001 = vperm.xlu0 %1000, %v257
  %v1002 = vpop.permute.xlu0 %1001
  %1004 = vset.pattern.permute.xlu0 5
  %1005 = vperm.xlu0 %1004, %v258
  %v1006 = vpop.permute.xlu0 %1005
  %v1008 = vadd.f32 %v988, %v994
  %v1009 = vadd.f32 %v989, %v998
  %v1010 = vadd.f32 %v990, %v1002
  %v1011 = vadd.f32 %v991, %v1006
  %v1012 = vmax.f32 %v1008, 0.0
  %v1013 = vmax.f32 %v1009, 0.0
  %v1014 = vmax.f32 %v1010, 0.0
  %v1015 = vmax.f32 %v1011, 0.0
  %v1016 = vld [vmem:[%s1 + $0x8] sm:$0xf]
  %v1017 = vpack.c.bf16 %v1013, %v1012
  %v1018 = vpack.c.bf16 %v1015, %v1014
  %v1020 = vunpack.c.l.b16 %v1016
  %v1021 = vpack.c.b16 %v1020, %v1020
  %1022 = vrot.lane.b32.xlu0 %v1021, 50
  %v1023 = vpop.permute.xlu0 %1022
  %v1025 = vsel %vm907, %v1017, 0
  %v1028 = vsel %vm907, %v1018, 0
  %v1031 = vsel %vm176, %v1023, 0
  %1033 = vmatprep.subr.bf16.mxu0 0
  %1034 = vmatpush1.bf16.msra.mxu0 %v1031
  %1035 = vmatprep.subr.bf16.mxu0 0
  %1036 = vmatpush1.bf16.msra.mxu0 0
  %1037 = vmatprep.subr.bf16.mxu0 0
  %1038 = vmatpush1.bf16.msra.mxu0 0
  %1039 = vmatprep.subr.bf16.mxu0 0
  %1040 = vmatpush1.bf16.msra.mxu0 0
  %1041 = vmatprep.subr.bf16.mxu0 0
  %1042 = vmatpush1.bf16.msra.mxu0 0
  %1043 = vmatprep.subr.bf16.mxu0 0
  %1044 = vmatpush1.bf16.msra.mxu0 0
  %1045 = vmatprep.subr.bf16.mxu0 0
  %1046 = vmatpush1.bf16.msra.mxu0 0
  %1047 = vmatprep.subr.bf16.mxu0 0
  %1048 = vmatpush1.bf16.msra.mxu0 0
  %1049 = vmatprep.subr.bf16.mxu0 0
  %1050 = vmatpush1.bf16.msra.mxu0 0
  %1051 = vmatprep.subr.bf16.mxu0 0
  %1052 = vmatpush1.bf16.msra.mxu0 0
  %1053 = vmatprep.subr.bf16.mxu0 0
  %1054 = vmatpush1.bf16.msra.mxu0 0
  %1055 = vmatprep.subr.bf16.mxu0 0
  %1056 = vmatpush1.bf16.msra.mxu0 0
  %1057 = vmatprep.subr.bf16.mxu0 0
  %1058 = vmatpush1.bf16.msra.mxu0 0
  %1059 = vmatprep.subr.bf16.mxu0 0
  %1060 = vmatpush1.bf16.msra.mxu0 0
  %1061 = vmatprep.subr.bf16.mxu0 0
  %1062 = vmatpush1.bf16.msra.mxu0 0
  %1063 = vmatprep.subr.bf16.mxu0 0
  %1064 = vmatpush1.bf16.msra.mxu0 0
  %1065 = vmatprep.mubr.bf16.mxu0 0
  %1066 = vmatmul.mubr.bf16.gmra.mrb[0].mxu0 %v1025
  %v1067 = vpop.f32.mrb[0].mxu0
  %v1068 = vadd.f32 0.0, %v1067
  %v1069 = vpop.f32.mrb[0].mxu0
  %v1070 = vpop.f32.mrb[0].mxu0
  %v1071 = vadd.f32 0.0, %v1070
  %v1072 = vpop.f32.mrb[0].mxu0
  %1073 = vmatprep.mubr.bf16.mxu0 0
  %1074 = vmatmul.mubr.bf16.gmra.mrb[0].mxu0 %v1028
  %v1075 = vpop.f32.mrb[0].mxu0
  %v1076 = vadd.f32 0.0, %v1075
  %v1077 = vpop.f32.mrb[0].mxu0
  %v1078 = vpop.f32.mrb[0].mxu0
  %v1079 = vadd.f32 0.0, %v1078
  %v1080 = vpop.f32.mrb[0].mxu0
  %1081 = vdwg.mxu0
  %1086 = vrot.lane.b32.xlu0 %v1068, 116
  %v1087 = vpop.permute.xlu0 %1086
  %1088 = vrot.lane.b32.xlu0 %v1071, 116
  %v1089 = vpop.permute.xlu0 %1088
  %1090 = vrot.lane.b32.xlu0 %v1076, 116
  %v1091 = vpop.permute.xlu0 %1090
  %1092 = vrot.lane.b32.xlu0 %v1079, 116
  %v1093 = vpop.permute.xlu0 %1092
  %1098 = vrot.lane.b32.xlu0 %v1068, 104
  %v1099 = vpop.permute.xlu0 %1098
  %1100 = vrot.lane.b32.xlu0 %v1071, 104
  %v1101 = vpop.permute.xlu0 %1100
  %1102 = vrot.lane.b32.xlu0 %v1076, 104
  %v1103 = vpop.permute.xlu0 %1102
  %1104 = vrot.lane.b32.xlu0 %v1079, 104
  %v1105 = vpop.permute.xlu0 %1104
  %v1110 = vpack.c.bf16 %v1071, %v1068
  %v1111 = vpack.c.bf16 %v1079, %v1076
  %v1112 = vpack.c.bf16 %v1089, %v1087
  %v1113 = vpack.c.bf16 %v1093, %v1091
  %v1114 = vpack.c.bf16 %v1101, %v1099
  %v1115 = vpack.c.bf16 %v1105, %v1103
  %v1116 = vld [vmem:[%s4] sm:$0xf]
  %v1117 = vld [vmem:[%s4 + $0x4] sm:$0xf]
  %v1118 = vld [vmem:[%s4 + $0x8] sm:$0xf]
  %v1119 = vld [vmem:[%s4 + $0xc] sm:$0xf]
  %v1120 = vld [vmem:[%s4 + $0x10] sm:$0xf]
  %v1121 = vld [vmem:[%s4 + $0x14] sm:$0xf]
  %v1122 = vld [vmem:[%s4 + $0x18] sm:$0xf]
  %v1123 = vld [vmem:[%s4 + $0x1c] sm:$0xf]
  %v1132 = vunpack.c.l.b16 %v1116
  %v1133 = vunpack.c.l.b16 %v1117
  %v1134 = vunpack.c.l.b16 %v1118
  %v1135 = vunpack.c.l.b16 %v1119
  %v1136 = vunpack.c.l.b16 %v1120
  %v1137 = vunpack.c.l.b16 %v1121
  %v1138 = vunpack.c.l.b16 %v1122
  %v1139 = vunpack.c.l.b16 %v1123
  %v1140 = vpack.c.b16 %v1133, %v1132
  %v1141 = vpack.c.b16 %v1135, %v1134
  %v1142 = vpack.c.b16 %v1137, %v1136
  %v1143 = vpack.c.b16 %v1139, %v1138
  %v1145 = vsel %vm107, %v1140, 0
  %v1148 = vsel %vm107, %v1141, 0
  %v1151 = vsel %vm107, %v1142, 0
  %v1154 = vsel %vm107, %v1143, 0
  %1156 = vmatprep.subr.bf16.mxu0 0
  %1157 = vmatpush1.bf16.msra.mxu0 %v1110
  %1158 = vmatprep.subr.bf16.mxu0 0
  %1159 = vmatpush1.bf16.msra.mxu0 %v1111
  %1160 = vmatprep.subr.bf16.mxu0 0
  %1161 = vmatpush1.bf16.msra.mxu0 %v1112
  %1162 = vmatprep.subr.bf16.mxu0 0
  %1163 = vmatpush1.bf16.msra.mxu0 %v1113
  %1164 = vmatprep.subr.bf16.mxu0 0
  %1165 = vmatpush1.bf16.msra.mxu0 %v1114
  %1166 = vmatprep.subr.bf16.mxu0 0
  %1167 = vmatpush1.bf16.msra.mxu0 %v1115
  %1168 = vmatprep.subr.bf16.mxu0 0
  %1169 = vmatpush1.bf16.msra.mxu0 0
  %1170 = vmatprep.subr.bf16.mxu0 0
  %1171 = vmatpush1.bf16.msra.mxu0 0
  %1172 = vmatprep.subr.bf16.mxu0 0
  %1173 = vmatpush1.bf16.msra.mxu0 0
  %1174 = vmatprep.subr.bf16.mxu0 0
  %1175 = vmatpush1.bf16.msra.mxu0 0
  %1176 = vmatprep.subr.bf16.mxu0 0
  %1177 = vmatpush1.bf16.msra.mxu0 0
  %1178 = vmatprep.subr.bf16.mxu0 0
  %1179 = vmatpush1.bf16.msra.mxu0 0
  %1180 = vmatprep.subr.bf16.mxu0 0
  %1181 = vmatpush1.bf16.msra.mxu0 0
  %1182 = vmatprep.subr.bf16.mxu0 0
  %1183 = vmatpush1.bf16.msra.mxu0 0
  %1184 = vmatprep.subr.bf16.mxu0 0
  %1185 = vmatpush1.bf16.msra.mxu0 0
  %1186 = vmatprep.subr.bf16.mxu0 0
  %1187 = vmatpush1.bf16.msra.mxu0 0
  %1188 = vmatprep.mubr.bf16.mxu0 0
  %1189 = vmatmul.mubr.bf16.gmra.mrb[0].mxu0 %v1145
  %v1190 = vpop.f32.mrb[0].mxu0
  %v1191 = vadd.f32 0.0, %v1190
  %v1192 = vpop.f32.mrb[0].mxu0
  %v1193 = vpop.f32.mrb[0].mxu0
  %v1194 = vadd.f32 0.0, %v1193
  %v1195 = vpop.f32.mrb[0].mxu0
  %1196 = vmatprep.mubr.bf16.mxu0 0
  %1197 = vmatmul.mubr.bf16.gmra.mrb[0].mxu0 %v1148
  %v1198 = vpop.f32.mrb[0].mxu0
  %v1199 = vadd.f32 0.0, %v1198
  %v1200 = vpop.f32.mrb[0].mxu0
  %v1201 = vpop.f32.mrb[0].mxu0
  %v1202 = vadd.f32 0.0, %v1201
  %v1203 = vpop.f32.mrb[0].mxu0
  %1204 = vmatprep.mubr.bf16.mxu0 0
  %1205 = vmatmul.mubr.bf16.gmra.mrb[0].mxu0 %v1151
  %v1206 = vpop.f32.mrb[0].mxu0
  %v1207 = vadd.f32 0.0, %v1206
  %v1208 = vpop.f32.mrb[0].mxu0
  %v1209 = vpop.f32.mrb[0].mxu0
  %v1210 = vadd.f32 0.0, %v1209
  %v1211 = vpop.f32.mrb[0].mxu0
  %1212 = vmatprep.mubr.bf16.mxu0 0
  %1213 = vmatmul.mubr.bf16.gmra.mrb[0].mxu0 %v1154
  %v1214 = vpop.f32.mrb[0].mxu0
  %v1215 = vadd.f32 0.0, %v1214
  %v1216 = vpop.f32.mrb[0].mxu0
  %v1217 = vpop.f32.mrb[0].mxu0
  %v1218 = vadd.f32 0.0, %v1217
  %v1219 = vpop.f32.mrb[0].mxu0
  %1220 = vdwg.mxu0
  %v1221 = vld [vmem:[%s7] sm:$0xff]
  %v1222 = vld [vmem:[%s7 + $0x8] sm:$0xff]
  %v1223 = vld [vmem:[%s7 + $0x10] sm:$0xff]
  %v1224 = vld [vmem:[%s7 + $0x18] sm:$0xff]
  %v1225 = vld [vmem:[%s7 + $0x20] sm:$0xff]
  %v1226 = vld [vmem:[%s7 + $0x28] sm:$0xff]
  %v1227 = vld [vmem:[%s7 + $0x30] sm:$0xff]
  %v1228 = vld [vmem:[%s7 + $0x38] sm:$0xff]
  %vm1229 = vcmask 97280
  %v1230 = vsel %vm1229, %v1191, 0.0
  %1231 = vadd.xlane.f32.xlu0 %v1230
  %v1232 = vpop.xlane.xlu0 %1231
  %v1233 = vsel %vm1229, %v1194, 0.0
  %1234 = vadd.xlane.f32.xlu0 %v1233
  %v1235 = vpop.xlane.xlu0 %1234
  %v1236 = vsel %vm1229, %v1199, 0.0
  %1237 = vadd.xlane.f32.xlu0 %v1236
  %v1238 = vpop.xlane.xlu0 %1237
  %v1239 = vsel %vm1229, %v1202, 0.0
  %1240 = vadd.xlane.f32.xlu0 %v1239
  %v1241 = vpop.xlane.xlu0 %1240
  %v1242 = vsel %vm1229, %v1207, 0.0
  %1243 = vadd.xlane.f32.xlu0 %v1242
  %v1244 = vpop.xlane.xlu0 %1243
  %v1245 = vsel %vm1229, %v1210, 0.0
  %1246 = vadd.xlane.f32.xlu0 %v1245
  %v1247 = vpop.xlane.xlu0 %1246
  %v1248 = vsel %vm1229, %v1215, 0.0
  %1249 = vadd.xlane.f32.xlu0 %v1248
  %v1250 = vpop.xlane.xlu0 %1249
  %v1251 = vsel %vm1229, %v1218, 0.0
  %1252 = vadd.xlane.f32.xlu0 %v1251
  %v1253 = vpop.xlane.xlu0 %1252
  %v1254 = vmul.f32 %v1232, 0.083333336
  %v1255 = vmul.f32 %v1235, 0.083333336
  %v1256 = vmul.f32 %v1238, 0.083333336
  %v1257 = vmul.f32 %v1241, 0.083333336
  %v1258 = vmul.f32 %v1244, 0.083333336
  %v1259 = vmul.f32 %v1247, 0.083333336
  %v1260 = vmul.f32 %v1250, 0.083333336
  %v1261 = vmul.f32 %v1253, 0.083333336
  %v1262 = vmul.f32 %v1191, %v1191
  %v1263 = vmul.f32 %v1194, %v1194
  %v1264 = vmul.f32 %v1199, %v1199
  %v1265 = vmul.f32 %v1202, %v1202
  %v1266 = vmul.f32 %v1207, %v1207
  %v1267 = vmul.f32 %v1210, %v1210
  %v1268 = vmul.f32 %v1215, %v1215
  %v1269 = vmul.f32 %v1218, %v1218
  %v1270 = vsel %vm1229, %v1262, 0.0
  %1271 = vadd.xlane.f32.xlu0 %v1270
  %v1272 = vpop.xlane.xlu0 %1271
  %v1273 = vsel %vm1229, %v1263, 0.0
  %1274 = vadd.xlane.f32.xlu0 %v1273
  %v1275 = vpop.xlane.xlu0 %1274
  %v1276 = vsel %vm1229, %v1264, 0.0
  %1277 = vadd.xlane.f32.xlu0 %v1276
  %v1278 = vpop.xlane.xlu0 %1277
  %v1279 = vsel %vm1229, %v1265, 0.0
  %1280 = vadd.xlane.f32.xlu0 %v1279
  %v1281 = vpop.xlane.xlu0 %1280
  %v1282 = vsel %vm1229, %v1266, 0.0
  %1283 = vadd.xlane.f32.xlu0 %v1282
  %v1284 = vpop.xlane.xlu0 %1283
  %v1285 = vsel %vm1229, %v1267, 0.0
  %1286 = vadd.xlane.f32.xlu0 %v1285
  %v1287 = vpop.xlane.xlu0 %1286
  %v1288 = vsel %vm1229, %v1268, 0.0
  %1289 = vadd.xlane.f32.xlu0 %v1288
  %v1290 = vpop.xlane.xlu0 %1289
  %v1291 = vsel %vm1229, %v1269, 0.0
  %1292 = vadd.xlane.f32.xlu0 %v1291
  %v1293 = vpop.xlane.xlu0 %1292
  %v1294 = vmul.f32 %v1272, 0.083333336
  %v1295 = vmul.f32 %v1275, 0.083333336
  %v1296 = vmul.f32 %v1278, 0.083333336
  %v1297 = vmul.f32 %v1281, 0.083333336
  %v1298 = vmul.f32 %v1284, 0.083333336
  %v1299 = vmul.f32 %v1287, 0.083333336
  %v1300 = vmul.f32 %v1290, 0.083333336
  %v1301 = vmul.f32 %v1293, 0.083333336
  %v1302 = vmul.f32 %v1254, %v1254
  %v1303 = vmul.f32 %v1255, %v1255
  %v1304 = vmul.f32 %v1256, %v1256
  %v1305 = vmul.f32 %v1257, %v1257
  %v1306 = vmul.f32 %v1258, %v1258
  %v1307 = vmul.f32 %v1259, %v1259
  %v1308 = vmul.f32 %v1260, %v1260
  %v1309 = vmul.f32 %v1261, %v1261
  %v1310 = vsub.f32 %v1294, %v1302
  %v1311 = vsub.f32 %v1295, %v1303
  %v1312 = vsub.f32 %v1296, %v1304
  %v1313 = vsub.f32 %v1297, %v1305
  %v1314 = vsub.f32 %v1298, %v1306
  %v1315 = vsub.f32 %v1299, %v1307
  %v1316 = vsub.f32 %v1300, %v1308
  %v1317 = vsub.f32 %v1301, %v1309
  %v1318 = vsub.f32 %v1191, %v1254
  %v1319 = vsub.f32 %v1194, %v1255
  %v1320 = vsub.f32 %v1199, %v1256
  %v1321 = vsub.f32 %v1202, %v1257
  %v1322 = vsub.f32 %v1207, %v1258
  %v1323 = vsub.f32 %v1210, %v1259
  %v1324 = vsub.f32 %v1215, %v1260
  %v1325 = vsub.f32 %v1218, %v1261
  %v1326 = vadd.f32 %v1310, 1e-05
  %v1327 = vadd.f32 %v1311, 1e-05
  %v1328 = vadd.f32 %v1312, 1e-05
  %v1329 = vadd.f32 %v1313, 1e-05
  %v1330 = vadd.f32 %v1314, 1e-05
  %v1331 = vadd.f32 %v1315, 1e-05
  %v1332 = vadd.f32 %v1316, 1e-05
  %v1333 = vadd.f32 %v1317, 1e-05
  %v1334 = vrsqrt.pop %v1326
  %v1335 = vrsqrt.pop %v1327
  %v1336 = vrsqrt.pop %v1328
  %v1337 = vrsqrt.pop %v1329
  %v1338 = vrsqrt.pop %v1330
  %v1339 = vrsqrt.pop %v1331
  %v1340 = vrsqrt.pop %v1332
  %v1341 = vrsqrt.pop %v1333
  %v1342 = vmul.f32 %v1221, %v1334
  %v1343 = vmul.f32 %v1222, %v1335
  %v1344 = vmul.f32 %v1223, %v1336
  %v1345 = vmul.f32 %v1224, %v1337
  %v1346 = vmul.f32 %v1225, %v1338
  %v1347 = vmul.f32 %v1226, %v1339
  %v1348 = vmul.f32 %v1227, %v1340
  %v1349 = vmul.f32 %v1228, %v1341
  %1351 = vset.pattern.permute.xlu0 6
  %1352 = vperm.xlu0 %1351, %v1342
  %v1353 = vpop.permute.xlu0 %1352
  %1356 = vset.pattern.permute.xlu0 6
  %1357 = vperm.xlu0 %1356, %v1343
  %v1358 = vpop.permute.xlu0 %1357
  %1361 = vset.pattern.permute.xlu0 6
  %1362 = vperm.xlu0 %1361, %v1344
  %v1363 = vpop.permute.xlu0 %1362
  %1366 = vset.pattern.permute.xlu0 6
  %1367 = vperm.xlu0 %1366, %v1345
  %v1368 = vpop.permute.xlu0 %1367
  %1371 = vset.pattern.permute.xlu0 6
  %1372 = vperm.xlu0 %1371, %v1346
  %v1373 = vpop.permute.xlu0 %1372
  %1376 = vset.pattern.permute.xlu0 6
  %1377 = vperm.xlu0 %1376, %v1347
  %v1378 = vpop.permute.xlu0 %1377
  %1381 = vset.pattern.permute.xlu0 6
  %1382 = vperm.xlu0 %1381, %v1348
  %v1383 = vpop.permute.xlu0 %1382
  %1386 = vset.pattern.permute.xlu0 6
  %1387 = vperm.xlu0 %1386, %v1349
  %v1388 = vpop.permute.xlu0 %1387
  %v1390 = vmul.f32 %v1318, %v1353
  %v1391 = vmul.f32 %v1319, %v1358
  %v1392 = vmul.f32 %v1320, %v1363
  %v1393 = vmul.f32 %v1321, %v1368
  %v1394 = vmul.f32 %v1322, %v1373
  %v1395 = vmul.f32 %v1323, %v1378
  %v1396 = vmul.f32 %v1324, %v1383
  %v1397 = vmul.f32 %v1325, %v1388
  %1399 = vset.pattern.permute.xlu0 7
  %1400 = vperm.xlu0 %1399, %v1221
  %v1401 = vpop.permute.xlu0 %1400
  %1404 = vset.pattern.permute.xlu0 7
  %1405 = vperm.xlu0 %1404, %v1222
  %v1406 = vpop.permute.xlu0 %1405
  %1409 = vset.pattern.permute.xlu0 7
  %1410 = vperm.xlu0 %1409, %v1223
  %v1411 = vpop.permute.xlu0 %1410
  %1414 = vset.pattern.permute.xlu0 7
  %1415 = vperm.xlu0 %1414, %v1224
  %v1416 = vpop.permute.xlu0 %1415
  %1419 = vset.pattern.permute.xlu0 7
  %1420 = vperm.xlu0 %1419, %v1225
  %v1421 = vpop.permute.xlu0 %1420
  %1424 = vset.pattern.permute.xlu0 7
  %1425 = vperm.xlu0 %1424, %v1226
  %v1426 = vpop.permute.xlu0 %1425
  %1429 = vset.pattern.permute.xlu0 7
  %1430 = vperm.xlu0 %1429, %v1227
  %v1431 = vpop.permute.xlu0 %1430
  %1434 = vset.pattern.permute.xlu0 7
  %1435 = vperm.xlu0 %1434, %v1228
  %v1436 = vpop.permute.xlu0 %1435
  %v1438 = vadd.f32 %v1390, %v1401
  %v1439 = vadd.f32 %v1391, %v1406
  %v1440 = vadd.f32 %v1392, %v1411
  %v1441 = vadd.f32 %v1393, %v1416
  %v1442 = vadd.f32 %v1394, %v1421
  %v1443 = vadd.f32 %v1395, %v1426
  %v1444 = vadd.f32 %v1396, %v1431
  %v1445 = vadd.f32 %v1397, %v1436
  %v1446 = vmax.f32 %v1438, 0.0
  %v1447 = vmax.f32 %v1439, 0.0
  %v1448 = vmax.f32 %v1440, 0.0
  %v1449 = vmax.f32 %v1441, 0.0
  %v1450 = vmax.f32 %v1442, 0.0
  %v1451 = vmax.f32 %v1443, 0.0
  %v1452 = vmax.f32 %v1444, 0.0
  %v1453 = vmax.f32 %v1445, 0.0
  %v1454 = vld [vmem:[%s1 + $0x8] sm:$0xf]
  %v1455 = vld [vmem:[%s1 + $0x14] sm:$0x3]
  %v1456 = vpack.c.bf16 %v1447, %v1446
  %v1457 = vpack.c.bf16 %v1449, %v1448
  %v1458 = vpack.c.bf16 %v1451, %v1450
  %v1459 = vpack.c.bf16 %v1453, %v1452
  %v1460 = vunpack.c.l.bf16 %v1456
  %v1461 = vunpack.c.h.bf16 %v1456
  %v1462 = vunpack.c.l.bf16 %v1457
  %v1463 = vunpack.c.h.bf16 %v1457
  %v1464 = vunpack.c.l.bf16 %v1458
  %v1465 = vunpack.c.h.bf16 %v1458
  %v1466 = vunpack.c.l.bf16 %v1459
  %v1467 = vunpack.c.h.bf16 %v1459
  %v1468 = vsub.f32 %v1446, %v1460
  %v1469 = vsub.f32 %v1447, %v1461
  %v1470 = vsub.f32 %v1448, %v1462
  %v1471 = vsub.f32 %v1449, %v1463
  %v1472 = vsub.f32 %v1450, %v1464
  %v1473 = vsub.f32 %v1451, %v1465
  %v1474 = vsub.f32 %v1452, %v1466
  %v1475 = vsub.f32 %v1453, %v1467
  %v1476 = vpack.c.bf16 %v1469, %v1468
  %v1477 = vpack.c.bf16 %v1471, %v1470
  %v1478 = vpack.c.bf16 %v1473, %v1472
  %v1479 = vpack.c.bf16 %v1475, %v1474
  %v1482 = vunpack.c.l.b16 %v1454
  %v1483 = vunpack.c.l.b16 %v1455
  %v1484 = vpack.c.b16 %v1483, %v1482
  %1485 = vrot.lane.b32.xlu0 %v1484, 14
  %v1486 = vpop.permute.xlu0 %1485
  %v1488 = vsel %vm1229, %v1476, 0
  %v1491 = vsel %vm1229, %v1477, 0
  %v1494 = vsel %vm1229, %v1478, 0
  %v1497 = vsel %vm1229, %v1479, 0
  %v1500 = vsel %vm178, %v1486, 0
  %1502 = vmatprep.subr.bf16.mxu0 0
  %1503 = vmatpush1.bf16.msra.mxu0 %v1500
  %1504 = vmatprep.subr.bf16.mxu0 0
  %1505 = vmatpush1.bf16.msra.mxu0 0
  %1506 = vmatprep.subr.bf16.mxu0 0
  %1507 = vmatpush1.bf16.msra.mxu0 0
  %1508 = vmatprep.subr.bf16.mxu0 0
  %1509 = vmatpush1.bf16.msra.mxu0 0
  %1510 = vmatprep.subr.bf16.mxu0 0
  %1511 = vmatpush1.bf16.msra.mxu0 0
  %1512 = vmatprep.subr.bf16.mxu0 0
  %1513 = vmatpush1.bf16.msra.mxu0 0
  %1514 = vmatprep.subr.bf16.mxu0 0
  %1515 = vmatpush1.bf16.msra.mxu0 0
  %1516 = vmatprep.subr.bf16.mxu0 0
  %1517 = vmatpush1.bf16.msra.mxu0 0
  %1518 = vmatprep.subr.bf16.mxu0 0
  %1519 = vmatpush1.bf16.msra.mxu0 0
  %1520 = vmatprep.subr.bf16.mxu0 0
  %1521 = vmatpush1.bf16.msra.mxu0 0
  %1522 = vmatprep.subr.bf16.mxu0 0
  %1523 = vmatpush1.bf16.msra.mxu0 0
  %1524 = vmatprep.subr.bf16.mxu0 0
  %1525 = vmatpush1.bf16.msra.mxu0 0
  %1526 = vmatprep.subr.bf16.mxu0 0
  %1527 = vmatpush1.bf16.msra.mxu0 0
  %1528 = vmatprep.subr.bf16.mxu0 0
  %1529 = vmatpush1.bf16.msra.mxu0 0
  %1530 = vmatprep.subr.bf16.mxu0 0
  %1531 = vmatpush1.bf16.msra.mxu0 0
  %1532 = vmatprep.subr.bf16.mxu0 0
  %1533 = vmatpush1.bf16.msra.mxu0 0
  %1534 = vmatprep.mubr.bf16.mxu0 0
  %1535 = vmatmul.mubr.bf16.gmra.mrb[0].mxu0 %v1488
  %v1536 = vpop.f32.mrb[0].mxu0
  %v1537 = vadd.f32 0.0, %v1536
  %v1538 = vpop.f32.mrb[0].mxu0
  %v1539 = vpop.f32.mrb[0].mxu0
  %v1540 = vadd.f32 0.0, %v1539
  %v1541 = vpop.f32.mrb[0].mxu0
  %1542 = vmatprep.mubr.bf16.mxu0 0
  %1543 = vmatmul.mubr.bf16.gmra.mrb[0].mxu0 %v1491
  %v1544 = vpop.f32.mrb[0].mxu0
  %v1545 = vadd.f32 0.0, %v1544
  %v1546 = vpop.f32.mrb[0].mxu0
  %v1547 = vpop.f32.mrb[0].mxu0
  %v1548 = vadd.f32 0.0, %v1547
  %v1549 = vpop.f32.mrb[0].mxu0
  %1550 = vmatprep.mubr.bf16.mxu0 0
  %1551 = vmatmul.mubr.bf16.gmra.mrb[0].mxu0 %v1494
  %v1552 = vpop.f32.mrb[0].mxu0
  %v1553 = vadd.f32 0.0, %v1552
  %v1554 = vpop.f32.mrb[0].mxu0
  %v1555 = vpop.f32.mrb[0].mxu0
  %v1556 = vadd.f32 0.0, %v1555
  %v1557 = vpop.f32.mrb[0].mxu0
  %1558 = vmatprep.mubr.bf16.mxu0 0
  %1559 = vmatmul.mubr.bf16.gmra.mrb[0].mxu0 %v1497
  %v1560 = vpop.f32.mrb[0].mxu0
  %v1561 = vadd.f32 0.0, %v1560
  %v1562 = vpop.f32.mrb[0].mxu0
  %v1563 = vpop.f32.mrb[0].mxu0
  %v1564 = vadd.f32 0.0, %v1563
  %v1565 = vpop.f32.mrb[0].mxu0
  %1566 = vdwg.mxu0
  %v1568 = vsel %vm1229, %v1456, 0
  %v1571 = vsel %vm1229, %v1457, 0
  %v1574 = vsel %vm1229, %v1458, 0
  %v1577 = vsel %vm1229, %v1459, 0
  %1579 = vmatprep.subr.bf16.mxu0 0
  %1580 = vmatpush1.bf16.msra.mxu0 %v1500
  %1581 = vmatprep.subr.bf16.mxu0 0
  %1582 = vmatpush1.bf16.msra.mxu0 0
  %1583 = vmatprep.subr.bf16.mxu0 0
  %1584 = vmatpush1.bf16.msra.mxu0 0
  %1585 = vmatprep.subr.bf16.mxu0 0
  %1586 = vmatpush1.bf16.msra.mxu0 0
  %1587 = vmatprep.subr.bf16.mxu0 0
  %1588 = vmatpush1.bf16.msra.mxu0 0
  %1589 = vmatprep.subr.bf16.mxu0 0
  %1590 = vmatpush1.bf16.msra.mxu0 0
  %1591 = vmatprep.subr.bf16.mxu0 0
  %1592 = vmatpush1.bf16.msra.mxu0 0
  %1593 = vmatprep.subr.bf16.mxu0 0
  %1594 = vmatpush1.bf16.msra.mxu0 0
  %1595 = vmatprep.subr.bf16.mxu0 0
  %1596 = vmatpush1.bf16.msra.mxu0 0
  %1597 = vmatprep.subr.bf16.mxu0 0
  %1598 = vmatpush1.bf16.msra.mxu0 0
  %1599 = vmatprep.subr.bf16.mxu0 0
  %1600 = vmatpush1.bf16.msra.mxu0 0
  %1601 = vmatprep.subr.bf16.mxu0 0
  %1602 = vmatpush1.bf16.msra.mxu0 0
  %1603 = vmatprep.subr.bf16.mxu0 0
  %1604 = vmatpush1.bf16.msra.mxu0 0
  %1605 = vmatprep.subr.bf16.mxu0 0
  %1606 = vmatpush1.bf16.msra.mxu0 0
  %1607 = vmatprep.subr.bf16.mxu0 0
  %1608 = vmatpush1.bf16.msra.mxu0 0
  %1609 = vmatprep.subr.bf16.mxu0 0
  %1610 = vmatpush1.bf16.msra.mxu0 0
  %1611 = vmatprep.mubr.bf16.mxu0 0
  %1612 = vmatmul.mubr.bf16.gmra.mrb[0].mxu0 %v1568
  %v1613 = vpop.f32.mrb[0].mxu0
  %v1614 = vadd.f32 %v1537, %v1613
  %v1615 = vpop.f32.mrb[0].mxu0
  %v1616 = vpop.f32.mrb[0].mxu0
  %v1617 = vadd.f32 %v1540, %v1616
  %v1618 = vpop.f32.mrb[0].mxu0
  %1619 = vmatprep.mubr.bf16.mxu0 0
  %1620 = vmatmul.mubr.bf16.gmra.mrb[0].mxu0 %v1571
  %v1621 = vpop.f32.mrb[0].mxu0
  %v1622 = vadd.f32 %v1545, %v1621
  %v1623 = vpop.f32.mrb[0].mxu0
  %v1624 = vpop.f32.mrb[0].mxu0
  %v1625 = vadd.f32 %v1548, %v1624
  %v1626 = vpop.f32.mrb[0].mxu0
  %1627 = vmatprep.mubr.bf16.mxu0 0
  %1628 = vmatmul.mubr.bf16.gmra.mrb[0].mxu0 %v1574
  %v1629 = vpop.f32.mrb[0].mxu0
  %v1630 = vadd.f32 %v1553, %v1629
  %v1631 = vpop.f32.mrb[0].mxu0
  %v1632 = vpop.f32.mrb[0].mxu0
  %v1633 = vadd.f32 %v1556, %v1632
  %v1634 = vpop.f32.mrb[0].mxu0
  %1635 = vmatprep.mubr.bf16.mxu0 0
  %1636 = vmatmul.mubr.bf16.gmra.mrb[0].mxu0 %v1577
  %v1637 = vpop.f32.mrb[0].mxu0
  %v1638 = vadd.f32 %v1561, %v1637
  %v1639 = vpop.f32.mrb[0].mxu0
  %v1640 = vpop.f32.mrb[0].mxu0
  %v1641 = vadd.f32 %v1564, %v1640
  %v1642 = vpop.f32.mrb[0].mxu0
  %1643 = vdwg.mxu0
  %1652 = vrot.lane.b32.xlu0 %v1614, 124
  %v1653 = vpop.permute.xlu0 %1652
  %1654 = vrot.lane.b32.xlu0 %v1617, 124
  %v1655 = vpop.permute.xlu0 %1654
  %1656 = vrot.lane.b32.xlu0 %v1622, 124
  %v1657 = vpop.permute.xlu0 %1656
  %1658 = vrot.lane.b32.xlu0 %v1625, 124
  %v1659 = vpop.permute.xlu0 %1658
  %1660 = vrot.lane.b32.xlu0 %v1630, 124
  %v1661 = vpop.permute.xlu0 %1660
  %1662 = vrot.lane.b32.xlu0 %v1633, 124
  %v1663 = vpop.permute.xlu0 %1662
  %1664 = vrot.lane.b32.xlu0 %v1638, 124
  %v1665 = vpop.permute.xlu0 %1664
  %1666 = vrot.lane.b32.xlu0 %v1641, 124
  %v1667 = vpop.permute.xlu0 %1666
  %v1676 = vmax.f32 %v1614, %v1653
  %v1677 = vmax.f32 %v1617, %v1655
  %v1678 = vmax.f32 %v1622, %v1657
  %v1679 = vmax.f32 %v1625, %v1659
  %v1680 = vmax.f32 %v1630, %v1661
  %v1681 = vmax.f32 %v1633, %v1663
  %v1682 = vmax.f32 %v1638, %v1665
  %v1683 = vmax.f32 %v1641, %v1667
  %1684 = vrot.lane.b32.xlu0 %v1614, 120
  %v1685 = vpop.permute.xlu0 %1684
  %1686 = vrot.lane.b32.xlu0 %v1617, 120
  %v1687 = vpop.permute.xlu0 %1686
  %1688 = vrot.lane.b32.xlu0 %v1622, 120
  %v1689 = vpop.permute.xlu0 %1688
  %1690 = vrot.lane.b32.xlu0 %v1625, 120
  %v1691 = vpop.permute.xlu0 %1690
  %1692 = vrot.lane.b32.xlu0 %v1630, 120
  %v1693 = vpop.permute.xlu0 %1692
  %1694 = vrot.lane.b32.xlu0 %v1633, 120
  %v1695 = vpop.permute.xlu0 %1694
  %1696 = vrot.lane.b32.xlu0 %v1638, 120
  %v1697 = vpop.permute.xlu0 %1696
  %1698 = vrot.lane.b32.xlu0 %v1641, 120
  %v1699 = vpop.permute.xlu0 %1698
  %v1708 = vmax.f32 %v1676, %v1685
  %v1709 = vmax.f32 %v1677, %v1687
  %v1710 = vmax.f32 %v1678, %v1689
  %v1711 = vmax.f32 %v1679, %v1691
  %v1712 = vmax.f32 %v1680, %v1693
  %v1713 = vmax.f32 %v1681, %v1695
  %v1714 = vmax.f32 %v1682, %v1697
  %v1715 = vmax.f32 %v1683, %v1699
  %v1716 = vmax.f32 %v1708, 0.0
  %v1717 = vmax.f32 %v1709, 0.0
  %v1718 = vmax.f32 %v1710, 0.0
  %v1719 = vmax.f32 %v1711, 0.0
  %v1720 = vmax.f32 %v1712, 0.0
  %v1721 = vmax.f32 %v1713, 0.0
  %v1722 = vmax.f32 %v1714, 0.0
  %v1723 = vmax.f32 %v1715, 0.0
  %vm1724 = vcmask 31744
  %v1725 = vsel %vm1724, %v1716, 0.0
  %1726 = vadd.xlane.f32.xlu0 %v1725
  %v1727 = vpop.xlane.xlu0 %1726
  %v1728 = vsel %vm1724, %v1717, 0.0
  %1729 = vadd.xlane.f32.xlu0 %v1728
  %v1730 = vpop.xlane.xlu0 %1729
  %v1731 = vsel %vm1724, %v1718, 0.0
  %1732 = vadd.xlane.f32.xlu0 %v1731
  %v1733 = vpop.xlane.xlu0 %1732
  %v1734 = vsel %vm1724, %v1719, 0.0
  %1735 = vadd.xlane.f32.xlu0 %v1734
  %v1736 = vpop.xlane.xlu0 %1735
  %v1737 = vsel %vm1724, %v1720, 0.0
  %1738 = vadd.xlane.f32.xlu0 %v1737
  %v1739 = vpop.xlane.xlu0 %1738
  %v1740 = vsel %vm1724, %v1721, 0.0
  %1741 = vadd.xlane.f32.xlu0 %v1740
  %v1742 = vpop.xlane.xlu0 %1741
  %v1743 = vsel %vm1724, %v1722, 0.0
  %1744 = vadd.xlane.f32.xlu0 %v1743
  %v1745 = vpop.xlane.xlu0 %1744
  %v1746 = vsel %vm1724, %v1723, 0.0
  %1747 = vadd.xlane.f32.xlu0 %v1746
  %v1748 = vpop.xlane.xlu0 %1747
  %v1749 = vmul.f32 %v1727, 0.25
  %v1750 = vmul.f32 %v1730, 0.25
  %v1751 = vmul.f32 %v1733, 0.25
  %v1752 = vmul.f32 %v1736, 0.25
  %v1753 = vmul.f32 %v1739, 0.25
  %v1754 = vmul.f32 %v1742, 0.25
  %v1755 = vmul.f32 %v1745, 0.25
  %v1756 = vmul.f32 %v1748, 0.25
  %v1757 = vmul.f32 %v1716, %v1716
  %v1758 = vmul.f32 %v1717, %v1717
  %v1759 = vmul.f32 %v1718, %v1718
  %v1760 = vmul.f32 %v1719, %v1719
  %v1761 = vmul.f32 %v1720, %v1720
  %v1762 = vmul.f32 %v1721, %v1721
  %v1763 = vmul.f32 %v1722, %v1722
  %v1764 = vmul.f32 %v1723, %v1723
  %v1765 = vsel %vm1724, %v1757, 0.0
  %1766 = vadd.xlane.f32.xlu0 %v1765
  %v1767 = vpop.xlane.xlu0 %1766
  %v1768 = vsel %vm1724, %v1758, 0.0
  %1769 = vadd.xlane.f32.xlu0 %v1768
  %v1770 = vpop.xlane.xlu0 %1769
  %v1771 = vsel %vm1724, %v1759, 0.0
  %1772 = vadd.xlane.f32.xlu0 %v1771
  %v1773 = vpop.xlane.xlu0 %1772
  %v1774 = vsel %vm1724, %v1760, 0.0
  %1775 = vadd.xlane.f32.xlu0 %v1774
  %v1776 = vpop.xlane.xlu0 %1775
  %v1777 = vsel %vm1724, %v1761, 0.0
  %1778 = vadd.xlane.f32.xlu0 %v1777
  %v1779 = vpop.xlane.xlu0 %1778
  %v1780 = vsel %vm1724, %v1762, 0.0
  %1781 = vadd.xlane.f32.xlu0 %v1780
  %v1782 = vpop.xlane.xlu0 %1781
  %v1783 = vsel %vm1724, %v1763, 0.0
  %1784 = vadd.xlane.f32.xlu0 %v1783
  %v1785 = vpop.xlane.xlu0 %1784
  %v1786 = vsel %vm1724, %v1764, 0.0
  %1787 = vadd.xlane.f32.xlu0 %v1786
  %v1788 = vpop.xlane.xlu0 %1787
  %v1789 = vmul.f32 %v1767, 0.25
  %v1790 = vmul.f32 %v1770, 0.25
  %v1791 = vmul.f32 %v1773, 0.25
  %v1792 = vmul.f32 %v1776, 0.25
  %v1793 = vmul.f32 %v1779, 0.25
  %v1794 = vmul.f32 %v1782, 0.25
  %v1795 = vmul.f32 %v1785, 0.25
  %v1796 = vmul.f32 %v1788, 0.25
  %v1797 = vmul.f32 %v1749, %v1749
  %v1798 = vmul.f32 %v1750, %v1750
  %v1799 = vmul.f32 %v1751, %v1751
  %v1800 = vmul.f32 %v1752, %v1752
  %v1801 = vmul.f32 %v1753, %v1753
  %v1802 = vmul.f32 %v1754, %v1754
  %v1803 = vmul.f32 %v1755, %v1755
  %v1804 = vmul.f32 %v1756, %v1756
  %v1805 = vsub.f32 %v1789, %v1797
  %v1806 = vsub.f32 %v1790, %v1798
  %v1807 = vsub.f32 %v1791, %v1799
  %v1808 = vsub.f32 %v1792, %v1800
  %v1809 = vsub.f32 %v1793, %v1801
  %v1810 = vsub.f32 %v1794, %v1802
  %v1811 = vsub.f32 %v1795, %v1803
  %v1812 = vsub.f32 %v1796, %v1804
  %v1813 = vsub.f32 %v1716, %v1749
  %v1814 = vsub.f32 %v1717, %v1750
  %v1815 = vsub.f32 %v1718, %v1751
  %v1816 = vsub.f32 %v1719, %v1752
  %v1817 = vsub.f32 %v1720, %v1753
  %v1818 = vsub.f32 %v1721, %v1754
  %v1819 = vsub.f32 %v1722, %v1755
  %v1820 = vsub.f32 %v1723, %v1756
  %v1821 = vadd.f32 %v1805, 1e-05
  %v1822 = vadd.f32 %v1806, 1e-05
  %v1823 = vadd.f32 %v1807, 1e-05
  %v1824 = vadd.f32 %v1808, 1e-05
  %v1825 = vadd.f32 %v1809, 1e-05
  %v1826 = vadd.f32 %v1810, 1e-05
  %v1827 = vadd.f32 %v1811, 1e-05
  %v1828 = vadd.f32 %v1812, 1e-05
  %v1829 = vrsqrt.pop %v1821
  %v1830 = vrsqrt.pop %v1822
  %v1831 = vrsqrt.pop %v1823
  %v1832 = vrsqrt.pop %v1824
  %v1833 = vrsqrt.pop %v1825
  %v1834 = vrsqrt.pop %v1826
  %v1835 = vrsqrt.pop %v1827
  %v1836 = vrsqrt.pop %v1828
  %v1837 = vmul.f32 %v1221, %v1829
  %v1838 = vmul.f32 %v1222, %v1830
  %v1839 = vmul.f32 %v1223, %v1831
  %v1840 = vmul.f32 %v1224, %v1832
  %v1841 = vmul.f32 %v1225, %v1833
  %v1842 = vmul.f32 %v1226, %v1834
  %v1843 = vmul.f32 %v1227, %v1835
  %v1844 = vmul.f32 %v1228, %v1836
  %1846 = vset.pattern.permute.xlu0 8
  %1847 = vperm.xlu0 %1846, %v1837
  %v1848 = vpop.permute.xlu0 %1847
  %1851 = vset.pattern.permute.xlu0 8
  %1852 = vperm.xlu0 %1851, %v1838
  %v1853 = vpop.permute.xlu0 %1852
  %1856 = vset.pattern.permute.xlu0 8
  %1857 = vperm.xlu0 %1856, %v1839
  %v1858 = vpop.permute.xlu0 %1857
  %1861 = vset.pattern.permute.xlu0 8
  %1862 = vperm.xlu0 %1861, %v1840
  %v1863 = vpop.permute.xlu0 %1862
  %1866 = vset.pattern.permute.xlu0 8
  %1867 = vperm.xlu0 %1866, %v1841
  %v1868 = vpop.permute.xlu0 %1867
  %1871 = vset.pattern.permute.xlu0 8
  %1872 = vperm.xlu0 %1871, %v1842
  %v1873 = vpop.permute.xlu0 %1872
  %1876 = vset.pattern.permute.xlu0 8
  %1877 = vperm.xlu0 %1876, %v1843
  %v1878 = vpop.permute.xlu0 %1877
  %1881 = vset.pattern.permute.xlu0 8
  %1882 = vperm.xlu0 %1881, %v1844
  %v1883 = vpop.permute.xlu0 %1882
  %v1885 = vmul.f32 %v1813, %v1848
  %v1886 = vmul.f32 %v1814, %v1853
  %v1887 = vmul.f32 %v1815, %v1858
  %v1888 = vmul.f32 %v1816, %v1863
  %v1889 = vmul.f32 %v1817, %v1868
  %v1890 = vmul.f32 %v1818, %v1873
  %v1891 = vmul.f32 %v1819, %v1878
  %v1892 = vmul.f32 %v1820, %v1883
  %1893 = vset.pattern.permute.xlu0 9
  %1894 = vperm.xlu0 %1893, %v1221
  %v1895 = vpop.permute.xlu0 %1894
  %1897 = vset.pattern.permute.xlu0 9
  %1898 = vperm.xlu0 %1897, %v1222
  %v1899 = vpop.permute.xlu0 %1898
  %1901 = vset.pattern.permute.xlu0 9
  %1902 = vperm.xlu0 %1901, %v1223
  %v1903 = vpop.permute.xlu0 %1902
  %1905 = vset.pattern.permute.xlu0 9
  %1906 = vperm.xlu0 %1905, %v1224
  %v1907 = vpop.permute.xlu0 %1906
  %1909 = vset.pattern.permute.xlu0 9
  %1910 = vperm.xlu0 %1909, %v1225
  %v1911 = vpop.permute.xlu0 %1910
  %1913 = vset.pattern.permute.xlu0 9
  %1914 = vperm.xlu0 %1913, %v1226
  %v1915 = vpop.permute.xlu0 %1914
  %1917 = vset.pattern.permute.xlu0 9
  %1918 = vperm.xlu0 %1917, %v1227
  %v1919 = vpop.permute.xlu0 %1918
  %1921 = vset.pattern.permute.xlu0 9
  %1922 = vperm.xlu0 %1921, %v1228
  %v1923 = vpop.permute.xlu0 %1922
  %v1925 = vadd.f32 %v1885, %v1895
  %v1926 = vadd.f32 %v1886, %v1899
  %v1927 = vadd.f32 %v1887, %v1903
  %v1928 = vadd.f32 %v1888, %v1907
  %v1929 = vadd.f32 %v1889, %v1911
  %v1930 = vadd.f32 %v1890, %v1915
  %v1931 = vadd.f32 %v1891, %v1919
  %v1932 = vadd.f32 %v1892, %v1923
  %1941 = vrot.lane.b32.xlu0 %v1925, 127
  %v1942 = vpop.permute.xlu0 %1941
  %1943 = vrot.lane.b32.xlu0 %v1926, 127
  %v1944 = vpop.permute.xlu0 %1943
  %1945 = vrot.lane.b32.xlu0 %v1927, 127
  %v1946 = vpop.permute.xlu0 %1945
  %1947 = vrot.lane.b32.xlu0 %v1928, 127
  %v1948 = vpop.permute.xlu0 %1947
  %1949 = vrot.lane.b32.xlu0 %v1929, 127
  %v1950 = vpop.permute.xlu0 %1949
  %1951 = vrot.lane.b32.xlu0 %v1930, 127
  %v1952 = vpop.permute.xlu0 %1951
  %1953 = vrot.lane.b32.xlu0 %v1931, 127
  %v1954 = vpop.permute.xlu0 %1953
  %1955 = vrot.lane.b32.xlu0 %v1932, 127
  %v1956 = vpop.permute.xlu0 %1955
  %1965 = vrot.lane.b32.xlu0 %v1942, 127
  %v1966 = vpop.permute.xlu0 %1965
  %1967 = vrot.lane.b32.xlu0 %v1944, 127
  %v1968 = vpop.permute.xlu0 %1967
  %1969 = vrot.lane.b32.xlu0 %v1946, 127
  %v1970 = vpop.permute.xlu0 %1969
  %1971 = vrot.lane.b32.xlu0 %v1948, 127
  %v1972 = vpop.permute.xlu0 %1971
  %1973 = vrot.lane.b32.xlu0 %v1950, 127
  %v1974 = vpop.permute.xlu0 %1973
  %1975 = vrot.lane.b32.xlu0 %v1952, 127
  %v1976 = vpop.permute.xlu0 %1975
  %1977 = vrot.lane.b32.xlu0 %v1954, 127
  %v1978 = vpop.permute.xlu0 %1977
  %1979 = vrot.lane.b32.xlu0 %v1956, 127
  %v1980 = vpop.permute.xlu0 %1979
  %vm1989 = vcmask 7168
  %v1990 = vsel %vm1989, %v1925, %v1942
  %v1991 = vsel %vm1989, %v1926, %v1944
  %v1992 = vsel %vm1989, %v1927, %v1946
  %v1993 = vsel %vm1989, %v1928, %v1948
  %v1994 = vsel %vm1989, %v1929, %v1950
  %v1995 = vsel %vm1989, %v1930, %v1952
  %v1996 = vsel %vm1989, %v1931, %v1954
  %v1997 = vsel %vm1989, %v1932, %v1956
  %v1998 = vsel %vm1989, %v1942, %v1966
  %v1999 = vsel %vm1989, %v1944, %v1968
  %v2000 = vsel %vm1989, %v1946, %v1970
  %v2001 = vsel %vm1989, %v1948, %v1972
  %v2002 = vsel %vm1989, %v1950, %v1974
  %v2003 = vsel %vm1989, %v1952, %v1976
  %v2004 = vsel %vm1989, %v1954, %v1978
  %v2005 = vsel %vm1989, %v1956, %v1980
  %v2006 = vpack.c.bf16 %v1991, %v1990
  %v2007 = vpack.c.bf16 %v1993, %v1992
  %v2008 = vpack.c.bf16 %v1995, %v1994
  %v2009 = vpack.c.bf16 %v1997, %v1996
  %v2010 = vpack.c.bf16 %v1999, %v1998
  %v2011 = vpack.c.bf16 %v2001, %v2000
  %v2012 = vpack.c.bf16 %v2003, %v2002
  %v2013 = vpack.c.bf16 %v2005, %v2004
  %v2014 = vld [vmem:[%s5] sm:$0xf]
  %v2015 = vld [vmem:[%s5 + $0x4] sm:$0xf]
  %v2016 = vld [vmem:[%s5 + $0x8] sm:$0xf]
  %v2017 = vld [vmem:[%s5 + $0xc] sm:$0xf]
  %v2018 = vld [vmem:[%s5 + $0x10] sm:$0xf]
  %v2019 = vld [vmem:[%s5 + $0x14] sm:$0xf]
  %v2020 = vld [vmem:[%s5 + $0x18] sm:$0xf]
  %v2021 = vld [vmem:[%s5 + $0x1c] sm:$0xf]
  %v2022 = vld [vmem:[%s5 + $0x20] sm:$0xf]
  %v2023 = vld [vmem:[%s5 + $0x24] sm:$0xf]
  %v2024 = vld [vmem:[%s5 + $0x28] sm:$0xf]
  %v2025 = vld [vmem:[%s5 + $0x2c] sm:$0xf]
  %v2026 = vld [vmem:[%s5 + $0x30] sm:$0xf]
  %v2027 = vld [vmem:[%s5 + $0x34] sm:$0xf]
  %v2028 = vld [vmem:[%s5 + $0x38] sm:$0xf]
  %v2029 = vld [vmem:[%s5 + $0x3c] sm:$0xf]
  %v2030 = vld [vmem:[%s5 + $0x40] sm:$0xf]
  %v2031 = vld [vmem:[%s5 + $0x44] sm:$0xf]
  %v2032 = vld [vmem:[%s5 + $0x48] sm:$0xf]
  %v2033 = vld [vmem:[%s5 + $0x4c] sm:$0xf]
  %v2034 = vld [vmem:[%s5 + $0x50] sm:$0xf]
  %v2035 = vld [vmem:[%s5 + $0x54] sm:$0xf]
  %v2036 = vld [vmem:[%s5 + $0x58] sm:$0xf]
  %v2037 = vld [vmem:[%s5 + $0x5c] sm:$0xf]
  %v2038 = vld [vmem:[%s5 + $0x60] sm:$0xf]
  %v2039 = vld [vmem:[%s5 + $0x64] sm:$0xf]
  %v2040 = vld [vmem:[%s5 + $0x68] sm:$0xf]
  %v2041 = vld [vmem:[%s5 + $0x6c] sm:$0xf]
  %v2042 = vld [vmem:[%s5 + $0x70] sm:$0xf]
  %v2043 = vld [vmem:[%s5 + $0x74] sm:$0xf]
  %v2044 = vld [vmem:[%s5 + $0x78] sm:$0xf]
  %v2045 = vld [vmem:[%s5 + $0x7c] sm:$0xf]
  %v2078 = vunpack.c.l.b16 %v2014
  %v2079 = vunpack.c.l.b16 %v2015
  %v2080 = vunpack.c.l.b16 %v2016
  %v2081 = vunpack.c.l.b16 %v2017
  %v2082 = vunpack.c.l.b16 %v2018
  %v2083 = vunpack.c.l.b16 %v2019
  %v2084 = vunpack.c.l.b16 %v2020
  %v2085 = vunpack.c.l.b16 %v2021
  %v2086 = vunpack.c.l.b16 %v2022
  %v2087 = vunpack.c.l.b16 %v2023
  %v2088 = vunpack.c.l.b16 %v2024
  %v2089 = vunpack.c.l.b16 %v2025
  %v2090 = vunpack.c.l.b16 %v2026
  %v2091 = vunpack.c.l.b16 %v2027
  %v2092 = vunpack.c.l.b16 %v2028
  %v2093 = vunpack.c.l.b16 %v2029
  %v2094 = vunpack.c.l.b16 %v2030
  %v2095 = vunpack.c.l.b16 %v2031
  %v2096 = vunpack.c.l.b16 %v2032
  %v2097 = vunpack.c.l.b16 %v2033
  %v2098 = vunpack.c.l.b16 %v2034
  %v2099 = vunpack.c.l.b16 %v2035
  %v2100 = vunpack.c.l.b16 %v2036
  %v2101 = vunpack.c.l.b16 %v2037
  %v2102 = vunpack.c.l.b16 %v2038
  %v2103 = vunpack.c.l.b16 %v2039
  %v2104 = vunpack.c.l.b16 %v2040
  %v2105 = vunpack.c.l.b16 %v2041
  %v2106 = vunpack.c.l.b16 %v2042
  %v2107 = vunpack.c.l.b16 %v2043
  %v2108 = vunpack.c.l.b16 %v2044
  %v2109 = vunpack.c.l.b16 %v2045
  %v2110 = vpack.c.b16 %v2079, %v2078
  %v2111 = vpack.c.b16 %v2081, %v2080
  %v2112 = vpack.c.b16 %v2083, %v2082
  %v2113 = vpack.c.b16 %v2085, %v2084
  %v2114 = vpack.c.b16 %v2087, %v2086
  %v2115 = vpack.c.b16 %v2089, %v2088
  %v2116 = vpack.c.b16 %v2091, %v2090
  %v2117 = vpack.c.b16 %v2093, %v2092
  %v2118 = vpack.c.b16 %v2095, %v2094
  %v2119 = vpack.c.b16 %v2097, %v2096
  %v2120 = vpack.c.b16 %v2099, %v2098
  %v2121 = vpack.c.b16 %v2101, %v2100
  %v2122 = vpack.c.b16 %v2103, %v2102
  %v2123 = vpack.c.b16 %v2105, %v2104
  %v2124 = vpack.c.b16 %v2107, %v2106
  %v2125 = vpack.c.b16 %v2109, %v2108
  %2142 = vmatprep.subr.bf16.mxu0 0
  %2143 = vmatpush1.bf16.msra.mxu0 %v2006
  %2144 = vmatprep.subr.bf16.mxu0 0
  %2145 = vmatpush1.bf16.msra.mxu0 %v2007
  %2146 = vmatprep.subr.bf16.mxu0 0
  %2147 = vmatpush1.bf16.msra.mxu0 %v2008
  %2148 = vmatprep.subr.bf16.mxu0 0
  %2149 = vmatpush1.bf16.msra.mxu0 %v2009
  %2150 = vmatprep.subr.bf16.mxu0 0
  %2151 = vmatpush1.bf16.msra.mxu0 %v2010
  %2152 = vmatprep.subr.bf16.mxu0 0
  %2153 = vmatpush1.bf16.msra.mxu0 %v2011
  %2154 = vmatprep.subr.bf16.mxu0 0
  %2155 = vmatpush1.bf16.msra.mxu0 %v2012
  %2156 = vmatprep.subr.bf16.mxu0 0
  %2157 = vmatpush1.bf16.msra.mxu0 %v2013
  %2158 = vmatprep.subr.bf16.mxu0 0
  %2159 = vmatpush1.bf16.msra.mxu0 0
  %2160 = vmatprep.subr.bf16.mxu0 0
  %2161 = vmatpush1.bf16.msra.mxu0 0
  %2162 = vmatprep.subr.bf16.mxu0 0
  %2163 = vmatpush1.bf16.msra.mxu0 0
  %2164 = vmatprep.subr.bf16.mxu0 0
  %2165 = vmatpush1.bf16.msra.mxu0 0
  %2166 = vmatprep.subr.bf16.mxu0 0
  %2167 = vmatpush1.bf16.msra.mxu0 0
  %2168 = vmatprep.subr.bf16.mxu0 0
  %2169 = vmatpush1.bf16.msra.mxu0 0
  %2170 = vmatprep.subr.bf16.mxu0 0
  %2171 = vmatpush1.bf16.msra.mxu0 0
  %2172 = vmatprep.subr.bf16.mxu0 0
  %2173 = vmatpush1.bf16.msra.mxu0 0
  %2174 = vmatprep.mubr.bf16.mxu0 0
  %2175 = vmatmul.mubr.bf16.gmra.mrb[0].mxu0 %v2110
  %v2176 = vpop.f32.mrb[0].mxu0
  %v2177 = vadd.f32 0.0, %v2176
  %v2178 = vpop.f32.mrb[0].mxu0
  %v2179 = vpop.f32.mrb[0].mxu0
  %v2180 = vadd.f32 0.0, %v2179
  %v2181 = vpop.f32.mrb[0].mxu0
  %2182 = vmatprep.mubr.bf16.mxu0 0
  %2183 = vmatmul.mubr.bf16.gmra.mrb[0].mxu0 %v2111
  %v2184 = vpop.f32.mrb[0].mxu0
  %v2185 = vadd.f32 0.0, %v2184
  %v2186 = vpop.f32.mrb[0].mxu0
  %v2187 = vpop.f32.mrb[0].mxu0
  %v2188 = vadd.f32 0.0, %v2187
  %v2189 = vpop.f32.mrb[0].mxu0
  %2190 = vmatprep.mubr.bf16.mxu0 0
  %2191 = vmatmul.mubr.bf16.gmra.mrb[0].mxu0 %v2112
  %v2192 = vpop.f32.mrb[0].mxu0
  %v2193 = vadd.f32 0.0, %v2192
  %v2194 = vpop.f32.mrb[0].mxu0
  %v2195 = vpop.f32.mrb[0].mxu0
  %v2196 = vadd.f32 0.0, %v2195
  %v2197 = vpop.f32.mrb[0].mxu0
  %2198 = vmatprep.mubr.bf16.mxu0 0
  %2199 = vmatmul.mubr.bf16.gmra.mrb[0].mxu0 %v2113
  %v2200 = vpop.f32.mrb[0].mxu0
  %v2201 = vadd.f32 0.0, %v2200
  %v2202 = vpop.f32.mrb[0].mxu0
  %v2203 = vpop.f32.mrb[0].mxu0
  %v2204 = vadd.f32 0.0, %v2203
  %v2205 = vpop.f32.mrb[0].mxu0
  %2206 = vmatprep.mubr.bf16.mxu0 0
  %2207 = vmatmul.mubr.bf16.gmra.mrb[0].mxu0 %v2114
  %v2208 = vpop.f32.mrb[0].mxu0
  %v2209 = vadd.f32 0.0, %v2208
  %v2210 = vpop.f32.mrb[0].mxu0
  %v2211 = vpop.f32.mrb[0].mxu0
  %v2212 = vadd.f32 0.0, %v2211
  %v2213 = vpop.f32.mrb[0].mxu0
  %2214 = vmatprep.mubr.bf16.mxu0 0
  %2215 = vmatmul.mubr.bf16.gmra.mrb[0].mxu0 %v2115
  %v2216 = vpop.f32.mrb[0].mxu0
  %v2217 = vadd.f32 0.0, %v2216
  %v2218 = vpop.f32.mrb[0].mxu0
  %v2219 = vpop.f32.mrb[0].mxu0
  %v2220 = vadd.f32 0.0, %v2219
  %v2221 = vpop.f32.mrb[0].mxu0
  %2222 = vmatprep.mubr.bf16.mxu0 0
  %2223 = vmatmul.mubr.bf16.gmra.mrb[0].mxu0 %v2116
  %v2224 = vpop.f32.mrb[0].mxu0
  %v2225 = vadd.f32 0.0, %v2224
  %v2226 = vpop.f32.mrb[0].mxu0
  %v2227 = vpop.f32.mrb[0].mxu0
  %v2228 = vadd.f32 0.0, %v2227
  %v2229 = vpop.f32.mrb[0].mxu0
  %2230 = vmatprep.mubr.bf16.mxu0 0
  %2231 = vmatmul.mubr.bf16.gmra.mrb[0].mxu0 %v2117
  %v2232 = vpop.f32.mrb[0].mxu0
  %v2233 = vadd.f32 0.0, %v2232
  %v2234 = vpop.f32.mrb[0].mxu0
  %v2235 = vpop.f32.mrb[0].mxu0
  %v2236 = vadd.f32 0.0, %v2235
  %v2237 = vpop.f32.mrb[0].mxu0
  %2238 = vmatprep.mubr.bf16.mxu0 0
  %2239 = vmatmul.mubr.bf16.gmra.mrb[0].mxu0 %v2118
  %v2240 = vpop.f32.mrb[0].mxu0
  %v2241 = vadd.f32 0.0, %v2240
  %v2242 = vpop.f32.mrb[0].mxu0
  %v2243 = vpop.f32.mrb[0].mxu0
  %v2244 = vadd.f32 0.0, %v2243
  %v2245 = vpop.f32.mrb[0].mxu0
  %2246 = vmatprep.mubr.bf16.mxu0 0
  %2247 = vmatmul.mubr.bf16.gmra.mrb[0].mxu0 %v2119
  %v2248 = vpop.f32.mrb[0].mxu0
  %v2249 = vadd.f32 0.0, %v2248
  %v2250 = vpop.f32.mrb[0].mxu0
  %v2251 = vpop.f32.mrb[0].mxu0
  %v2252 = vadd.f32 0.0, %v2251
  %v2253 = vpop.f32.mrb[0].mxu0
  %2254 = vmatprep.mubr.bf16.mxu0 0
  %2255 = vmatmul.mubr.bf16.gmra.mrb[0].mxu0 %v2120
  %v2256 = vpop.f32.mrb[0].mxu0
  %v2257 = vadd.f32 0.0, %v2256
  %v2258 = vpop.f32.mrb[0].mxu0
  %v2259 = vpop.f32.mrb[0].mxu0
  %v2260 = vadd.f32 0.0, %v2259
  %v2261 = vpop.f32.mrb[0].mxu0
  %2262 = vmatprep.mubr.bf16.mxu0 0
  %2263 = vmatmul.mubr.bf16.gmra.mrb[0].mxu0 %v2121
  %v2264 = vpop.f32.mrb[0].mxu0
  %v2265 = vadd.f32 0.0, %v2264
  %v2266 = vpop.f32.mrb[0].mxu0
  %v2267 = vpop.f32.mrb[0].mxu0
  %v2268 = vadd.f32 0.0, %v2267
  %v2269 = vpop.f32.mrb[0].mxu0
  %2270 = vmatprep.mubr.bf16.mxu0 0
  %2271 = vmatmul.mubr.bf16.gmra.mrb[0].mxu0 %v2122
  %v2272 = vpop.f32.mrb[0].mxu0
  %v2273 = vadd.f32 0.0, %v2272
  %v2274 = vpop.f32.mrb[0].mxu0
  %v2275 = vpop.f32.mrb[0].mxu0
  %v2276 = vadd.f32 0.0, %v2275
  %v2277 = vpop.f32.mrb[0].mxu0
  %2278 = vmatprep.mubr.bf16.mxu0 0
  %2279 = vmatmul.mubr.bf16.gmra.mrb[0].mxu0 %v2123
  %v2280 = vpop.f32.mrb[0].mxu0
  %v2281 = vadd.f32 0.0, %v2280
  %v2282 = vpop.f32.mrb[0].mxu0
  %v2283 = vpop.f32.mrb[0].mxu0
  %v2284 = vadd.f32 0.0, %v2283
  %v2285 = vpop.f32.mrb[0].mxu0
  %2286 = vmatprep.mubr.bf16.mxu0 0
  %2287 = vmatmul.mubr.bf16.gmra.mrb[0].mxu0 %v2124
  %v2288 = vpop.f32.mrb[0].mxu0
  %v2289 = vadd.f32 0.0, %v2288
  %v2290 = vpop.f32.mrb[0].mxu0
  %v2291 = vpop.f32.mrb[0].mxu0
  %v2292 = vadd.f32 0.0, %v2291
  %v2293 = vpop.f32.mrb[0].mxu0
  %2294 = vmatprep.mubr.bf16.mxu0 0
  %2295 = vmatmul.mubr.bf16.gmra.mrb[0].mxu0 %v2125
  %v2296 = vpop.f32.mrb[0].mxu0
  %v2297 = vadd.f32 0.0, %v2296
  %v2298 = vpop.f32.mrb[0].mxu0
  %v2299 = vpop.f32.mrb[0].mxu0
  %v2300 = vadd.f32 0.0, %v2299
  %v2301 = vpop.f32.mrb[0].mxu0
  %2302 = vdwg.mxu0
  %v2303 = vld [vmem:[%s8] sm:$0xff]
  %v2304 = vld [vmem:[%s8 + $0x8] sm:$0xff]
  %v2305 = vld [vmem:[%s8 + $0x10] sm:$0xff]
  %v2306 = vld [vmem:[%s8 + $0x18] sm:$0xff]
  %v2307 = vld [vmem:[%s8 + $0x20] sm:$0xff]
  %v2308 = vld [vmem:[%s8 + $0x28] sm:$0xff]
  %v2309 = vld [vmem:[%s8 + $0x30] sm:$0xff]
  %v2310 = vld [vmem:[%s8 + $0x38] sm:$0xff]
  %v2311 = vld [vmem:[%s8 + $0x40] sm:$0xff]
  %v2312 = vld [vmem:[%s8 + $0x48] sm:$0xff]
  %v2313 = vld [vmem:[%s8 + $0x50] sm:$0xff]
  %v2314 = vld [vmem:[%s8 + $0x58] sm:$0xff]
  %v2315 = vld [vmem:[%s8 + $0x60] sm:$0xff]
  %v2316 = vld [vmem:[%s8 + $0x68] sm:$0xff]
  %v2317 = vld [vmem:[%s8 + $0x70] sm:$0xff]
  %v2318 = vld [vmem:[%s8 + $0x78] sm:$0xff]
  %v2319 = vld [vmem:[%s8 + $0x80] sm:$0xff]
  %v2320 = vld [vmem:[%s8 + $0x88] sm:$0xff]
  %v2321 = vld [vmem:[%s8 + $0x90] sm:$0xff]
  %v2322 = vld [vmem:[%s8 + $0x98] sm:$0xff]
  %v2323 = vld [vmem:[%s8 + $0xa0] sm:$0xff]
  %v2324 = vld [vmem:[%s8 + $0xa8] sm:$0xff]
  %v2325 = vld [vmem:[%s8 + $0xb0] sm:$0xff]
  %v2326 = vld [vmem:[%s8 + $0xb8] sm:$0xff]
  %v2327 = vld [vmem:[%s8 + $0xc0] sm:$0xff]
  %v2328 = vld [vmem:[%s8 + $0xc8] sm:$0xff]
  %v2329 = vld [vmem:[%s8 + $0xd0] sm:$0xff]
  %v2330 = vld [vmem:[%s8 + $0xd8] sm:$0xff]
  %v2331 = vld [vmem:[%s8 + $0xe0] sm:$0xff]
  %v2332 = vld [vmem:[%s8 + $0xe8] sm:$0xff]
  %v2333 = vld [vmem:[%s8 + $0xf0] sm:$0xff]
  %v2334 = vld [vmem:[%s8 + $0xf8] sm:$0xff]
  %vm2335 = vcmask 15360
  %v2336 = vsel %vm2335, %v2177, 0.0
  %2337 = vadd.xlane.f32.xlu0 %v2336
  %v2338 = vpop.xlane.xlu0 %2337
  %v2339 = vsel %vm2335, %v2180, 0.0
  %2340 = vadd.xlane.f32.xlu0 %v2339
  %v2341 = vpop.xlane.xlu0 %2340
  %v2342 = vsel %vm2335, %v2185, 0.0
  %2343 = vadd.xlane.f32.xlu0 %v2342
  %v2344 = vpop.xlane.xlu0 %2343
  %v2345 = vsel %vm2335, %v2188, 0.0
  %2346 = vadd.xlane.f32.xlu0 %v2345
  %v2347 = vpop.xlane.xlu0 %2346
  %v2348 = vsel %vm2335, %v2193, 0.0
  %2349 = vadd.xlane.f32.xlu0 %v2348
  %v2350 = vpop.xlane.xlu0 %2349
  %v2351 = vsel %vm2335, %v2196, 0.0
  %2352 = vadd.xlane.f32.xlu0 %v2351
  %v2353 = vpop.xlane.xlu0 %2352
  %v2354 = vsel %vm2335, %v2201, 0.0
  %2355 = vadd.xlane.f32.xlu0 %v2354
  %v2356 = vpop.xlane.xlu0 %2355
  %v2357 = vsel %vm2335, %v2204, 0.0
  %2358 = vadd.xlane.f32.xlu0 %v2357
  %v2359 = vpop.xlane.xlu0 %2358
  %v2360 = vsel %vm2335, %v2209, 0.0
  %2361 = vadd.xlane.f32.xlu0 %v2360
  %v2362 = vpop.xlane.xlu0 %2361
  %v2363 = vsel %vm2335, %v2212, 0.0
  %2364 = vadd.xlane.f32.xlu0 %v2363
  %v2365 = vpop.xlane.xlu0 %2364
  %v2366 = vsel %vm2335, %v2217, 0.0
  %2367 = vadd.xlane.f32.xlu0 %v2366
  %v2368 = vpop.xlane.xlu0 %2367
  %v2369 = vsel %vm2335, %v2220, 0.0
  %2370 = vadd.xlane.f32.xlu0 %v2369
  %v2371 = vpop.xlane.xlu0 %2370
  %v2372 = vsel %vm2335, %v2225, 0.0
  %2373 = vadd.xlane.f32.xlu0 %v2372
  %v2374 = vpop.xlane.xlu0 %2373
  %v2375 = vsel %vm2335, %v2228, 0.0
  %2376 = vadd.xlane.f32.xlu0 %v2375
  %v2377 = vpop.xlane.xlu0 %2376
  %v2378 = vsel %vm2335, %v2233, 0.0
  %2379 = vadd.xlane.f32.xlu0 %v2378
  %v2380 = vpop.xlane.xlu0 %2379
  %v2381 = vsel %vm2335, %v2236, 0.0
  %2382 = vadd.xlane.f32.xlu0 %v2381
  %v2383 = vpop.xlane.xlu0 %2382
  %v2384 = vsel %vm2335, %v2241, 0.0
  %2385 = vadd.xlane.f32.xlu0 %v2384
  %v2386 = vpop.xlane.xlu0 %2385
  %v2387 = vsel %vm2335, %v2244, 0.0
  %2388 = vadd.xlane.f32.xlu0 %v2387
  %v2389 = vpop.xlane.xlu0 %2388
  %v2390 = vsel %vm2335, %v2249, 0.0
  %2391 = vadd.xlane.f32.xlu0 %v2390
  %v2392 = vpop.xlane.xlu0 %2391
  %v2393 = vsel %vm2335, %v2252, 0.0
  %2394 = vadd.xlane.f32.xlu0 %v2393
  %v2395 = vpop.xlane.xlu0 %2394
  %v2396 = vsel %vm2335, %v2257, 0.0
  %2397 = vadd.xlane.f32.xlu0 %v2396
  %v2398 = vpop.xlane.xlu0 %2397
  %v2399 = vsel %vm2335, %v2260, 0.0
  %2400 = vadd.xlane.f32.xlu0 %v2399
  %v2401 = vpop.xlane.xlu0 %2400
  %v2402 = vsel %vm2335, %v2265, 0.0
  %2403 = vadd.xlane.f32.xlu0 %v2402
  %v2404 = vpop.xlane.xlu0 %2403
  %v2405 = vsel %vm2335, %v2268, 0.0
  %2406 = vadd.xlane.f32.xlu0 %v2405
  %v2407 = vpop.xlane.xlu0 %2406
  %v2408 = vsel %vm2335, %v2273, 0.0
  %2409 = vadd.xlane.f32.xlu0 %v2408
  %v2410 = vpop.xlane.xlu0 %2409
  %v2411 = vsel %vm2335, %v2276, 0.0
  %2412 = vadd.xlane.f32.xlu0 %v2411
  %v2413 = vpop.xlane.xlu0 %2412
  %v2414 = vsel %vm2335, %v2281, 0.0
  %2415 = vadd.xlane.f32.xlu0 %v2414
  %v2416 = vpop.xlane.xlu0 %2415
  %v2417 = vsel %vm2335, %v2284, 0.0
  %2418 = vadd.xlane.f32.xlu0 %v2417
  %v2419 = vpop.xlane.xlu0 %2418
  %v2420 = vsel %vm2335, %v2289, 0.0
  %2421 = vadd.xlane.f32.xlu0 %v2420
  %v2422 = vpop.xlane.xlu0 %2421
  %v2423 = vsel %vm2335, %v2292, 0.0
  %2424 = vadd.xlane.f32.xlu0 %v2423
  %v2425 = vpop.xlane.xlu0 %2424
  %v2426 = vsel %vm2335, %v2297, 0.0
  %2427 = vadd.xlane.f32.xlu0 %v2426
  %v2428 = vpop.xlane.xlu0 %2427
  %v2429 = vsel %vm2335, %v2300, 0.0
  %2430 = vadd.xlane.f32.xlu0 %v2429
  %v2431 = vpop.xlane.xlu0 %2430
  %v2432 = vmul.f32 %v2338, 0.5
  %v2433 = vmul.f32 %v2341, 0.5
  %v2434 = vmul.f32 %v2344, 0.5
  %v2435 = vmul.f32 %v2347, 0.5
  %v2436 = vmul.f32 %v2350, 0.5
  %v2437 = vmul.f32 %v2353, 0.5
  %v2438 = vmul.f32 %v2356, 0.5
  %v2439 = vmul.f32 %v2359, 0.5
  %v2440 = vmul.f32 %v2362, 0.5
  %v2441 = vmul.f32 %v2365, 0.5
  %v2442 = vmul.f32 %v2368, 0.5
  %v2443 = vmul.f32 %v2371, 0.5
  %v2444 = vmul.f32 %v2374, 0.5
  %v2445 = vmul.f32 %v2377, 0.5
  %v2446 = vmul.f32 %v2380, 0.5
  %v2447 = vmul.f32 %v2383, 0.5
  %v2448 = vmul.f32 %v2386, 0.5
  %v2449 = vmul.f32 %v2389, 0.5
  %v2450 = vmul.f32 %v2392, 0.5
  %v2451 = vmul.f32 %v2395, 0.5
  %v2452 = vmul.f32 %v2398, 0.5
  %v2453 = vmul.f32 %v2401, 0.5
  %v2454 = vmul.f32 %v2404, 0.5
  %v2455 = vmul.f32 %v2407, 0.5
  %v2456 = vmul.f32 %v2410, 0.5
  %v2457 = vmul.f32 %v2413, 0.5
  %v2458 = vmul.f32 %v2416, 0.5
  %v2459 = vmul.f32 %v2419, 0.5
  %v2460 = vmul.f32 %v2422, 0.5
  %v2461 = vmul.f32 %v2425, 0.5
  %v2462 = vmul.f32 %v2428, 0.5
  %v2463 = vmul.f32 %v2431, 0.5
  %v2464 = vmul.f32 %v2177, %v2177
  %v2465 = vmul.f32 %v2180, %v2180
  %v2466 = vmul.f32 %v2185, %v2185
  %v2467 = vmul.f32 %v2188, %v2188
  %v2468 = vmul.f32 %v2193, %v2193
  %v2469 = vmul.f32 %v2196, %v2196
  %v2470 = vmul.f32 %v2201, %v2201
  %v2471 = vmul.f32 %v2204, %v2204
  %v2472 = vmul.f32 %v2209, %v2209
  %v2473 = vmul.f32 %v2212, %v2212
  %v2474 = vmul.f32 %v2217, %v2217
  %v2475 = vmul.f32 %v2220, %v2220
  %v2476 = vmul.f32 %v2225, %v2225
  %v2477 = vmul.f32 %v2228, %v2228
  %v2478 = vmul.f32 %v2233, %v2233
  %v2479 = vmul.f32 %v2236, %v2236
  %v2480 = vmul.f32 %v2241, %v2241
  %v2481 = vmul.f32 %v2244, %v2244
  %v2482 = vmul.f32 %v2249, %v2249
  %v2483 = vmul.f32 %v2252, %v2252
  %v2484 = vmul.f32 %v2257, %v2257
  %v2485 = vmul.f32 %v2260, %v2260
  %v2486 = vmul.f32 %v2265, %v2265
  %v2487 = vmul.f32 %v2268, %v2268
  %v2488 = vmul.f32 %v2273, %v2273
  %v2489 = vmul.f32 %v2276, %v2276
  %v2490 = vmul.f32 %v2281, %v2281
  %v2491 = vmul.f32 %v2284, %v2284
  %v2492 = vmul.f32 %v2289, %v2289
  %v2493 = vmul.f32 %v2292, %v2292
  %v2494 = vmul.f32 %v2297, %v2297
  %v2495 = vmul.f32 %v2300, %v2300
  %v2496 = vsel %vm2335, %v2464, 0.0
  %2497 = vadd.xlane.f32.xlu0 %v2496
  %v2498 = vpop.xlane.xlu0 %2497
  %v2499 = vsel %vm2335, %v2465, 0.0
  %2500 = vadd.xlane.f32.xlu0 %v2499
  %v2501 = vpop.xlane.xlu0 %2500
  %v2502 = vsel %vm2335, %v2466, 0.0
  %2503 = vadd.xlane.f32.xlu0 %v2502
  %v2504 = vpop.xlane.xlu0 %2503
  %v2505 = vsel %vm2335, %v2467, 0.0
  %2506 = vadd.xlane.f32.xlu0 %v2505
  %v2507 = vpop.xlane.xlu0 %2506
  %v2508 = vsel %vm2335, %v2468, 0.0
  %2509 = vadd.xlane.f32.xlu0 %v2508
  %v2510 = vpop.xlane.xlu0 %2509
  %v2511 = vsel %vm2335, %v2469, 0.0
  %2512 = vadd.xlane.f32.xlu0 %v2511
  %v2513 = vpop.xlane.xlu0 %2512
  %v2514 = vsel %vm2335, %v2470, 0.0
  %2515 = vadd.xlane.f32.xlu0 %v2514
  %v2516 = vpop.xlane.xlu0 %2515
  %v2517 = vsel %vm2335, %v2471, 0.0
  %2518 = vadd.xlane.f32.xlu0 %v2517
  %v2519 = vpop.xlane.xlu0 %2518
  %v2520 = vsel %vm2335, %v2472, 0.0
  %2521 = vadd.xlane.f32.xlu0 %v2520
  %v2522 = vpop.xlane.xlu0 %2521
  %v2523 = vsel %vm2335, %v2473, 0.0
  %2524 = vadd.xlane.f32.xlu0 %v2523
  %v2525 = vpop.xlane.xlu0 %2524
  %v2526 = vsel %vm2335, %v2474, 0.0
  %2527 = vadd.xlane.f32.xlu0 %v2526
  %v2528 = vpop.xlane.xlu0 %2527
  %v2529 = vsel %vm2335, %v2475, 0.0
  %2530 = vadd.xlane.f32.xlu0 %v2529
  %v2531 = vpop.xlane.xlu0 %2530
  %v2532 = vsel %vm2335, %v2476, 0.0
  %2533 = vadd.xlane.f32.xlu0 %v2532
  %v2534 = vpop.xlane.xlu0 %2533
  %v2535 = vsel %vm2335, %v2477, 0.0
  %2536 = vadd.xlane.f32.xlu0 %v2535
  %v2537 = vpop.xlane.xlu0 %2536
  %v2538 = vsel %vm2335, %v2478, 0.0
  %2539 = vadd.xlane.f32.xlu0 %v2538
  %v2540 = vpop.xlane.xlu0 %2539
  %v2541 = vsel %vm2335, %v2479, 0.0
  %2542 = vadd.xlane.f32.xlu0 %v2541
  %v2543 = vpop.xlane.xlu0 %2542
  %v2544 = vsel %vm2335, %v2480, 0.0
  %2545 = vadd.xlane.f32.xlu0 %v2544
  %v2546 = vpop.xlane.xlu0 %2545
  %v2547 = vsel %vm2335, %v2481, 0.0
  %2548 = vadd.xlane.f32.xlu0 %v2547
  %v2549 = vpop.xlane.xlu0 %2548
  %v2550 = vsel %vm2335, %v2482, 0.0
  %2551 = vadd.xlane.f32.xlu0 %v2550
  %v2552 = vpop.xlane.xlu0 %2551
  %v2553 = vsel %vm2335, %v2483, 0.0
  %2554 = vadd.xlane.f32.xlu0 %v2553
  %v2555 = vpop.xlane.xlu0 %2554
  %v2556 = vsel %vm2335, %v2484, 0.0
  %2557 = vadd.xlane.f32.xlu0 %v2556
  %v2558 = vpop.xlane.xlu0 %2557
  %v2559 = vsel %vm2335, %v2485, 0.0
  %2560 = vadd.xlane.f32.xlu0 %v2559
  %v2561 = vpop.xlane.xlu0 %2560
  %v2562 = vsel %vm2335, %v2486, 0.0
  %2563 = vadd.xlane.f32.xlu0 %v2562
  %v2564 = vpop.xlane.xlu0 %2563
  %v2565 = vsel %vm2335, %v2487, 0.0
  %2566 = vadd.xlane.f32.xlu0 %v2565
  %v2567 = vpop.xlane.xlu0 %2566
  %v2568 = vsel %vm2335, %v2488, 0.0
  %2569 = vadd.xlane.f32.xlu0 %v2568
  %v2570 = vpop.xlane.xlu0 %2569
  %v2571 = vsel %vm2335, %v2489, 0.0
  %2572 = vadd.xlane.f32.xlu0 %v2571
  %v2573 = vpop.xlane.xlu0 %2572
  %v2574 = vsel %vm2335, %v2490, 0.0
  %2575 = vadd.xlane.f32.xlu0 %v2574
  %v2576 = vpop.xlane.xlu0 %2575
  %v2577 = vsel %vm2335, %v2491, 0.0
  %2578 = vadd.xlane.f32.xlu0 %v2577
  %v2579 = vpop.xlane.xlu0 %2578
  %v2580 = vsel %vm2335, %v2492, 0.0
  %2581 = vadd.xlane.f32.xlu0 %v2580
  %v2582 = vpop.xlane.xlu0 %2581
  %v2583 = vsel %vm2335, %v2493, 0.0
  %2584 = vadd.xlane.f32.xlu0 %v2583
  %v2585 = vpop.xlane.xlu0 %2584
  %v2586 = vsel %vm2335, %v2494, 0.0
  %2587 = vadd.xlane.f32.xlu0 %v2586
  %v2588 = vpop.xlane.xlu0 %2587
  %v2589 = vsel %vm2335, %v2495, 0.0
  %2590 = vadd.xlane.f32.xlu0 %v2589
  %v2591 = vpop.xlane.xlu0 %2590
  %v2592 = vmul.f32 %v2498, 0.5
  %v2593 = vmul.f32 %v2501, 0.5
  %v2594 = vmul.f32 %v2504, 0.5
  %v2595 = vmul.f32 %v2507, 0.5
  %v2596 = vmul.f32 %v2510, 0.5
  %v2597 = vmul.f32 %v2513, 0.5
  %v2598 = vmul.f32 %v2516, 0.5
  %v2599 = vmul.f32 %v2519, 0.5
  %v2600 = vmul.f32 %v2522, 0.5
  %v2601 = vmul.f32 %v2525, 0.5
  %v2602 = vmul.f32 %v2528, 0.5
  %v2603 = vmul.f32 %v2531, 0.5
  %v2604 = vmul.f32 %v2534, 0.5
  %v2605 = vmul.f32 %v2537, 0.5
  %v2606 = vmul.f32 %v2540, 0.5
  %v2607 = vmul.f32 %v2543, 0.5
  %v2608 = vmul.f32 %v2546, 0.5
  %v2609 = vmul.f32 %v2549, 0.5
  %v2610 = vmul.f32 %v2552, 0.5
  %v2611 = vmul.f32 %v2555, 0.5
  %v2612 = vmul.f32 %v2558, 0.5
  %v2613 = vmul.f32 %v2561, 0.5
  %v2614 = vmul.f32 %v2564, 0.5
  %v2615 = vmul.f32 %v2567, 0.5
  %v2616 = vmul.f32 %v2570, 0.5
  %v2617 = vmul.f32 %v2573, 0.5
  %v2618 = vmul.f32 %v2576, 0.5
  %v2619 = vmul.f32 %v2579, 0.5
  %v2620 = vmul.f32 %v2582, 0.5
  %v2621 = vmul.f32 %v2585, 0.5
  %v2622 = vmul.f32 %v2588, 0.5
  %v2623 = vmul.f32 %v2591, 0.5
  %v2624 = vmul.f32 %v2432, %v2432
  %v2625 = vmul.f32 %v2433, %v2433
  %v2626 = vmul.f32 %v2434, %v2434
  %v2627 = vmul.f32 %v2435, %v2435
  %v2628 = vmul.f32 %v2436, %v2436
  %v2629 = vmul.f32 %v2437, %v2437
  %v2630 = vmul.f32 %v2438, %v2438
  %v2631 = vmul.f32 %v2439, %v2439
  %v2632 = vmul.f32 %v2440, %v2440
  %v2633 = vmul.f32 %v2441, %v2441
  %v2634 = vmul.f32 %v2442, %v2442
  %v2635 = vmul.f32 %v2443, %v2443
  %v2636 = vmul.f32 %v2444, %v2444
  %v2637 = vmul.f32 %v2445, %v2445
  %v2638 = vmul.f32 %v2446, %v2446
  %v2639 = vmul.f32 %v2447, %v2447
  %v2640 = vmul.f32 %v2448, %v2448
  %v2641 = vmul.f32 %v2449, %v2449
  %v2642 = vmul.f32 %v2450, %v2450
  %v2643 = vmul.f32 %v2451, %v2451
  %v2644 = vmul.f32 %v2452, %v2452
  %v2645 = vmul.f32 %v2453, %v2453
  %v2646 = vmul.f32 %v2454, %v2454
  %v2647 = vmul.f32 %v2455, %v2455
  %v2648 = vmul.f32 %v2456, %v2456
  %v2649 = vmul.f32 %v2457, %v2457
  %v2650 = vmul.f32 %v2458, %v2458
  %v2651 = vmul.f32 %v2459, %v2459
  %v2652 = vmul.f32 %v2460, %v2460
  %v2653 = vmul.f32 %v2461, %v2461
  %v2654 = vmul.f32 %v2462, %v2462
  %v2655 = vmul.f32 %v2463, %v2463
  %v2656 = vsub.f32 %v2592, %v2624
  %v2657 = vsub.f32 %v2593, %v2625
  %v2658 = vsub.f32 %v2594, %v2626
  %v2659 = vsub.f32 %v2595, %v2627
  %v2660 = vsub.f32 %v2596, %v2628
  %v2661 = vsub.f32 %v2597, %v2629
  %v2662 = vsub.f32 %v2598, %v2630
  %v2663 = vsub.f32 %v2599, %v2631
  %v2664 = vsub.f32 %v2600, %v2632
  %v2665 = vsub.f32 %v2601, %v2633
  %v2666 = vsub.f32 %v2602, %v2634
  %v2667 = vsub.f32 %v2603, %v2635
  %v2668 = vsub.f32 %v2604, %v2636
  %v2669 = vsub.f32 %v2605, %v2637
  %v2670 = vsub.f32 %v2606, %v2638
  %v2671 = vsub.f32 %v2607, %v2639
  %v2672 = vsub.f32 %v2608, %v2640
  %v2673 = vsub.f32 %v2609, %v2641
  %v2674 = vsub.f32 %v2610, %v2642
  %v2675 = vsub.f32 %v2611, %v2643
  %v2676 = vsub.f32 %v2612, %v2644
  %v2677 = vsub.f32 %v2613, %v2645
  %v2678 = vsub.f32 %v2614, %v2646
  %v2679 = vsub.f32 %v2615, %v2647
  %v2680 = vsub.f32 %v2616, %v2648
  %v2681 = vsub.f32 %v2617, %v2649
  %v2682 = vsub.f32 %v2618, %v2650
  %v2683 = vsub.f32 %v2619, %v2651
  %v2684 = vsub.f32 %v2620, %v2652
  %v2685 = vsub.f32 %v2621, %v2653
  %v2686 = vsub.f32 %v2622, %v2654
  %v2687 = vsub.f32 %v2623, %v2655
  %v2688 = vsub.f32 %v2177, %v2432
  %v2689 = vsub.f32 %v2180, %v2433
  %v2690 = vsub.f32 %v2185, %v2434
  %v2691 = vsub.f32 %v2188, %v2435
  %v2692 = vsub.f32 %v2193, %v2436
  %v2693 = vsub.f32 %v2196, %v2437
  %v2694 = vsub.f32 %v2201, %v2438
  %v2695 = vsub.f32 %v2204, %v2439
  %v2696 = vsub.f32 %v2209, %v2440
  %v2697 = vsub.f32 %v2212, %v2441
  %v2698 = vsub.f32 %v2217, %v2442
  %v2699 = vsub.f32 %v2220, %v2443
  %v2700 = vsub.f32 %v2225, %v2444
  %v2701 = vsub.f32 %v2228, %v2445
  %v2702 = vsub.f32 %v2233, %v2446
  %v2703 = vsub.f32 %v2236, %v2447
  %v2704 = vsub.f32 %v2241, %v2448
  %v2705 = vsub.f32 %v2244, %v2449
  %v2706 = vsub.f32 %v2249, %v2450
  %v2707 = vsub.f32 %v2252, %v2451
  %v2708 = vsub.f32 %v2257, %v2452
  %v2709 = vsub.f32 %v2260, %v2453
  %v2710 = vsub.f32 %v2265, %v2454
  %v2711 = vsub.f32 %v2268, %v2455
  %v2712 = vsub.f32 %v2273, %v2456
  %v2713 = vsub.f32 %v2276, %v2457
  %v2714 = vsub.f32 %v2281, %v2458
  %v2715 = vsub.f32 %v2284, %v2459
  %v2716 = vsub.f32 %v2289, %v2460
  %v2717 = vsub.f32 %v2292, %v2461
  %v2718 = vsub.f32 %v2297, %v2462
  %v2719 = vsub.f32 %v2300, %v2463
  %v2720 = vadd.f32 %v2656, 1e-05
  %v2721 = vadd.f32 %v2657, 1e-05
  %v2722 = vadd.f32 %v2658, 1e-05
  %v2723 = vadd.f32 %v2659, 1e-05
  %v2724 = vadd.f32 %v2660, 1e-05
  %v2725 = vadd.f32 %v2661, 1e-05
  %v2726 = vadd.f32 %v2662, 1e-05
  %v2727 = vadd.f32 %v2663, 1e-05
  %v2728 = vadd.f32 %v2664, 1e-05
  %v2729 = vadd.f32 %v2665, 1e-05
  %v2730 = vadd.f32 %v2666, 1e-05
  %v2731 = vadd.f32 %v2667, 1e-05
  %v2732 = vadd.f32 %v2668, 1e-05
  %v2733 = vadd.f32 %v2669, 1e-05
  %v2734 = vadd.f32 %v2670, 1e-05
  %v2735 = vadd.f32 %v2671, 1e-05
  %v2736 = vadd.f32 %v2672, 1e-05
  %v2737 = vadd.f32 %v2673, 1e-05
  %v2738 = vadd.f32 %v2674, 1e-05
  %v2739 = vadd.f32 %v2675, 1e-05
  %v2740 = vadd.f32 %v2676, 1e-05
  %v2741 = vadd.f32 %v2677, 1e-05
  %v2742 = vadd.f32 %v2678, 1e-05
  %v2743 = vadd.f32 %v2679, 1e-05
  %v2744 = vadd.f32 %v2680, 1e-05
  %v2745 = vadd.f32 %v2681, 1e-05
  %v2746 = vadd.f32 %v2682, 1e-05
  %v2747 = vadd.f32 %v2683, 1e-05
  %v2748 = vadd.f32 %v2684, 1e-05
  %v2749 = vadd.f32 %v2685, 1e-05
  %v2750 = vadd.f32 %v2686, 1e-05
  %v2751 = vadd.f32 %v2687, 1e-05
  %v2752 = vrsqrt.pop %v2720
  %v2753 = vrsqrt.pop %v2721
  %v2754 = vrsqrt.pop %v2722
  %v2755 = vrsqrt.pop %v2723
  %v2756 = vrsqrt.pop %v2724
  %v2757 = vrsqrt.pop %v2725
  %v2758 = vrsqrt.pop %v2726
  %v2759 = vrsqrt.pop %v2727
  %v2760 = vrsqrt.pop %v2728
  %v2761 = vrsqrt.pop %v2729
  %v2762 = vrsqrt.pop %v2730
  %v2763 = vrsqrt.pop %v2731
  %v2764 = vrsqrt.pop %v2732
  %v2765 = vrsqrt.pop %v2733
  %v2766 = vrsqrt.pop %v2734
  %v2767 = vrsqrt.pop %v2735
  %v2768 = vrsqrt.pop %v2736
  %v2769 = vrsqrt.pop %v2737
  %v2770 = vrsqrt.pop %v2738
  %v2771 = vrsqrt.pop %v2739
  %v2772 = vrsqrt.pop %v2740
  %v2773 = vrsqrt.pop %v2741
  %v2774 = vrsqrt.pop %v2742
  %v2775 = vrsqrt.pop %v2743
  %v2776 = vrsqrt.pop %v2744
  %v2777 = vrsqrt.pop %v2745
  %v2778 = vrsqrt.pop %v2746
  %v2779 = vrsqrt.pop %v2747
  %v2780 = vrsqrt.pop %v2748
  %v2781 = vrsqrt.pop %v2749
  %v2782 = vrsqrt.pop %v2750
  %v2783 = vrsqrt.pop %v2751
  %v2784 = vmul.f32 %v2303, %v2752
  %v2785 = vmul.f32 %v2304, %v2753
  %v2786 = vmul.f32 %v2305, %v2754
  %v2787 = vmul.f32 %v2306, %v2755
  %v2788 = vmul.f32 %v2307, %v2756
  %v2789 = vmul.f32 %v2308, %v2757
  %v2790 = vmul.f32 %v2309, %v2758
  %v2791 = vmul.f32 %v2310, %v2759
  %v2792 = vmul.f32 %v2311, %v2760
  %v2793 = vmul.f32 %v2312, %v2761
  %v2794 = vmul.f32 %v2313, %v2762
  %v2795 = vmul.f32 %v2314, %v2763
  %v2796 = vmul.f32 %v2315, %v2764
  %v2797 = vmul.f32 %v2316, %v2765
  %v2798 = vmul.f32 %v2317, %v2766
  %v2799 = vmul.f32 %v2318, %v2767
  %v2800 = vmul.f32 %v2319, %v2768
  %v2801 = vmul.f32 %v2320, %v2769
  %v2802 = vmul.f32 %v2321, %v2770
  %v2803 = vmul.f32 %v2322, %v2771
  %v2804 = vmul.f32 %v2323, %v2772
  %v2805 = vmul.f32 %v2324, %v2773
  %v2806 = vmul.f32 %v2325, %v2774
  %v2807 = vmul.f32 %v2326, %v2775
  %v2808 = vmul.f32 %v2327, %v2776
  %v2809 = vmul.f32 %v2328, %v2777
  %v2810 = vmul.f32 %v2329, %v2778
  %v2811 = vmul.f32 %v2330, %v2779
  %v2812 = vmul.f32 %v2331, %v2780
  %v2813 = vmul.f32 %v2332, %v2781
  %v2814 = vmul.f32 %v2333, %v2782
  %v2815 = vmul.f32 %v2334, %v2783
  %2817 = vset.pattern.permute.xlu0 0
  %2818 = vperm.xlu0 %2817, %v2784
  %v2819 = vpop.permute.xlu0 %2818
  %2822 = vset.pattern.permute.xlu0 0
  %2823 = vperm.xlu0 %2822, %v2785
  %v2824 = vpop.permute.xlu0 %2823
  %2827 = vset.pattern.permute.xlu0 0
  %2828 = vperm.xlu0 %2827, %v2786
  %v2829 = vpop.permute.xlu0 %2828
  %2832 = vset.pattern.permute.xlu0 0
  %2833 = vperm.xlu0 %2832, %v2787
  %v2834 = vpop.permute.xlu0 %2833
  %2837 = vset.pattern.permute.xlu0 0
  %2838 = vperm.xlu0 %2837, %v2788
  %v2839 = vpop.permute.xlu0 %2838
  %2842 = vset.pattern.permute.xlu0 0
  %2843 = vperm.xlu0 %2842, %v2789
  %v2844 = vpop.permute.xlu0 %2843
  %2847 = vset.pattern.permute.xlu0 0
  %2848 = vperm.xlu0 %2847, %v2790
  %v2849 = vpop.permute.xlu0 %2848
  %2852 = vset.pattern.permute.xlu0 0
  %2853 = vperm.xlu0 %2852, %v2791
  %v2854 = vpop.permute.xlu0 %2853
  %2857 = vset.pattern.permute.xlu0 0
  %2858 = vperm.xlu0 %2857, %v2792
  %v2859 = vpop.permute.xlu0 %2858
  %2862 = vset.pattern.permute.xlu0 0
  %2863 = vperm.xlu0 %2862, %v2793
  %v2864 = vpop.permute.xlu0 %2863
  %2867 = vset.pattern.permute.xlu0 0
  %2868 = vperm.xlu0 %2867, %v2794
  %v2869 = vpop.permute.xlu0 %2868
  %2872 = vset.pattern.permute.xlu0 0
  %2873 = vperm.xlu0 %2872, %v2795
  %v2874 = vpop.permute.xlu0 %2873
  %2877 = vset.pattern.permute.xlu0 0
  %2878 = vperm.xlu0 %2877, %v2796
  %v2879 = vpop.permute.xlu0 %2878
  %2882 = vset.pattern.permute.xlu0 0
  %2883 = vperm.xlu0 %2882, %v2797
  %v2884 = vpop.permute.xlu0 %2883
  %2887 = vset.pattern.permute.xlu0 0
  %2888 = vperm.xlu0 %2887, %v2798
  %v2889 = vpop.permute.xlu0 %2888
  %2892 = vset.pattern.permute.xlu0 0
  %2893 = vperm.xlu0 %2892, %v2799
  %v2894 = vpop.permute.xlu0 %2893
  %2897 = vset.pattern.permute.xlu0 0
  %2898 = vperm.xlu0 %2897, %v2800
  %v2899 = vpop.permute.xlu0 %2898
  %2902 = vset.pattern.permute.xlu0 0
  %2903 = vperm.xlu0 %2902, %v2801
  %v2904 = vpop.permute.xlu0 %2903
  %2907 = vset.pattern.permute.xlu0 0
  %2908 = vperm.xlu0 %2907, %v2802
  %v2909 = vpop.permute.xlu0 %2908
  %2912 = vset.pattern.permute.xlu0 0
  %2913 = vperm.xlu0 %2912, %v2803
  %v2914 = vpop.permute.xlu0 %2913
  %2917 = vset.pattern.permute.xlu0 0
  %2918 = vperm.xlu0 %2917, %v2804
  %v2919 = vpop.permute.xlu0 %2918
  %2922 = vset.pattern.permute.xlu0 0
  %2923 = vperm.xlu0 %2922, %v2805
  %v2924 = vpop.permute.xlu0 %2923
  %2927 = vset.pattern.permute.xlu0 0
  %2928 = vperm.xlu0 %2927, %v2806
  %v2929 = vpop.permute.xlu0 %2928
  %2932 = vset.pattern.permute.xlu0 0
  %2933 = vperm.xlu0 %2932, %v2807
  %v2934 = vpop.permute.xlu0 %2933
  %2937 = vset.pattern.permute.xlu0 0
  %2938 = vperm.xlu0 %2937, %v2808
  %v2939 = vpop.permute.xlu0 %2938
  %2942 = vset.pattern.permute.xlu0 0
  %2943 = vperm.xlu0 %2942, %v2809
  %v2944 = vpop.permute.xlu0 %2943
  %2947 = vset.pattern.permute.xlu0 0
  %2948 = vperm.xlu0 %2947, %v2810
  %v2949 = vpop.permute.xlu0 %2948
  %2952 = vset.pattern.permute.xlu0 0
  %2953 = vperm.xlu0 %2952, %v2811
  %v2954 = vpop.permute.xlu0 %2953
  %2957 = vset.pattern.permute.xlu0 0
  %2958 = vperm.xlu0 %2957, %v2812
  %v2959 = vpop.permute.xlu0 %2958
  %2962 = vset.pattern.permute.xlu0 0
  %2963 = vperm.xlu0 %2962, %v2813
  %v2964 = vpop.permute.xlu0 %2963
  %2967 = vset.pattern.permute.xlu0 0
  %2968 = vperm.xlu0 %2967, %v2814
  %v2969 = vpop.permute.xlu0 %2968
  %2972 = vset.pattern.permute.xlu0 0
  %2973 = vperm.xlu0 %2972, %v2815
  %v2974 = vpop.permute.xlu0 %2973
  %v2976 = vmul.f32 %v2688, %v2819
  %v2977 = vmul.f32 %v2689, %v2824
  %v2978 = vmul.f32 %v2690, %v2829
  %v2979 = vmul.f32 %v2691, %v2834
  %v2980 = vmul.f32 %v2692, %v2839
  %v2981 = vmul.f32 %v2693, %v2844
  %v2982 = vmul.f32 %v2694, %v2849
  %v2983 = vmul.f32 %v2695, %v2854
  %v2984 = vmul.f32 %v2696, %v2859
  %v2985 = vmul.f32 %v2697, %v2864
  %v2986 = vmul.f32 %v2698, %v2869
  %v2987 = vmul.f32 %v2699, %v2874
  %v2988 = vmul.f32 %v2700, %v2879
  %v2989 = vmul.f32 %v2701, %v2884
  %v2990 = vmul.f32 %v2702, %v2889
  %v2991 = vmul.f32 %v2703, %v2894
  %v2992 = vmul.f32 %v2704, %v2899
  %v2993 = vmul.f32 %v2705, %v2904
  %v2994 = vmul.f32 %v2706, %v2909
  %v2995 = vmul.f32 %v2707, %v2914
  %v2996 = vmul.f32 %v2708, %v2919
  %v2997 = vmul.f32 %v2709, %v2924
  %v2998 = vmul.f32 %v2710, %v2929
  %v2999 = vmul.f32 %v2711, %v2934
  %v3000 = vmul.f32 %v2712, %v2939
  %v3001 = vmul.f32 %v2713, %v2944
  %v3002 = vmul.f32 %v2714, %v2949
  %v3003 = vmul.f32 %v2715, %v2954
  %v3004 = vmul.f32 %v2716, %v2959
  %v3005 = vmul.f32 %v2717, %v2964
  %v3006 = vmul.f32 %v2718, %v2969
  %v3007 = vmul.f32 %v2719, %v2974
  %3009 = vset.pattern.permute.xlu0 1
  %3010 = vperm.xlu0 %3009, %v2303
  %v3011 = vpop.permute.xlu0 %3010
  %3014 = vset.pattern.permute.xlu0 1
  %3015 = vperm.xlu0 %3014, %v2304
  %v3016 = vpop.permute.xlu0 %3015
  %3019 = vset.pattern.permute.xlu0 1
  %3020 = vperm.xlu0 %3019, %v2305
  %v3021 = vpop.permute.xlu0 %3020
  %3024 = vset.pattern.permute.xlu0 1
  %3025 = vperm.xlu0 %3024, %v2306
  %v3026 = vpop.permute.xlu0 %3025
  %3029 = vset.pattern.permute.xlu0 1
  %3030 = vperm.xlu0 %3029, %v2307
  %v3031 = vpop.permute.xlu0 %3030
  %3034 = vset.pattern.permute.xlu0 1
  %3035 = vperm.xlu0 %3034, %v2308
  %v3036 = vpop.permute.xlu0 %3035
  %3039 = vset.pattern.permute.xlu0 1
  %3040 = vperm.xlu0 %3039, %v2309
  %v3041 = vpop.permute.xlu0 %3040
  %3044 = vset.pattern.permute.xlu0 1
  %3045 = vperm.xlu0 %3044, %v2310
  %v3046 = vpop.permute.xlu0 %3045
  %3049 = vset.pattern.permute.xlu0 1
  %3050 = vperm.xlu0 %3049, %v2311
  %v3051 = vpop.permute.xlu0 %3050
  %3054 = vset.pattern.permute.xlu0 1
  %3055 = vperm.xlu0 %3054, %v2312
  %v3056 = vpop.permute.xlu0 %3055
  %3059 = vset.pattern.permute.xlu0 1
  %3060 = vperm.xlu0 %3059, %v2313
  %v3061 = vpop.permute.xlu0 %3060
  %3064 = vset.pattern.permute.xlu0 1
  %3065 = vperm.xlu0 %3064, %v2314
  %v3066 = vpop.permute.xlu0 %3065
  %3069 = vset.pattern.permute.xlu0 1
  %3070 = vperm.xlu0 %3069, %v2315
  %v3071 = vpop.permute.xlu0 %3070
  %3074 = vset.pattern.permute.xlu0 1
  %3075 = vperm.xlu0 %3074, %v2316
  %v3076 = vpop.permute.xlu0 %3075
  %3079 = vset.pattern.permute.xlu0 1
  %3080 = vperm.xlu0 %3079, %v2317
  %v3081 = vpop.permute.xlu0 %3080
  %3084 = vset.pattern.permute.xlu0 1
  %3085 = vperm.xlu0 %3084, %v2318
  %v3086 = vpop.permute.xlu0 %3085
  %3089 = vset.pattern.permute.xlu0 1
  %3090 = vperm.xlu0 %3089, %v2319
  %v3091 = vpop.permute.xlu0 %3090
  %3094 = vset.pattern.permute.xlu0 1
  %3095 = vperm.xlu0 %3094, %v2320
  %v3096 = vpop.permute.xlu0 %3095
  %3099 = vset.pattern.permute.xlu0 1
  %3100 = vperm.xlu0 %3099, %v2321
  %v3101 = vpop.permute.xlu0 %3100
  %3104 = vset.pattern.permute.xlu0 1
  %3105 = vperm.xlu0 %3104, %v2322
  %v3106 = vpop.permute.xlu0 %3105
  %3109 = vset.pattern.permute.xlu0 1
  %3110 = vperm.xlu0 %3109, %v2323
  %v3111 = vpop.permute.xlu0 %3110
  %3114 = vset.pattern.permute.xlu0 1
  %3115 = vperm.xlu0 %3114, %v2324
  %v3116 = vpop.permute.xlu0 %3115
  %3119 = vset.pattern.permute.xlu0 1
  %3120 = vperm.xlu0 %3119, %v2325
  %v3121 = vpop.permute.xlu0 %3120
  %3124 = vset.pattern.permute.xlu0 1
  %3125 = vperm.xlu0 %3124, %v2326
  %v3126 = vpop.permute.xlu0 %3125
  %3129 = vset.pattern.permute.xlu0 1
  %3130 = vperm.xlu0 %3129, %v2327
  %v3131 = vpop.permute.xlu0 %3130
  %3134 = vset.pattern.permute.xlu0 1
  %3135 = vperm.xlu0 %3134, %v2328
  %v3136 = vpop.permute.xlu0 %3135
  %3139 = vset.pattern.permute.xlu0 1
  %3140 = vperm.xlu0 %3139, %v2329
  %v3141 = vpop.permute.xlu0 %3140
  %3144 = vset.pattern.permute.xlu0 1
  %3145 = vperm.xlu0 %3144, %v2330
  %v3146 = vpop.permute.xlu0 %3145
  %3149 = vset.pattern.permute.xlu0 1
  %3150 = vperm.xlu0 %3149, %v2331
  %v3151 = vpop.permute.xlu0 %3150
  %3154 = vset.pattern.permute.xlu0 1
  %3155 = vperm.xlu0 %3154, %v2332
  %v3156 = vpop.permute.xlu0 %3155
  %3159 = vset.pattern.permute.xlu0 1
  %3160 = vperm.xlu0 %3159, %v2333
  %v3161 = vpop.permute.xlu0 %3160
  %3164 = vset.pattern.permute.xlu0 1
  %3165 = vperm.xlu0 %3164, %v2334
  %v3166 = vpop.permute.xlu0 %3165
  %v3168 = vadd.f32 %v2976, %v3011
  %v3169 = vadd.f32 %v2977, %v3016
  %v3170 = vadd.f32 %v2978, %v3021
  %v3171 = vadd.f32 %v2979, %v3026
  %v3172 = vadd.f32 %v2980, %v3031
  %v3173 = vadd.f32 %v2981, %v3036
  %v3174 = vadd.f32 %v2982, %v3041
  %v3175 = vadd.f32 %v2983, %v3046
  %v3176 = vadd.f32 %v2984, %v3051
  %v3177 = vadd.f32 %v2985, %v3056
  %v3178 = vadd.f32 %v2986, %v3061
  %v3179 = vadd.f32 %v2987, %v3066
  %v3180 = vadd.f32 %v2988, %v3071
  %v3181 = vadd.f32 %v2989, %v3076
  %v3182 = vadd.f32 %v2990, %v3081
  %v3183 = vadd.f32 %v2991, %v3086
  %v3184 = vadd.f32 %v2992, %v3091
  %v3185 = vadd.f32 %v2993, %v3096
  %v3186 = vadd.f32 %v2994, %v3101
  %v3187 = vadd.f32 %v2995, %v3106
  %v3188 = vadd.f32 %v2996, %v3111
  %v3189 = vadd.f32 %v2997, %v3116
  %v3190 = vadd.f32 %v2998, %v3121
  %v3191 = vadd.f32 %v2999, %v3126
  %v3192 = vadd.f32 %v3000, %v3131
  %v3193 = vadd.f32 %v3001, %v3136
  %v3194 = vadd.f32 %v3002, %v3141
  %v3195 = vadd.f32 %v3003, %v3146
  %v3196 = vadd.f32 %v3004, %v3151
  %v3197 = vadd.f32 %v3005, %v3156
  %v3198 = vadd.f32 %v3006, %v3161
  %v3199 = vadd.f32 %v3007, %v3166
  %v3200 = vmax.f32 %v3168, 0.0
  %v3201 = vmax.f32 %v3169, 0.0
  %v3202 = vmax.f32 %v3170, 0.0
  %v3203 = vmax.f32 %v3171, 0.0
  %v3204 = vmax.f32 %v3172, 0.0
  %v3205 = vmax.f32 %v3173, 0.0
  %v3206 = vmax.f32 %v3174, 0.0
  %v3207 = vmax.f32 %v3175, 0.0
  %v3208 = vmax.f32 %v3176, 0.0
  %v3209 = vmax.f32 %v3177, 0.0
  %v3210 = vmax.f32 %v3178, 0.0
  %v3211 = vmax.f32 %v3179, 0.0
  %v3212 = vmax.f32 %v3180, 0.0
  %v3213 = vmax.f32 %v3181, 0.0
  %v3214 = vmax.f32 %v3182, 0.0
  %v3215 = vmax.f32 %v3183, 0.0
  %v3216 = vmax.f32 %v3184, 0.0
  %v3217 = vmax.f32 %v3185, 0.0
  %v3218 = vmax.f32 %v3186, 0.0
  %v3219 = vmax.f32 %v3187, 0.0
  %v3220 = vmax.f32 %v3188, 0.0
  %v3221 = vmax.f32 %v3189, 0.0
  %v3222 = vmax.f32 %v3190, 0.0
  %v3223 = vmax.f32 %v3191, 0.0
  %v3224 = vmax.f32 %v3192, 0.0
  %v3225 = vmax.f32 %v3193, 0.0
  %v3226 = vmax.f32 %v3194, 0.0
  %v3227 = vmax.f32 %v3195, 0.0
  %v3228 = vmax.f32 %v3196, 0.0
  %v3229 = vmax.f32 %v3197, 0.0
  %v3230 = vmax.f32 %v3198, 0.0
  %v3231 = vmax.f32 %v3199, 0.0
  %v3232 = vld [vmem:[%s6] sm:$0xff]
  %v3233 = vpack.c.bf16 %v3201, %v3200
  %v3234 = vpack.c.bf16 %v3203, %v3202
  %v3235 = vpack.c.bf16 %v3205, %v3204
  %v3236 = vpack.c.bf16 %v3207, %v3206
  %v3237 = vpack.c.bf16 %v3209, %v3208
  %v3238 = vpack.c.bf16 %v3211, %v3210
  %v3239 = vpack.c.bf16 %v3213, %v3212
  %v3240 = vpack.c.bf16 %v3215, %v3214
  %v3241 = vpack.c.bf16 %v3217, %v3216
  %v3242 = vpack.c.bf16 %v3219, %v3218
  %v3243 = vpack.c.bf16 %v3221, %v3220
  %v3244 = vpack.c.bf16 %v3223, %v3222
  %v3245 = vpack.c.bf16 %v3225, %v3224
  %v3246 = vpack.c.bf16 %v3227, %v3226
  %v3247 = vpack.c.bf16 %v3229, %v3228
  %v3248 = vpack.c.bf16 %v3231, %v3230
  %v3249 = vld [vmem:[%s8] sm:$0xff]
  %3251 = vset.pattern.permute.xlu0 2
  %3252 = vperm.xlu0 %3251, %v3249
  %v3253 = vpop.permute.xlu0 %3252
  %v3256 = vunpack.c.l.b16 %v3232
  %v3257 = vunpack.c.h.b16 %v3232
  %v3258 = vpack.c.b16 %v3256, %v3256
  %v3259 = vpack.c.b16 %v3257, %v3257
  %3262 = vmatprep.subr.bf16.mxu0 0
  %3263 = vmatpush1.bf16.msra.mxu0 %v3233
  %3264 = vmatprep.subr.bf16.mxu0 0
  %3265 = vmatpush1.bf16.msra.mxu0 %v3234
  %3266 = vmatprep.subr.bf16.mxu0 0
  %3267 = vmatpush1.bf16.msra.mxu0 %v3235
  %3268 = vmatprep.subr.bf16.mxu0 0
  %3269 = vmatpush1.bf16.msra.mxu0 %v3236
  %3270 = vmatprep.subr.bf16.mxu0 0
  %3271 = vmatpush1.bf16.msra.mxu0 %v3237
  %3272 = vmatprep.subr.bf16.mxu0 0
  %3273 = vmatpush1.bf16.msra.mxu0 %v3238
  %3274 = vmatprep.subr.bf16.mxu0 0
  %3275 = vmatpush1.bf16.msra.mxu0 %v3239
  %3276 = vmatprep.subr.bf16.mxu0 0
  %3277 = vmatpush1.bf16.msra.mxu0 %v3240
  %3278 = vmatprep.subr.bf16.mxu0 0
  %3279 = vmatpush1.bf16.msra.mxu0 %v3241
  %3280 = vmatprep.subr.bf16.mxu0 0
  %3281 = vmatpush1.bf16.msra.mxu0 %v3242
  %3282 = vmatprep.subr.bf16.mxu0 0
  %3283 = vmatpush1.bf16.msra.mxu0 %v3243
  %3284 = vmatprep.subr.bf16.mxu0 0
  %3285 = vmatpush1.bf16.msra.mxu0 %v3244
  %3286 = vmatprep.subr.bf16.mxu0 0
  %3287 = vmatpush1.bf16.msra.mxu0 %v3245
  %3288 = vmatprep.subr.bf16.mxu0 0
  %3289 = vmatpush1.bf16.msra.mxu0 %v3246
  %3290 = vmatprep.subr.bf16.mxu0 0
  %3291 = vmatpush1.bf16.msra.mxu0 %v3247
  %3292 = vmatprep.subr.bf16.mxu0 0
  %3293 = vmatpush1.bf16.msra.mxu0 %v3248
  %3294 = vmatprep.mubr.bf16.mxu0 %v3259
  %3295 = vmatmul.mubr.bf16.gmra.mrb[0].mxu0 %v3258
  %v3296 = vpop.f32.mrb[0].mxu0
  %v3297 = vadd.f32 %v3253, %v3296
  %v3298 = vpop.f32.mrb[0].mxu0
  %v3299 = vpop.f32.mrb[0].mxu0
  %v3300 = vpop.f32.mrb[0].mxu0
  %3301 = vdwg.mxu0
  %3302 = vst.msk [vmem:[%s9] sm:$0xff] %vm2335, %v3297
  // Predicated region
  $region38: #{tpu_custom_call.1} parent=0 // pred_check
    _
  $region39: #{tpu_custom_call.1} parent=0 // pred_check_branch
    %3304 = sbr.rel (0) target = $region41
  $region40: #{tpu_custom_call.1} parent=0 // pred_region
    _
  $region41: #{tpu_custom_call.1} parent=0 // pred_fallthru
    _
  // Predicated region
  $region42: #{tpu_custom_call.1} parent=0 // pred_check
    _
  $region43: #{tpu_custom_call.1} parent=0 // pred_check_branch
    %3306 = sbr.rel (0) target = $region45
  $region44: #{tpu_custom_call.1} parent=0 // pred_region
    _
  $region45: #{tpu_custom_call.1} parent=0 // pred_fallthru
    _

</llo_original>
